<compile_context>
chip_gen: v7x
topology: tpu7x:2x2x1
jax: 0.10.0
libtpu: 0.0.40
codegen_flags: <defaults>
</compile_context>

<pallas_src>
import functools

import jax
import jax.numpy as jnp
from jax import lax
from jax.experimental import pallas as pl
from jax.experimental.pallas import tpu as pltpu

LRELU_SLOPE = 0.2
IN_EPS = 1e-5


def _round_up(x, m):
    return (x + m - 1) // m * m


# Tile policy, shared by parameter preparation and the GEMM wrapper so the
# padded weight layout always matches the call-time tiling.
def _tile_m(m):
    return min(256, _round_up(m, 8))


def _tile_n(n):
    return min(256, _round_up(n, 128))


def _tile_k(k):
    return min(512, _round_up(k, 128))


# ---------------------------------------------------------------------------
# Kernel 1: tiled GEMM + fused (bias + LeakyReLU) epilogue.
#   x:(Mp,Kp) @ w:(Kp,Np) + b:(1,Np) -> out:(Mp,Np)
# grid = (Mp/tm, Np/tn, Kp/tk); accumulate in f32 VMEM scratch; epilogue only on
# the last k step.
# ---------------------------------------------------------------------------
def _gemm_bias_act_kernel(x_ref, w_ref, b_ref, o_ref, acc_ref, *, apply_act, slope):
    k = pl.program_id(2)

    @pl.when(k == 0)
    def _init():
        acc_ref[...] = jnp.zeros_like(acc_ref)

    acc_ref[...] += jnp.dot(x_ref[...], w_ref[...],
                            preferred_element_type=jnp.float32)

    @pl.when(k == pl.num_programs(2) - 1)
    def _finalize():
        acc = acc_ref[...] + b_ref[...]              # f32 epilogue (v5e-safe)
        if apply_act:
            acc = jnp.where(acc >= 0, acc, slope * acc)
        o_ref[...] = acc.astype(o_ref.dtype)


def gemm_bias_act(x, w_padded, b_padded, n_out, *, apply_act,
                  compute_dtype=jnp.bfloat16, out_dtype=jnp.float32,
                  slope=LRELU_SLOPE):
    """out[:M, :n_out] = act(x @ w + b); w/b are pre-padded (Kp,Np)/(1,Np)."""
    m, k = x.shape
    kp, np_ = w_padded.shape
    tm, tn, tk = _tile_m(m), _tile_n(np_), _tile_k(kp)
    mp = _round_up(m, tm)
    assert np_ % tn == 0 and kp % tk == 0, (np_, tn, kp, tk)

    x_p = jnp.pad(x, ((0, mp - m), (0, kp - k))).astype(compute_dtype)

    grid = (mp // tm, np_ // tn, kp // tk)
    kernel = functools.partial(_gemm_bias_act_kernel,
                               apply_act=apply_act, slope=slope)
    out = pl.pallas_call(
        kernel,
        out_shape=jax.ShapeDtypeStruct((mp, np_), out_dtype),
        grid_spec=pltpu.PrefetchScalarGridSpec(
            num_scalar_prefetch=0,
            grid=grid,
            in_specs=[
                pl.BlockSpec((tm, tk), lambda i, j, kk: (i, kk)),
                pl.BlockSpec((tk, tn), lambda i, j, kk: (kk, j)),
                pl.BlockSpec((1, tn), lambda i, j, kk: (0, j)),
            ],
            out_specs=pl.BlockSpec((tm, tn), lambda i, j, kk: (i, j)),
            scratch_shapes=[pltpu.VMEM((tm, tn), jnp.float32)],
        ),
        compiler_params=pltpu.CompilerParams(
            dimension_semantics=("parallel", "parallel", "arbitrary"),
            vmem_limit_bytes=32 * 1024 * 1024,
        ),
    )(x_p, w_padded, b_padded)
    return out[:m, :n_out]


# ---------------------------------------------------------------------------
# Kernel 2: InstanceNorm2d(affine=False, eps=1e-5) + LeakyReLU(0.2).
# x: (B, S, C) with S = OH*OW; normalize each (b, c) over S.
# ---------------------------------------------------------------------------
def _instance_norm_lrelu_kernel(x_ref, o_ref, *, eps, slope):
    x = x_ref[...].astype(jnp.float32)                 # (1, S, tc)
    mean = jnp.mean(x, axis=1, keepdims=True)
    xc = x - mean
    var = jnp.mean(xc * xc, axis=1, keepdims=True)     # biased var, as in PyTorch
    y = xc * lax.rsqrt(var + eps)
    y = jnp.where(y >= 0, y, slope * y)
    o_ref[...] = y.astype(o_ref.dtype)


def instance_norm_lrelu(x, *, eps=IN_EPS, slope=LRELU_SLOPE):
    b, s, c = x.shape
    tc = min(256, c) if c % 128 == 0 else c
    return pl.pallas_call(
        functools.partial(_instance_norm_lrelu_kernel, eps=eps, slope=slope),
        out_shape=jax.ShapeDtypeStruct((b, s, c), x.dtype),
        grid_spec=pltpu.PrefetchScalarGridSpec(
            num_scalar_prefetch=0,
            grid=(b, c // tc),
            in_specs=[pl.BlockSpec((1, s, tc), lambda bi, ci: (bi, 0, ci))],
            out_specs=pl.BlockSpec((1, s, tc), lambda bi, ci: (bi, 0, ci)),
        ),
        compiler_params=pltpu.CompilerParams(
            dimension_semantics=("parallel", "parallel"),
        ),
    )(x)


# ---------------------------------------------------------------------------
# Conv = im2col + GEMM.
# TODO(synk): im2col patch extraction and NCHW<->NHWC transposes are pure data
# movement left to XLA; an implicit-GEMM Pallas variant could fold the patch
# gather into the GEMM index_map.
# ---------------------------------------------------------------------------
def _im2col(x_nhwc, ksize, stride, pad):
    """x:(B,H,W,C), pad=((top,bot),(left,right)) -> ((B*OH*OW, k*k*C), OH, OW)."""
    b, h, w, c = x_nhwc.shape
    xp = jnp.pad(x_nhwc, ((0, 0), pad[0], pad[1], (0, 0)))
    hp = h + pad[0][0] + pad[0][1]
    wp = w + pad[1][0] + pad[1][1]
    oh = (hp - ksize) // stride + 1
    ow = (wp - ksize) // stride + 1
    slabs = []
    for kh in range(ksize):
        for kw in range(ksize):
            slabs.append(xp[:, kh:kh + stride * oh:stride,
                            kw:kw + stride * ow:stride, :])
    cols = jnp.concatenate(slabs, axis=-1)      # (B,OH,OW,k*k*C), order (kh,kw,c)
    return cols.reshape(b * oh * ow, ksize * ksize * c), oh, ow


def _conv4x4(x_nhwc, w_padded, b_padded, n_out, *, stride, pad, apply_act,
             compute_dtype):
    b = x_nhwc.shape[0]
    cols, oh, ow = _im2col(x_nhwc, 4, stride, pad)
    y = gemm_bias_act(cols, w_padded, b_padded, n_out, apply_act=apply_act,
                      compute_dtype=compute_dtype)
    return y.reshape(b, oh, ow, n_out)


def patchgan_dis_forward(img, img_condition, params, *, compute_dtype=jnp.bfloat16):
    """Pallas forward of PatchGAN_Dis. img / img_condition: (B, C, H, W)."""
    x = jnp.concatenate([img, img_condition], axis=1)   # channel concat (NCHW)
    x = jnp.transpose(x, (0, 2, 3, 1))                  # NHWC internally
    # Block 1: conv 4x4 s2 p1 + LeakyReLU fused in the GEMM epilogue (no norm).
    x = _conv4x4(x, params["w1"], params["b1"], 64, stride=2,
                 pad=((1, 1), (1, 1)), apply_act=True, compute_dtype=compute_dtype)
    # Blocks 2-4: conv 4x4 s2 p1 -> InstanceNorm -> LeakyReLU.
    for i, cout in ((2, 128), (3, 256), (4, 512)):
        x = _conv4x4(x, params[f"w{i}"], params[f"b{i}"], cout, stride=2,
                     pad=((1, 1), (1, 1)), apply_act=False,
                     compute_dtype=compute_dtype)
        b, oh, ow, c = x.shape
        x = instance_norm_lrelu(x.reshape(b, oh * ow, c)).reshape(b, oh, ow, c)
    # ZeroPad2d((1,0,1,0)) folded into the final conv padding: ((2,1),(2,1)).
    x = _conv4x4(x, params["w5"], params["b5"], 1, stride=1,
                 pad=((2, 1), (2, 1)), apply_act=False, compute_dtype=compute_dtype)
    return jnp.transpose(x, (0, 3, 1, 2))               # (B, 1, H/16, W/16)


# ---------------------------------------------------------------------------
# Parameters: PyTorch layout for the reference, one-time GEMM repack for Pallas.
# ---------------------------------------------------------------------------
def init_torch_params(key, in_channels=1):
    layer_defs = [(in_channels * 2, 64, True), (64, 128, True), (128, 256, True),
                  (256, 512, True), (512, 1, False)]
    params = {}
    for idx, (cin, cout, has_bias) in enumerate(layer_defs, start=1):
        key, kw, kb = jax.random.split(key, 3)
        bound = 1.0 / float(cin * 16) ** 0.5            # nn.Conv2d default init
        params[f"w{idx}"] = jax.random.uniform(
            kw, (cout, cin, 4, 4), jnp.float32, minval=-bound, maxval=bound)
        params[f"b{idx}"] = (jax.random.uniform(
            kb, (cout,), jnp.float32, minval=-bound, maxval=bound)
            if has_bias else None)
    return params


def prepare_gemm_params(torch_params, compute_dtype=jnp.bfloat16):
    """One-time conversion (at parameter-load time, NOT per forward call) of
    (Cout,Cin,4,4) conv weights to pre-transposed, tile-padded (K,N) layout."""
    prepared = {}
    for i in range(1, 6):
        w = torch_params[f"w{i}"]
        cout, cin = w.shape[0], w.shape[1]
        k, n = cin * 16, cout
        kp = _round_up(k, _tile_k(k))
        np_ = _round_up(n, _tile_n(n))
        wg = jnp.transpose(w, (2, 3, 1, 0)).reshape(k, n)   # rows (kh, kw, cin)
        prepared[f"w{i}"] = jnp.pad(wg, ((0, kp - k), (0, np_ - n))).astype(compute_dtype)
        b = torch_params[f"b{i}"]
        if b is None:                                       # final conv: bias=False
            prepared[f"b{i}"] = jnp.zeros((1, np_), jnp.float32)
        else:
            prepared[f"b{i}"] = jnp.pad(b.astype(jnp.float32).reshape(1, n),
                                        ((0, 0), (0, np_ - n)))
    return prepared


# ---------------------------------------------------------------------------
# Pure-JAX reference (mirrors the PyTorch module exactly, in f32).
# ---------------------------------------------------------------------------
def _ref_conv(x, w, b, stride, padding):
    out = lax.conv_general_dilated(
        x, w, window_strides=(stride, stride),
        padding=((padding, padding), (padding, padding)),
        dimension_numbers=("NCHW", "OIHW", "NCHW"),
        precision=lax.Precision.HIGHEST)
    return out if b is None else out + b[None, :, None, None]


def _ref_instance_norm(x, eps=IN_EPS):
    mean = jnp.mean(x, axis=(2, 3), keepdims=True)
    var = jnp.mean((x - mean) ** 2, axis=(2, 3), keepdims=True)
    return (x - mean) * lax.rsqrt(var + eps)


def _ref_lrelu(x, slope=LRELU_SLOPE):
    return jnp.where(x >= 0, x, slope * x)


def reference_forward(img, img_condition, torch_params):
    x = jnp.concatenate([img, img_condition], axis=1)
    x = _ref_lrelu(_ref_conv(x, torch_params["w1"], torch_params["b1"], 2, 1))
    for i in (2, 3, 4):
        x = _ref_conv(x, torch_params[f"w{i}"], torch_params[f"b{i}"], 2, 1)
        x = _ref_lrelu(_ref_instance_norm(x))
    x = jnp.pad(x, ((0, 0), (0, 0), (1, 0), (1, 0)))    # ZeroPad2d((1,0,1,0))
    return _ref_conv(x, torch_params["w5"], None, 1, 1)


if __name__ == "__main__":
    root = jax.random.PRNGKey(0)
    k_img, k_cond, k_par = jax.random.split(root, 3)

    B, C, H, W = 2, 1, 32, 32       # output: (B, 1, H/16, W/16) = (2, 1, 2, 2)
    img = jax.random.normal(k_img, (B, C, H, W), jnp.float32)
    img_condition = jax.random.normal(k_cond, (B, C, H, W), jnp.float32)

    torch_params = init_torch_params(k_par, in_channels=C)
    params_f32 = prepare_gemm_params(torch_params, compute_dtype=jnp.float32)
    params_bf16 = prepare_gemm_params(torch_params, compute_dtype=jnp.bfloat16)

    fwd_f32 = jax.jit(functools.partial(patchgan_dis_forward,
                                        compute_dtype=jnp.float32))
    fwd_bf16 = jax.jit(functools.partial(patchgan_dis_forward,
                                         compute_dtype=jnp.bfloat16))

    ref = jax.block_until_ready(reference_forward(img, img_condition, torch_params))

    # Full-precision path: tight(ish) correctness gate.
    out_f32 = jax.block_until_ready(fwd_f32(img, img_condition, params_f32))
    assert out_f32.shape == ref.shape == (B, 1, H // 16, W // 16)
    assert jnp.allclose(out_f32, ref, atol=5e-2, rtol=5e-2), (
        f"f32 kernel mismatch: max|d|={float(jnp.max(jnp.abs(out_f32 - ref)))}")

    # bf16 MXU fast path (v6e/v7x): f32 accumulation, looser tolerance vs f32 ref.
    out_bf16 = jax.block_until_ready(fwd_bf16(img, img_condition, params_bf16))
    assert out_bf16.shape == ref.shape
    assert jnp.allclose(out_bf16, ref, atol=1.5e-1, rtol=1.5e-1), (
        f"bf16 kernel mismatch: max|d|={float(jnp.max(jnp.abs(out_bf16 - ref)))}")

    print("KERNEL_OK")
</pallas_src>

<mosaic_0001>
module attributes {stable_mosaic.version = 11 : i64} {
  func.func @_gemm_bias_act_kernel(%arg0: i32, %arg1: i32, %arg2: i32, %arg3: memref<256x128xf32, #tpu.memory_space<vmem>>, %arg4: memref<128x128xf32, #tpu.memory_space<vmem>>, %arg5: memref<1x128xf32, #tpu.memory_space<vmem>>, %arg6: memref<256x128xf32, #tpu.memory_space<vmem>>, %arg7: memref<256x128xf32, #tpu.memory_space<vmem>>) attributes {dimension_semantics = [#tpu.dimension_semantics<parallel>, #tpu.dimension_semantics<parallel>, #tpu.dimension_semantics<arbitrary>], iteration_bounds = array<i64: 2, 1, 1>, scalar_prefetch = 0 : i64, scratch_operands = 1 : i64, tpu.core_type = #tpu.core_type<tc>, window_params = [{transform_indices = @transform_0, window_bounds = array<i64: 256, 128>}, {transform_indices = @transform_1, window_bounds = array<i64: 128, 128>}, {transform_indices = @transform_2, window_bounds = array<i64: 1, 128>}, {transform_indices = @transform_3, window_bounds = array<i64: 256, 128>}]} {
    %c0_i32 = arith.constant 0 : i32
    %0 = arith.cmpi eq, %arg2, %c0_i32 : i32
    %1 = arith.extui %0 : i1 to i32
    %c0_i32_0 = arith.constant 0 : i32
    %2 = arith.cmpi ne, %1, %c0_i32_0 : i32
    scf.if %2 {
      %cst_10 = arith.constant 0.000000e+00 : f32
      %12 = vector.broadcast %cst_10 : f32 to vector<256x128xf32>
      %c0_11 = arith.constant 0 : index
      %c0_12 = arith.constant 0 : index
      %13 = vector.load %arg7[%c0_11, %c0_12] : memref<256x128xf32, #tpu.memory_space<vmem>>, vector<256x128xf32>
      tpu.vector_store %arg7[%c0_11, %c0_12], %12 {strides = array<i32>} : memref<256x128xf32, #tpu.memory_space<vmem>>, vector<256x128xf32>,
    } else {
    }
    %c0 = arith.constant 0 : index
    %c0_1 = arith.constant 0 : index
    %3 = vector.load %arg7[%c0, %c0_1] : memref<256x128xf32, #tpu.memory_space<vmem>>, vector<256x128xf32>
    %c0_2 = arith.constant 0 : index
    %c0_3 = arith.constant 0 : index
    %4 = vector.load %arg3[%c0_2, %c0_3] : memref<256x128xf32, #tpu.memory_space<vmem>>, vector<256x128xf32>
    %c0_4 = arith.constant 0 : index
    %c0_5 = arith.constant 0 : index
    %5 = vector.load %arg4[%c0_4, %c0_5] : memref<128x128xf32, #tpu.memory_space<vmem>>, vector<128x128xf32>
    %cst = arith.constant dense<0.000000e+00> : vector<256x128xf32>
    %6 = tpu.matmul %4, %5, %cst {dimension_numbers = #tpu.dot_dimension_numbers<[1], [0], [0], [1], [0, 0, 1, 1], [], []>} : vector<256x128xf32>, vector<128x128xf32>, vector<256x128xf32> -> vector<256x128xf32>
    %7 = arith.addf %3, %6 : vector<256x128xf32>
    %c0_6 = arith.constant 0 : index
    %c0_7 = arith.constant 0 : index
    %8 = vector.load %arg7[%c0_6, %c0_7] : memref<256x128xf32, #tpu.memory_space<vmem>>, vector<256x128xf32>
    tpu.vector_store %arg7[%c0_6, %c0_7], %7 {strides = array<i32>} : memref<256x128xf32, #tpu.memory_space<vmem>>, vector<256x128xf32>,
    %c0_i32_8 = arith.constant 0 : i32
    %9 = arith.cmpi eq, %arg2, %c0_i32_8 : i32
    %10 = arith.extui %9 : i1 to i32
    %c0_i32_9 = arith.constant 0 : i32
    %11 = arith.cmpi ne, %10, %c0_i32_9 : i32
    scf.if %11 {
      %c0_10 = arith.constant 0 : index
      %c0_11 = arith.constant 0 : index
      %12 = vector.load %arg7[%c0_10, %c0_11] : memref<256x128xf32, #tpu.memory_space<vmem>>, vector<256x128xf32>
      %c0_12 = arith.constant 0 : index
      %c0_13 = arith.constant 0 : index
      %13 = vector.load %arg5[%c0_12, %c0_13] : memref<1x128xf32, #tpu.memory_space<vmem>>, vector<1x128xf32>
      %14 = vector.broadcast %13 : vector<1x128xf32> to vector<256x128xf32>
      %15 = arith.addf %12, %14 : vector<256x128xf32>
      %cst_14 = arith.constant 0.000000e+00 : f32
      %16 = vector.broadcast %cst_14 : f32 to vector<256x128xf32>
      %17 = arith.cmpf oge, %15, %16 : vector<256x128xf32>
      %cst_15 = arith.constant 2.000000e-01 : f32
      %18 = vector.broadcast %cst_15 : f32 to vector<256x128xf32>
      %19 = arith.mulf %18, %15 : vector<256x128xf32>
      %20 = arith.select %17, %15, %19 : vector<256x128xi1>, vector<256x128xf32>
      %c0_16 = arith.constant 0 : index
      %c0_17 = arith.constant 0 : index
      %21 = vector.load %arg6[%c0_16, %c0_17] : memref<256x128xf32, #tpu.memory_space<vmem>>, vector<256x128xf32>
      tpu.vector_store %arg6[%c0_16, %c0_17], %20 {strides = array<i32>} : memref<256x128xf32, #tpu.memory_space<vmem>>, vector<256x128xf32>,
    } else {
    }
    return
  }
  func.func @transform_0(%arg0: i32, %arg1: i32, %arg2: i32) -> (i32, i32) {
    %c0_i32 = arith.constant 0 : i32
    return %arg0, %arg2 : i32, i32
  }
  func.func @transform_1(%arg0: i32, %arg1: i32, %arg2: i32) -> (i32, i32) {
    %c0_i32 = arith.constant 0 : i32
    return %arg2, %arg1 : i32, i32
  }
  func.func @transform_2(%arg0: i32, %arg1: i32, %arg2: i32) -> (i32, i32) {
    %c0_i32 = arith.constant 0 : i32
    %c0_i32_0 = arith.constant 0 : i32
    return %c0_i32, %arg1 : i32, i32
  }
  func.func @transform_3(%arg0: i32, %arg1: i32, %arg2: i32) -> (i32, i32) {
    %c0_i32 = arith.constant 0 : i32
    return %arg0, %arg1 : i32, i32
  }
}

module attributes {stable_mosaic.version = 11 : i64} {
  func.func @_gemm_bias_act_kernel(%arg0: i32, %arg1: i32, %arg2: i32, %arg3: memref<128x512xf32, #tpu.memory_space<vmem>>, %arg4: memref<512x128xf32, #tpu.memory_space<vmem>>, %arg5: memref<1x128xf32, #tpu.memory_space<vmem>>, %arg6: memref<128x128xf32, #tpu.memory_space<vmem>>, %arg7: memref<128x128xf32, #tpu.memory_space<vmem>>) attributes {dimension_semantics = [#tpu.dimension_semantics<parallel>, #tpu.dimension_semantics<parallel>, #tpu.dimension_semantics<arbitrary>], iteration_bounds = array<i64: 1, 1, 2>, scalar_prefetch = 0 : i64, scratch_operands = 1 : i64, tpu.core_type = #tpu.core_type<tc>, window_params = [{transform_indices = @transform_0, window_bounds = array<i64: 128, 512>}, {transform_indices = @transform_1, window_bounds = array<i64: 512, 128>}, {transform_indices = @transform_2, window_bounds = array<i64: 1, 128>}, {transform_indices = @transform_3, window_bounds = array<i64: 128, 128>}]} {
    %c0_i32 = arith.constant 0 : i32
    %0 = arith.cmpi eq, %arg2, %c0_i32 : i32
    %1 = arith.extui %0 : i1 to i32
    %c0_i32_0 = arith.constant 0 : i32
    %2 = arith.cmpi ne, %1, %c0_i32_0 : i32
    scf.if %2 {
      %cst_9 = arith.constant 0.000000e+00 : f32
      %12 = vector.broadcast %cst_9 : f32 to vector<128x128xf32>
      %c0_10 = arith.constant 0 : index
      %c0_11 = arith.constant 0 : index
      %13 = vector.load %arg7[%c0_10, %c0_11] : memref<128x128xf32, #tpu.memory_space<vmem>>, vector<128x128xf32>
      tpu.vector_store %arg7[%c0_10, %c0_11], %12 {strides = array<i32>} : memref<128x128xf32, #tpu.memory_space<vmem>>, vector<128x128xf32>,
    } else {
    }
    %c0 = arith.constant 0 : index
    %c0_1 = arith.constant 0 : index
    %3 = vector.load %arg7[%c0, %c0_1] : memref<128x128xf32, #tpu.memory_space<vmem>>, vector<128x128xf32>
    %c0_2 = arith.constant 0 : index
    %c0_3 = arith.constant 0 : index
    %4 = vector.load %arg3[%c0_2, %c0_3] : memref<128x512xf32, #tpu.memory_space<vmem>>, vector<128x512xf32>
    %c0_4 = arith.constant 0 : index
    %c0_5 = arith.constant 0 : index
    %5 = vector.load %arg4[%c0_4, %c0_5] : memref<512x128xf32, #tpu.memory_space<vmem>>, vector<512x128xf32>
    %cst = arith.constant dense<0.000000e+00> : vector<128x128xf32>
    %6 = tpu.matmul %4, %5, %cst {dimension_numbers = #tpu.dot_dimension_numbers<[1], [0], [0], [1], [0, 0, 1, 1], [], []>} : vector<128x512xf32>, vector<512x128xf32>, vector<128x128xf32> -> vector<128x128xf32>
    %7 = arith.addf %3, %6 : vector<128x128xf32>
    %c0_6 = arith.constant 0 : index
    %c0_7 = arith.constant 0 : index
    %8 = vector.load %arg7[%c0_6, %c0_7] : memref<128x128xf32, #tpu.memory_space<vmem>>, vector<128x128xf32>
    tpu.vector_store %arg7[%c0_6, %c0_7], %7 {strides = array<i32>} : memref<128x128xf32, #tpu.memory_space<vmem>>, vector<128x128xf32>,
    %c1_i32 = arith.constant 1 : i32
    %9 = arith.cmpi eq, %arg2, %c1_i32 : i32
    %10 = arith.extui %9 : i1 to i32
    %c0_i32_8 = arith.constant 0 : i32
    %11 = arith.cmpi ne, %10, %c0_i32_8 : i32
    scf.if %11 {
      %c0_9 = arith.constant 0 : index
      %c0_10 = arith.constant 0 : index
      %12 = vector.load %arg7[%c0_9, %c0_10] : memref<128x128xf32, #tpu.memory_space<vmem>>, vector<128x128xf32>
      %c0_11 = arith.constant 0 : index
      %c0_12 = arith.constant 0 : index
      %13 = vector.load %arg5[%c0_11, %c0_12] : memref<1x128xf32, #tpu.memory_space<vmem>>, vector<1x128xf32>
      %14 = vector.broadcast %13 : vector<1x128xf32> to vector<128x128xf32>
      %15 = arith.addf %12, %14 : vector<128x128xf32>
      %c0_13 = arith.constant 0 : index
      %c0_14 = arith.constant 0 : index
      %16 = vector.load %arg6[%c0_13, %c0_14] : memref<128x128xf32, #tpu.memory_space<vmem>>, vector<128x128xf32>
      tpu.vector_store %arg6[%c0_13, %c0_14], %15 {strides = array<i32>} : memref<128x128xf32, #tpu.memory_space<vmem>>, vector<128x128xf32>,
    } else {
    }
    return
  }
  func.func @transform_0(%arg0: i32, %arg1: i32, %arg2: i32) -> (i32, i32) {
    %c0_i32 = arith.constant 0 : i32
    return %arg0, %arg2 : i32, i32
  }
  func.func @transform_1(%arg0: i32, %arg1: i32, %arg2: i32) -> (i32, i32) {
    %c0_i32 = arith.constant 0 : i32
    return %arg2, %arg1 : i32, i32
  }
  func.func @transform_2(%arg0: i32, %arg1: i32, %arg2: i32) -> (i32, i32) {
    %c0_i32 = arith.constant 0 : i32
    %c0_i32_0 = arith.constant 0 : i32
    return %c0_i32, %arg1 : i32, i32
  }
  func.func @transform_3(%arg0: i32, %arg1: i32, %arg2: i32) -> (i32, i32) {
    %c0_i32 = arith.constant 0 : i32
    return %arg0, %arg1 : i32, i32
  }
}

module attributes {stable_mosaic.version = 11 : i64} {
  func.func @_instance_norm_lrelu_kernel(%arg0: i32, %arg1: i32, %arg2: memref<1x64x128xf32, #tpu.memory_space<vmem>>, %arg3: memref<1x64x128xf32, #tpu.memory_space<vmem>>) attributes {dimension_semantics = [#tpu.dimension_semantics<parallel>, #tpu.dimension_semantics<parallel>], iteration_bounds = array<i64: 2, 1>, scalar_prefetch = 0 : i64, scratch_operands = 0 : i64, tpu.core_type = #tpu.core_type<tc>, window_params = [{transform_indices = @transform_0, window_bounds = array<i64: 1, 64, 128>}, {transform_indices = @transform_1, window_bounds = array<i64: 1, 64, 128>}]} {
    %c0 = arith.constant 0 : index
    %c0_0 = arith.constant 0 : index
    %c0_1 = arith.constant 0 : index
    %0 = vector.load %arg2[%c0, %c0_0, %c0_1] : memref<1x64x128xf32, #tpu.memory_space<vmem>>, vector<1x64x128xf32>
    %cst = arith.constant dense<0.000000e+00> : vector<1x128xf32>
    %1 = vector.multi_reduction <add>, %0, %cst [1] : vector<1x64x128xf32> to vector<1x128xf32>
    %2 = vector.shape_cast %1 : vector<1x128xf32> to vector<1x1x128xf32>
    %cst_2 = arith.constant 6.400000e+01 : f32
    %3 = vector.broadcast %cst_2 : f32 to vector<1x1x128xf32>
    %4 = arith.divf %2, %3 : vector<1x1x128xf32>
    %5 = vector.broadcast %4 : vector<1x1x128xf32> to vector<1x64x128xf32>
    %6 = arith.subf %0, %5 : vector<1x64x128xf32>
    %7 = arith.mulf %6, %6 : vector<1x64x128xf32>
    %cst_3 = arith.constant dense<0.000000e+00> : vector<1x128xf32>
    %8 = vector.multi_reduction <add>, %7, %cst_3 [1] : vector<1x64x128xf32> to vector<1x128xf32>
    %9 = vector.shape_cast %8 : vector<1x128xf32> to vector<1x1x128xf32>
    %cst_4 = arith.constant 6.400000e+01 : f32
    %10 = vector.broadcast %cst_4 : f32 to vector<1x1x128xf32>
    %11 = arith.divf %9, %10 : vector<1x1x128xf32>
    %cst_5 = arith.constant 9.99999974E-6 : f32
    %12 = vector.broadcast %cst_5 : f32 to vector<1x1x128xf32>
    %13 = arith.addf %11, %12 : vector<1x1x128xf32>
    %14 = math.rsqrt %13 : vector<1x1x128xf32>
    %15 = vector.broadcast %14 : vector<1x1x128xf32> to vector<1x64x128xf32>
    %16 = arith.mulf %6, %15 : vector<1x64x128xf32>
    %cst_6 = arith.constant 0.000000e+00 : f32
    %17 = vector.broadcast %cst_6 : f32 to vector<1x64x128xf32>
    %18 = arith.cmpf oge, %16, %17 : vector<1x64x128xf32>
    %cst_7 = arith.constant 2.000000e-01 : f32
    %19 = vector.broadcast %cst_7 : f32 to vector<1x64x128xf32>
    %20 = arith.mulf %19, %16 : vector<1x64x128xf32>
    %21 = arith.select %18, %16, %20 : vector<1x64x128xi1>, vector<1x64x128xf32>
    %c0_8 = arith.constant 0 : index
    %c0_9 = arith.constant 0 : index
    %c0_10 = arith.constant 0 : index
    %22 = vector.load %arg3[%c0_8, %c0_9, %c0_10] : memref<1x64x128xf32, #tpu.memory_space<vmem>>, vector<1x64x128xf32>
    tpu.vector_store %arg3[%c0_8, %c0_9, %c0_10], %21 {strides = array<i32>} : memref<1x64x128xf32, #tpu.memory_space<vmem>>, vector<1x64x128xf32>,
    return
  }
  func.func @transform_0(%arg0: i32, %arg1: i32) -> (i32, i32, i32) {
    %c0_i32 = arith.constant 0 : i32
    %c0_i32_0 = arith.constant 0 : i32
    return %arg0, %c0_i32, %arg1 : i32, i32, i32
  }
  func.func @transform_1(%arg0: i32, %arg1: i32) -> (i32, i32, i32) {
    %c0_i32 = arith.constant 0 : i32
    %c0_i32_0 = arith.constant 0 : i32
    return %arg0, %c0_i32, %arg1 : i32, i32, i32
  }
}

module attributes {stable_mosaic.version = 11 : i64} {
  func.func @_instance_norm_lrelu_kernel(%arg0: i32, %arg1: i32, %arg2: memref<1x16x256xf32, #tpu.memory_space<vmem>>, %arg3: memref<1x16x256xf32, #tpu.memory_space<vmem>>) attributes {dimension_semantics = [#tpu.dimension_semantics<parallel>, #tpu.dimension_semantics<parallel>], iteration_bounds = array<i64: 2, 1>, scalar_prefetch = 0 : i64, scratch_operands = 0 : i64, tpu.core_type = #tpu.core_type<tc>, window_params = [{transform_indices = @transform_0, window_bounds = array<i64: 1, 16, 256>}, {transform_indices = @transform_1, window_bounds = array<i64: 1, 16, 256>}]} {
    %c0 = arith.constant 0 : index
    %c0_0 = arith.constant 0 : index
    %c0_1 = arith.constant 0 : index
    %0 = vector.load %arg2[%c0, %c0_0, %c0_1] : memref<1x16x256xf32, #tpu.memory_space<vmem>>, vector<1x16x256xf32>
    %cst = arith.constant dense<0.000000e+00> : vector<1x256xf32>
    %1 = vector.multi_reduction <add>, %0, %cst [1] : vector<1x16x256xf32> to vector<1x256xf32>
    %2 = vector.shape_cast %1 : vector<1x256xf32> to vector<1x1x256xf32>
    %cst_2 = arith.constant 1.600000e+01 : f32
    %3 = vector.broadcast %cst_2 : f32 to vector<1x1x256xf32>
    %4 = arith.divf %2, %3 : vector<1x1x256xf32>
    %5 = vector.broadcast %4 : vector<1x1x256xf32> to vector<1x16x256xf32>
    %6 = arith.subf %0, %5 : vector<1x16x256xf32>
    %7 = arith.mulf %6, %6 : vector<1x16x256xf32>
    %cst_3 = arith.constant dense<0.000000e+00> : vector<1x256xf32>
    %8 = vector.multi_reduction <add>, %7, %cst_3 [1] : vector<1x16x256xf32> to vector<1x256xf32>
    %9 = vector.shape_cast %8 : vector<1x256xf32> to vector<1x1x256xf32>
    %cst_4 = arith.constant 1.600000e+01 : f32
    %10 = vector.broadcast %cst_4 : f32 to vector<1x1x256xf32>
    %11 = arith.divf %9, %10 : vector<1x1x256xf32>
    %cst_5 = arith.constant 9.99999974E-6 : f32
    %12 = vector.broadcast %cst_5 : f32 to vector<1x1x256xf32>
    %13 = arith.addf %11, %12 : vector<1x1x256xf32>
    %14 = math.rsqrt %13 : vector<1x1x256xf32>
    %15 = vector.broadcast %14 : vector<1x1x256xf32> to vector<1x16x256xf32>
    %16 = arith.mulf %6, %15 : vector<1x16x256xf32>
    %cst_6 = arith.constant 0.000000e+00 : f32
    %17 = vector.broadcast %cst_6 : f32 to vector<1x16x256xf32>
    %18 = arith.cmpf oge, %16, %17 : vector<1x16x256xf32>
    %cst_7 = arith.constant 2.000000e-01 : f32
    %19 = vector.broadcast %cst_7 : f32 to vector<1x16x256xf32>
    %20 = arith.mulf %19, %16 : vector<1x16x256xf32>
    %21 = arith.select %18, %16, %20 : vector<1x16x256xi1>, vector<1x16x256xf32>
    %c0_8 = arith.constant 0 : index
    %c0_9 = arith.constant 0 : index
    %c0_10 = arith.constant 0 : index
    %22 = vector.load %arg3[%c0_8, %c0_9, %c0_10] : memref<1x16x256xf32, #tpu.memory_space<vmem>>, vector<1x16x256xf32>
    tpu.vector_store %arg3[%c0_8, %c0_9, %c0_10], %21 {strides = array<i32>} : memref<1x16x256xf32, #tpu.memory_space<vmem>>, vector<1x16x256xf32>,
    return
  }
  func.func @transform_0(%arg0: i32, %arg1: i32) -> (i32, i32, i32) {
    %c0_i32 = arith.constant 0 : i32
    %c0_i32_0 = arith.constant 0 : i32
    return %arg0, %c0_i32, %arg1 : i32, i32, i32
  }
  func.func @transform_1(%arg0: i32, %arg1: i32) -> (i32, i32, i32) {
    %c0_i32 = arith.constant 0 : i32
    %c0_i32_0 = arith.constant 0 : i32
    return %arg0, %c0_i32, %arg1 : i32, i32, i32
  }
}

module attributes {stable_mosaic.version = 11 : i64} {
  func.func @_gemm_bias_act_kernel(%arg0: i32, %arg1: i32, %arg2: i32, %arg3: memref<32x512xf32, #tpu.memory_space<vmem>>, %arg4: memref<512x256xf32, #tpu.memory_space<vmem>>, %arg5: memref<1x256xf32, #tpu.memory_space<vmem>>, %arg6: memref<32x256xf32, #tpu.memory_space<vmem>>, %arg7: memref<32x256xf32, #tpu.memory_space<vmem>>) attributes {dimension_semantics = [#tpu.dimension_semantics<parallel>, #tpu.dimension_semantics<parallel>, #tpu.dimension_semantics<arbitrary>], iteration_bounds = array<i64: 1, 1, 4>, scalar_prefetch = 0 : i64, scratch_operands = 1 : i64, tpu.core_type = #tpu.core_type<tc>, window_params = [{transform_indices = @transform_0, window_bounds = array<i64: 32, 512>}, {transform_indices = @transform_1, window_bounds = array<i64: 512, 256>}, {transform_indices = @transform_2, window_bounds = array<i64: 1, 256>}, {transform_indices = @transform_3, window_bounds = array<i64: 32, 256>}]} {
    %c0_i32 = arith.constant 0 : i32
    %0 = arith.cmpi eq, %arg2, %c0_i32 : i32
    %1 = arith.extui %0 : i1 to i32
    %c0_i32_0 = arith.constant 0 : i32
    %2 = arith.cmpi ne, %1, %c0_i32_0 : i32
    scf.if %2 {
      %cst_9 = arith.constant 0.000000e+00 : f32
      %12 = vector.broadcast %cst_9 : f32 to vector<32x256xf32>
      %c0_10 = arith.constant 0 : index
      %c0_11 = arith.constant 0 : index
      %13 = vector.load %arg7[%c0_10, %c0_11] : memref<32x256xf32, #tpu.memory_space<vmem>>, vector<32x256xf32>
      tpu.vector_store %arg7[%c0_10, %c0_11], %12 {strides = array<i32>} : memref<32x256xf32, #tpu.memory_space<vmem>>, vector<32x256xf32>,
    } else {
    }
    %c0 = arith.constant 0 : index
    %c0_1 = arith.constant 0 : index
    %3 = vector.load %arg7[%c0, %c0_1] : memref<32x256xf32, #tpu.memory_space<vmem>>, vector<32x256xf32>
    %c0_2 = arith.constant 0 : index
    %c0_3 = arith.constant 0 : index
    %4 = vector.load %arg3[%c0_2, %c0_3] : memref<32x512xf32, #tpu.memory_space<vmem>>, vector<32x512xf32>
    %c0_4 = arith.constant 0 : index
    %c0_5 = arith.constant 0 : index
    %5 = vector.load %arg4[%c0_4, %c0_5] : memref<512x256xf32, #tpu.memory_space<vmem>>, vector<512x256xf32>
    %cst = arith.constant dense<0.000000e+00> : vector<32x256xf32>
    %6 = tpu.matmul %4, %5, %cst {dimension_numbers = #tpu.dot_dimension_numbers<[1], [0], [0], [1], [0, 0, 1, 1], [], []>} : vector<32x512xf32>, vector<512x256xf32>, vector<32x256xf32> -> vector<32x256xf32>
    %7 = arith.addf %3, %6 : vector<32x256xf32>
    %c0_6 = arith.constant 0 : index
    %c0_7 = arith.constant 0 : index
    %8 = vector.load %arg7[%c0_6, %c0_7] : memref<32x256xf32, #tpu.memory_space<vmem>>, vector<32x256xf32>
    tpu.vector_store %arg7[%c0_6, %c0_7], %7 {strides = array<i32>} : memref<32x256xf32, #tpu.memory_space<vmem>>, vector<32x256xf32>,
    %c3_i32 = arith.constant 3 : i32
    %9 = arith.cmpi eq, %arg2, %c3_i32 : i32
    %10 = arith.extui %9 : i1 to i32
    %c0_i32_8 = arith.constant 0 : i32
    %11 = arith.cmpi ne, %10, %c0_i32_8 : i32
    scf.if %11 {
      %c0_9 = arith.constant 0 : index
      %c0_10 = arith.constant 0 : index
      %12 = vector.load %arg7[%c0_9, %c0_10] : memref<32x256xf32, #tpu.memory_space<vmem>>, vector<32x256xf32>
      %c0_11 = arith.constant 0 : index
      %c0_12 = arith.constant 0 : index
      %13 = vector.load %arg5[%c0_11, %c0_12] : memref<1x256xf32, #tpu.memory_space<vmem>>, vector<1x256xf32>
      %14 = vector.broadcast %13 : vector<1x256xf32> to vector<32x256xf32>
      %15 = arith.addf %12, %14 : vector<32x256xf32>
      %c0_13 = arith.constant 0 : index
      %c0_14 = arith.constant 0 : index
      %16 = vector.load %arg6[%c0_13, %c0_14] : memref<32x256xf32, #tpu.memory_space<vmem>>, vector<32x256xf32>
      tpu.vector_store %arg6[%c0_13, %c0_14], %15 {strides = array<i32>} : memref<32x256xf32, #tpu.memory_space<vmem>>, vector<32x256xf32>,
    } else {
    }
    return
  }
  func.func @transform_0(%arg0: i32, %arg1: i32, %arg2: i32) -> (i32, i32) {
    %c0_i32 = arith.constant 0 : i32
    return %arg0, %arg2 : i32, i32
  }
  func.func @transform_1(%arg0: i32, %arg1: i32, %arg2: i32) -> (i32, i32) {
    %c0_i32 = arith.constant 0 : i32
    return %arg2, %arg1 : i32, i32
  }
  func.func @transform_2(%arg0: i32, %arg1: i32, %arg2: i32) -> (i32, i32) {
    %c0_i32 = arith.constant 0 : i32
    %c0_i32_0 = arith.constant 0 : i32
    return %c0_i32, %arg1 : i32, i32
  }
  func.func @transform_3(%arg0: i32, %arg1: i32, %arg2: i32) -> (i32, i32) {
    %c0_i32 = arith.constant 0 : i32
    return %arg0, %arg1 : i32, i32
  }
}

module attributes {stable_mosaic.version = 11 : i64} {
  func.func @_gemm_bias_act_kernel(%arg0: i32, %arg1: i32, %arg2: i32, %arg3: memref<8x512xf32, #tpu.memory_space<vmem>>, %arg4: memref<512x256xf32, #tpu.memory_space<vmem>>, %arg5: memref<1x256xf32, #tpu.memory_space<vmem>>, %arg6: memref<8x256xf32, #tpu.memory_space<vmem>>, %arg7: memref<8x256xf32, #tpu.memory_space<vmem>>) attributes {dimension_semantics = [#tpu.dimension_semantics<parallel>, #tpu.dimension_semantics<parallel>, #tpu.dimension_semantics<arbitrary>], iteration_bounds = array<i64: 1, 2, 8>, scalar_prefetch = 0 : i64, scratch_operands = 1 : i64, tpu.core_type = #tpu.core_type<tc>, window_params = [{transform_indices = @transform_0, window_bounds = array<i64: 8, 512>}, {transform_indices = @transform_1, window_bounds = array<i64: 512, 256>}, {transform_indices = @transform_2, window_bounds = array<i64: 1, 256>}, {transform_indices = @transform_3, window_bounds = array<i64: 8, 256>}]} {
    %c0_i32 = arith.constant 0 : i32
    %0 = arith.cmpi eq, %arg2, %c0_i32 : i32
    %1 = arith.extui %0 : i1 to i32
    %c0_i32_0 = arith.constant 0 : i32
    %2 = arith.cmpi ne, %1, %c0_i32_0 : i32
    scf.if %2 {
      %cst_9 = arith.constant 0.000000e+00 : f32
      %12 = vector.broadcast %cst_9 : f32 to vector<8x256xf32>
      %c0_10 = arith.constant 0 : index
      %c0_11 = arith.constant 0 : index
      %13 = vector.load %arg7[%c0_10, %c0_11] : memref<8x256xf32, #tpu.memory_space<vmem>>, vector<8x256xf32>
      tpu.vector_store %arg7[%c0_10, %c0_11], %12 {strides = array<i32>} : memref<8x256xf32, #tpu.memory_space<vmem>>, vector<8x256xf32>,
    } else {
    }
    %c0 = arith.constant 0 : index
    %c0_1 = arith.constant 0 : index
    %3 = vector.load %arg7[%c0, %c0_1] : memref<8x256xf32, #tpu.memory_space<vmem>>, vector<8x256xf32>
    %c0_2 = arith.constant 0 : index
    %c0_3 = arith.constant 0 : index
    %4 = vector.load %arg3[%c0_2, %c0_3] : memref<8x512xf32, #tpu.memory_space<vmem>>, vector<8x512xf32>
    %c0_4 = arith.constant 0 : index
    %c0_5 = arith.constant 0 : index
    %5 = vector.load %arg4[%c0_4, %c0_5] : memref<512x256xf32, #tpu.memory_space<vmem>>, vector<512x256xf32>
    %cst = arith.constant dense<0.000000e+00> : vector<8x256xf32>
    %6 = tpu.matmul %4, %5, %cst {dimension_numbers = #tpu.dot_dimension_numbers<[1], [0], [0], [1], [0, 0, 1, 1], [], []>} : vector<8x512xf32>, vector<512x256xf32>, vector<8x256xf32> -> vector<8x256xf32>
    %7 = arith.addf %3, %6 : vector<8x256xf32>
    %c0_6 = arith.constant 0 : index
    %c0_7 = arith.constant 0 : index
    %8 = vector.load %arg7[%c0_6, %c0_7] : memref<8x256xf32, #tpu.memory_space<vmem>>, vector<8x256xf32>
    tpu.vector_store %arg7[%c0_6, %c0_7], %7 {strides = array<i32>} : memref<8x256xf32, #tpu.memory_space<vmem>>, vector<8x256xf32>,
    %c7_i32 = arith.constant 7 : i32
    %9 = arith.cmpi eq, %arg2, %c7_i32 : i32
    %10 = arith.extui %9 : i1 to i32
    %c0_i32_8 = arith.constant 0 : i32
    %11 = arith.cmpi ne, %10, %c0_i32_8 : i32
    scf.if %11 {
      %c0_9 = arith.constant 0 : index
      %c0_10 = arith.constant 0 : index
      %12 = vector.load %arg7[%c0_9, %c0_10] : memref<8x256xf32, #tpu.memory_space<vmem>>, vector<8x256xf32>
      %c0_11 = arith.constant 0 : index
      %c0_12 = arith.constant 0 : index
      %13 = vector.load %arg5[%c0_11, %c0_12] : memref<1x256xf32, #tpu.memory_space<vmem>>, vector<1x256xf32>
      %14 = vector.broadcast %13 : vector<1x256xf32> to vector<8x256xf32>
      %15 = arith.addf %12, %14 : vector<8x256xf32>
      %c0_13 = arith.constant 0 : index
      %c0_14 = arith.constant 0 : index
      %16 = vector.load %arg6[%c0_13, %c0_14] : memref<8x256xf32, #tpu.memory_space<vmem>>, vector<8x256xf32>
      tpu.vector_store %arg6[%c0_13, %c0_14], %15 {strides = array<i32>} : memref<8x256xf32, #tpu.memory_space<vmem>>, vector<8x256xf32>,
    } else {
    }
    return
  }
  func.func @transform_0(%arg0: i32, %arg1: i32, %arg2: i32) -> (i32, i32) {
    %c0_i32 = arith.constant 0 : i32
    return %arg0, %arg2 : i32, i32
  }
  func.func @transform_1(%arg0: i32, %arg1: i32, %arg2: i32) -> (i32, i32) {
    %c0_i32 = arith.constant 0 : i32
    return %arg2, %arg1 : i32, i32
  }
  func.func @transform_2(%arg0: i32, %arg1: i32, %arg2: i32) -> (i32, i32) {
    %c0_i32 = arith.constant 0 : i32
    %c0_i32_0 = arith.constant 0 : i32
    return %c0_i32, %arg1 : i32, i32
  }
  func.func @transform_3(%arg0: i32, %arg1: i32, %arg2: i32) -> (i32, i32) {
    %c0_i32 = arith.constant 0 : i32
    return %arg0, %arg1 : i32, i32
  }
}

module attributes {stable_mosaic.version = 11 : i64} {
  func.func @_instance_norm_lrelu_kernel(%arg0: i32, %arg1: i32, %arg2: memref<1x4x256xf32, #tpu.memory_space<vmem>>, %arg3: memref<1x4x256xf32, #tpu.memory_space<vmem>>) attributes {dimension_semantics = [#tpu.dimension_semantics<parallel>, #tpu.dimension_semantics<parallel>], iteration_bounds = array<i64: 2, 2>, scalar_prefetch = 0 : i64, scratch_operands = 0 : i64, tpu.core_type = #tpu.core_type<tc>, window_params = [{transform_indices = @transform_0, window_bounds = array<i64: 1, 4, 256>}, {transform_indices = @transform_1, window_bounds = array<i64: 1, 4, 256>}]} {
    %c0 = arith.constant 0 : index
    %c0_0 = arith.constant 0 : index
    %c0_1 = arith.constant 0 : index
    %0 = vector.load %arg2[%c0, %c0_0, %c0_1] : memref<1x4x256xf32, #tpu.memory_space<vmem>>, vector<1x4x256xf32>
    %cst = arith.constant dense<0.000000e+00> : vector<1x256xf32>
    %1 = vector.multi_reduction <add>, %0, %cst [1] : vector<1x4x256xf32> to vector<1x256xf32>
    %2 = vector.shape_cast %1 : vector<1x256xf32> to vector<1x1x256xf32>
    %cst_2 = arith.constant 4.000000e+00 : f32
    %3 = vector.broadcast %cst_2 : f32 to vector<1x1x256xf32>
    %4 = arith.divf %2, %3 : vector<1x1x256xf32>
    %5 = vector.broadcast %4 : vector<1x1x256xf32> to vector<1x4x256xf32>
    %6 = arith.subf %0, %5 : vector<1x4x256xf32>
    %7 = arith.mulf %6, %6 : vector<1x4x256xf32>
    %cst_3 = arith.constant dense<0.000000e+00> : vector<1x256xf32>
    %8 = vector.multi_reduction <add>, %7, %cst_3 [1] : vector<1x4x256xf32> to vector<1x256xf32>
    %9 = vector.shape_cast %8 : vector<1x256xf32> to vector<1x1x256xf32>
    %cst_4 = arith.constant 4.000000e+00 : f32
    %10 = vector.broadcast %cst_4 : f32 to vector<1x1x256xf32>
    %11 = arith.divf %9, %10 : vector<1x1x256xf32>
    %cst_5 = arith.constant 9.99999974E-6 : f32
    %12 = vector.broadcast %cst_5 : f32 to vector<1x1x256xf32>
    %13 = arith.addf %11, %12 : vector<1x1x256xf32>
    %14 = math.rsqrt %13 : vector<1x1x256xf32>
    %15 = vector.broadcast %14 : vector<1x1x256xf32> to vector<1x4x256xf32>
    %16 = arith.mulf %6, %15 : vector<1x4x256xf32>
    %cst_6 = arith.constant 0.000000e+00 : f32
    %17 = vector.broadcast %cst_6 : f32 to vector<1x4x256xf32>
    %18 = arith.cmpf oge, %16, %17 : vector<1x4x256xf32>
    %cst_7 = arith.constant 2.000000e-01 : f32
    %19 = vector.broadcast %cst_7 : f32 to vector<1x4x256xf32>
    %20 = arith.mulf %19, %16 : vector<1x4x256xf32>
    %21 = arith.select %18, %16, %20 : vector<1x4x256xi1>, vector<1x4x256xf32>
    %c0_8 = arith.constant 0 : index
    %c0_9 = arith.constant 0 : index
    %c0_10 = arith.constant 0 : index
    %22 = vector.load %arg3[%c0_8, %c0_9, %c0_10] : memref<1x4x256xf32, #tpu.memory_space<vmem>>, vector<1x4x256xf32>
    tpu.vector_store %arg3[%c0_8, %c0_9, %c0_10], %21 {strides = array<i32>} : memref<1x4x256xf32, #tpu.memory_space<vmem>>, vector<1x4x256xf32>,
    return
  }
  func.func @transform_0(%arg0: i32, %arg1: i32) -> (i32, i32, i32) {
    %c0_i32 = arith.constant 0 : i32
    %c0_i32_0 = arith.constant 0 : i32
    return %arg0, %c0_i32, %arg1 : i32, i32, i32
  }
  func.func @transform_1(%arg0: i32, %arg1: i32) -> (i32, i32, i32) {
    %c0_i32 = arith.constant 0 : i32
    %c0_i32_0 = arith.constant 0 : i32
    return %arg0, %c0_i32, %arg1 : i32, i32, i32
  }
}

module attributes {stable_mosaic.version = 11 : i64} {
  func.func @_gemm_bias_act_kernel(%arg0: i32, %arg1: i32, %arg2: i32, %arg3: memref<8x512xf32, #tpu.memory_space<vmem>>, %arg4: memref<512x128xf32, #tpu.memory_space<vmem>>, %arg5: memref<1x128xf32, #tpu.memory_space<vmem>>, %arg6: memref<8x128xf32, #tpu.memory_space<vmem>>, %arg7: memref<8x128xf32, #tpu.memory_space<vmem>>) attributes {dimension_semantics = [#tpu.dimension_semantics<parallel>, #tpu.dimension_semantics<parallel>, #tpu.dimension_semantics<arbitrary>], iteration_bounds = array<i64: 1, 1, 16>, scalar_prefetch = 0 : i64, scratch_operands = 1 : i64, tpu.core_type = #tpu.core_type<tc>, window_params = [{transform_indices = @transform_0, window_bounds = array<i64: 8, 512>}, {transform_indices = @transform_1, window_bounds = array<i64: 512, 128>}, {transform_indices = @transform_2, window_bounds = array<i64: 1, 128>}, {transform_indices = @transform_3, window_bounds = array<i64: 8, 128>}]} {
    %c0_i32 = arith.constant 0 : i32
    %0 = arith.cmpi eq, %arg2, %c0_i32 : i32
    %1 = arith.extui %0 : i1 to i32
    %c0_i32_0 = arith.constant 0 : i32
    %2 = arith.cmpi ne, %1, %c0_i32_0 : i32
    scf.if %2 {
      %cst_9 = arith.constant 0.000000e+00 : f32
      %12 = vector.broadcast %cst_9 : f32 to vector<8x128xf32>
      %c0_10 = arith.constant 0 : index
      %c0_11 = arith.constant 0 : index
      %13 = vector.load %arg7[%c0_10, %c0_11] : memref<8x128xf32, #tpu.memory_space<vmem>>, vector<8x128xf32>
      tpu.vector_store %arg7[%c0_10, %c0_11], %12 {strides = array<i32>} : memref<8x128xf32, #tpu.memory_space<vmem>>, vector<8x128xf32>,
    } else {
    }
    %c0 = arith.constant 0 : index
    %c0_1 = arith.constant 0 : index
    %3 = vector.load %arg7[%c0, %c0_1] : memref<8x128xf32, #tpu.memory_space<vmem>>, vector<8x128xf32>
    %c0_2 = arith.constant 0 : index
    %c0_3 = arith.constant 0 : index
    %4 = vector.load %arg3[%c0_2, %c0_3] : memref<8x512xf32, #tpu.memory_space<vmem>>, vector<8x512xf32>
    %c0_4 = arith.constant 0 : index
    %c0_5 = arith.constant 0 : index
    %5 = vector.load %arg4[%c0_4, %c0_5] : memref<512x128xf32, #tpu.memory_space<vmem>>, vector<512x128xf32>
    %cst = arith.constant dense<0.000000e+00> : vector<8x128xf32>
    %6 = tpu.matmul %4, %5, %cst {dimension_numbers = #tpu.dot_dimension_numbers<[1], [0], [0], [1], [0, 0, 1, 1], [], []>} : vector<8x512xf32>, vector<512x128xf32>, vector<8x128xf32> -> vector<8x128xf32>
    %7 = arith.addf %3, %6 : vector<8x128xf32>
    %c0_6 = arith.constant 0 : index
    %c0_7 = arith.constant 0 : index
    %8 = vector.load %arg7[%c0_6, %c0_7] : memref<8x128xf32, #tpu.memory_space<vmem>>, vector<8x128xf32>
    tpu.vector_store %arg7[%c0_6, %c0_7], %7 {strides = array<i32>} : memref<8x128xf32, #tpu.memory_space<vmem>>, vector<8x128xf32>,
    %c15_i32 = arith.constant 15 : i32
    %9 = arith.cmpi eq, %arg2, %c15_i32 : i32
    %10 = arith.extui %9 : i1 to i32
    %c0_i32_8 = arith.constant 0 : i32
    %11 = arith.cmpi ne, %10, %c0_i32_8 : i32
    scf.if %11 {
      %c0_9 = arith.constant 0 : index
      %c0_10 = arith.constant 0 : index
      %12 = vector.load %arg7[%c0_9, %c0_10] : memref<8x128xf32, #tpu.memory_space<vmem>>, vector<8x128xf32>
      %c0_11 = arith.constant 0 : index
      %c0_12 = arith.constant 0 : index
      %13 = vector.load %arg5[%c0_11, %c0_12] : memref<1x128xf32, #tpu.memory_space<vmem>>, vector<1x128xf32>
      %14 = vector.broadcast %13 : vector<1x128xf32> to vector<8x128xf32>
      %15 = arith.addf %12, %14 : vector<8x128xf32>
      %c0_13 = arith.constant 0 : index
      %c0_14 = arith.constant 0 : index
      %16 = vector.load %arg6[%c0_13, %c0_14] : memref<8x128xf32, #tpu.memory_space<vmem>>, vector<8x128xf32>
      tpu.vector_store %arg6[%c0_13, %c0_14], %15 {strides = array<i32>} : memref<8x128xf32, #tpu.memory_space<vmem>>, vector<8x128xf32>,
    } else {
    }
    return
  }
  func.func @transform_0(%arg0: i32, %arg1: i32, %arg2: i32) -> (i32, i32) {
    %c0_i32 = arith.constant 0 : i32
    return %arg0, %arg2 : i32, i32
  }
  func.func @transform_1(%arg0: i32, %arg1: i32, %arg2: i32) -> (i32, i32) {
    %c0_i32 = arith.constant 0 : i32
    return %arg2, %arg1 : i32, i32
  }
  func.func @transform_2(%arg0: i32, %arg1: i32, %arg2: i32) -> (i32, i32) {
    %c0_i32 = arith.constant 0 : i32
    %c0_i32_0 = arith.constant 0 : i32
    return %c0_i32, %arg1 : i32, i32
  }
  func.func @transform_3(%arg0: i32, %arg1: i32, %arg2: i32) -> (i32, i32) {
    %c0_i32 = arith.constant 0 : i32
    return %arg0, %arg1 : i32, i32
  }
}

</mosaic_0001>

<llo_original>
// kernel: patchgan_dis_forward.8
$region0: #{patchgan_dis_forward.8}
  #allocation0 [shape = 'u32[]', space=smem, size = 0x4, offset = 0x4, fixed_abs, tag = 'smem constant byte address 0x4 - core index']
  #allocation1 [shape = 'u32[144,128]{1,0:T(1,128)}', space=vmem, size = 0x12000, scoped, tag = 'internal scratch']
  #allocation2 [shape = 'f32[256,128]{1,0:T(8,128)}', space=vmem, size = 0x20000, scoped, tag = 'scratch operand']
  %s0 = inlined_call_operand.vmem [shape: f32[512,128], index: 0, kind: input, shape index: {}]
  %s1 = inlined_call_operand.hbm [shape: f32[128,128], index: 1, kind: input, shape index: {}]
  %s2 = inlined_call_operand.hbm [shape: f32[1,128], index: 2, kind: input, shape index: {}]
  %s3 = inlined_call_operand.vmem [shape: f32[512,128], index: 3, kind: output, shape index: {}]
  %s4 = sld [smem:[#allocation0]]
  $region61: #{patchgan_dis_forward.8} parent=0
    _
  %s6 = ssub.s32 1, %s4
  %s7 = scalar_select 0, %s6, %s4
  $region1: #{patchgan_dis_forward.8} parent=0
    #allocation3 [shape = 'u8[65536]{0}', space=vmem, size = 0x10000, scoped, tag = 'input window, operand 1, single buffered']
    #allocation4 [shape = 's32[2]{0}', space=sflag, size = 0x8, scoped, tag = 'scoped memory for patchgan_dis_forward.8']
    #allocation5 [shape = 'u8[512]{0}', space=vmem, size = 0x400, scoped, tag = 'input window, operand 2, single buffered']
    #allocation6 [shape = 's32[1]{0}', space=sflag, size = 0x4, scoped, tag = 'scoped memory for patchgan_dis_forward.8']
    %8 = vsyncpa [#allocation4], 0
    %9 = vsyncpa [#allocation6], 0
    loop: start=0, step=1, limit=4
    $region2: #{patchgan_dis_forward.8} parent=1 // loop_pre_header
      _
    $region3: #{patchgan_dis_forward.8} parent=1 // loop_header
      %s11 = sphi 0, %s15
      %p12 = scmp.ge.s32.totalorder %s11, 4
      %s18 = sphi 0, %s37
      %s19 = sphi 0, %s33
      %s20 = sphi 0, %s29
      %s21 = sphi 0, %s18
      %s22 = sphi 0, %s19
      %s23 = sphi 0, %s20
      %s24 = sphi 0, %s21
      %s25 = sphi 0, %s22
      %s26 = sphi 0, %s23
      %s42 = sphi 0, %s44
      %s45 = sphi 0, %s42
      %s46 = sphi 0, %s45
      %s62 = sphi 0, %s46
      %s70 = sphi 0, %s72
      %s73 = sphi 0, %s70
      %s74 = sphi 0, %s73
      %s90 = sphi 0, %s74
      %s96 = sphi 0, %s98
      %s99 = sphi 0, %s96
      %s100 = sphi 0, %s99
      %s116 = sphi 0, %s100
      %s124 = sphi 0, %s126
      %s127 = sphi 0, %s124
      %s128 = sphi 0, %s127
      %s144 = sphi 0, %s128
    $region4: #{patchgan_dis_forward.8} parent=1 // loop_header_branch
      %14 = sbr.rel (%p12) target = $region8
    $region5: #{patchgan_dis_forward.8} parent=1 // loop_body
      %s16 = ssub.s32 %s11, 1
      %s17 = ssub.s32 %s11, 2
      %s27 = sadd.s32 1, %s20
      %p28 = scmp.ge.s32.totalorder %s27, 1
      %s29 = scalar_select %p28, 0, %s27
      %s30 = sadd.s32 1, %s19
      %s31 = scalar_select %p28, %s30, %s19
      %p32 = scmp.ge.s32.totalorder %s31, 1
      %s33 = scalar_select %p32, 0, %s31
      %s34 = sadd.s32 1, %s18
      %s35 = scalar_select %p32, %s34, %s18
      %p36 = scmp.ge.s32.totalorder %s35, 2
      %s37 = scalar_select %p36, 0, %s35
      %s38 = ssub.s32 %s18, %s37
      %s39 = ssub.s32 %s20, %s29
      %s40 = sor.u32 %s38, %s39
      %p41 = scmp.eq.s32.totalorder %s40, 0
      %s43 = sadd.s32 %s42, 1
      %s44 = scalar_select %p41, %s42, %s43
      %p47 = pneg %p41
      %p48 = scmp.eq.s32.totalorder %s11, 1
      %p49 = por %p47, %p48
      %p50 = scmp.ne.s32.totalorder %s42, %s45
      %p51 = scmp.eq.s32.totalorder %s11, 0
      %p52 = por %p50, %p51
      %p53 = scmp.ne.s32.totalorder %s42, %s45
      %p54 = scmp.eq.s32.totalorder %s16, 1
      %p55 = por %p53, %p54
      %p56 = scmp.ne.s32.totalorder %s45, %s46
      %p57 = scmp.eq.s32.totalorder %s16, 0
      %p58 = por %p56, %p57
      %p59 = scmp.ne.s32.totalorder %s45, %s46
      %p60 = scmp.eq.s32.totalorder %s17, 1
      %p61 = por %p59, %p60
      %p63 = scmp.ne.s32.totalorder %s46, %s62
      %p64 = scmp.eq.s32.totalorder %s17, 0
      %p65 = por %p63, %p64
      %s66 = ssub.s32 %s20, %s29
      %s67 = ssub.s32 %s19, %s33
      %s68 = sor.u32 %s66, %s67
      %p69 = scmp.eq.s32.totalorder %s68, 0
      %s71 = sadd.s32 %s70, 1
      %s72 = scalar_select %p69, %s70, %s71
      %p75 = pneg %p69
      %p76 = scmp.eq.s32.totalorder %s11, 1
      %p77 = por %p75, %p76
      %p78 = scmp.ne.s32.totalorder %s70, %s73
      %p79 = scmp.eq.s32.totalorder %s11, 0
      %p80 = por %p78, %p79
      %p81 = scmp.ne.s32.totalorder %s70, %s73
      %p82 = scmp.eq.s32.totalorder %s16, 1
      %p83 = por %p81, %p82
      %p84 = scmp.ne.s32.totalorder %s73, %s74
      %p85 = scmp.eq.s32.totalorder %s16, 0
      %p86 = por %p84, %p85
      %p87 = scmp.ne.s32.totalorder %s73, %s74
      %p88 = scmp.eq.s32.totalorder %s17, 1
      %p89 = por %p87, %p88
      %p91 = scmp.ne.s32.totalorder %s74, %s90
      %p92 = scmp.eq.s32.totalorder %s17, 0
      %p93 = por %p91, %p92
      %s94 = ssub.s32 %s19, %s33
      %p95 = scmp.eq.s32.totalorder %s94, 0
      %s97 = sadd.s32 %s96, 1
      %s98 = scalar_select %p95, %s96, %s97
      %p101 = pneg %p95
      %p102 = scmp.eq.s32.totalorder %s11, 1
      %p103 = por %p101, %p102
      %p104 = scmp.ne.s32.totalorder %s96, %s99
      %p105 = scmp.eq.s32.totalorder %s11, 0
      %p106 = por %p104, %p105
      %p107 = scmp.ne.s32.totalorder %s96, %s99
      %p108 = scmp.eq.s32.totalorder %s16, 1
      %p109 = por %p107, %p108
      %p110 = scmp.ne.s32.totalorder %s99, %s100
      %p111 = scmp.eq.s32.totalorder %s16, 0
      %p112 = por %p110, %p111
      %p113 = scmp.ne.s32.totalorder %s99, %s100
      %p114 = scmp.eq.s32.totalorder %s17, 1
      %p115 = por %p113, %p114
      %p117 = scmp.ne.s32.totalorder %s100, %s116
      %p118 = scmp.eq.s32.totalorder %s17, 0
      %p119 = por %p117, %p118
      %s120 = ssub.s32 %s18, %s37
      %s121 = ssub.s32 %s19, %s33
      %s122 = sor.u32 %s120, %s121
      %p123 = scmp.eq.s32.totalorder %s122, 0
      %s125 = sadd.s32 %s124, 1
      %s126 = scalar_select %p123, %s124, %s125
      %p129 = pneg %p123
      %p130 = scmp.eq.s32.totalorder %s11, 1
      %p131 = por %p129, %p130
      %p132 = scmp.ne.s32.totalorder %s124, %s127
      %p133 = scmp.eq.s32.totalorder %s11, 0
      %p134 = por %p132, %p133
      %p135 = scmp.ne.s32.totalorder %s124, %s127
      %p136 = scmp.eq.s32.totalorder %s16, 1
      %p137 = por %p135, %p136
      %p138 = scmp.ne.s32.totalorder %s127, %s128
      %p139 = scmp.eq.s32.totalorder %s16, 0
      %p140 = por %p138, %p139
      %p141 = scmp.ne.s32.totalorder %s127, %s128
      %p142 = scmp.eq.s32.totalorder %s17, 1
      %p143 = por %p141, %p142
      %p145 = scmp.ne.s32.totalorder %s128, %s144
      %p146 = scmp.eq.s32.totalorder %s17, 0
      %p147 = por %p145, %p146
      %p148 = scmp.le.s32.totalorder 1, %s11
      %p149 = scmp.lt.s32.totalorder %s11, 3
      %p150 = pnand %p148, %p149
      %p151 = pneg %p150
      // Predicated region
      $region9: #{patchgan_dis_forward.8} parent=5 // pred_check
        _
      $region10: #{patchgan_dis_forward.8} parent=5 // pred_check_branch
        %153 = sbr.rel (%p150) target = $region12
      $region11: #{patchgan_dis_forward.8} parent=5 // pred_region
        %s154 = ssub.s32 %s11, 1
        // Predicated region
        $region13: #{patchgan_dis_forward.8} parent=11 // pred_check
          %p155 = pneg %p86
        $region14: #{patchgan_dis_forward.8} parent=11 // pred_check_branch
          %157 = sbr.rel (%p155) target = $region16
        $region15: #{patchgan_dis_forward.8} parent=11 // pred_region
          %s158 = smul.u32 16, %s23
          %s160 = ssub.s32 2048, 2048
          %161 = vsyncadd [#allocation4], %s160
          %s162 = sadd.s32 %s22, %s158
          %s163 = smul.addr %s162, 128
          %s164 = scalar_lea.hbm %s1, %s163
          %s165 = sshll.u32 [#allocation3], 4
          %s166 = int_to_ptr.vmem [resolvable:$true] %s165
          %171 = dma.hbm_to_vmem [thread:$0]  %s164, 2048, %s166, [#allocation4], 128, 128, 8
        $region16: #{patchgan_dis_forward.8} parent=11 // pred_fallthru
          _
        // Predicated region
        $region17: #{patchgan_dis_forward.8} parent=11 // pred_check
          %p172 = pneg %p112
        $region18: #{patchgan_dis_forward.8} parent=11 // pred_check_branch
          %174 = sbr.rel (%p172) target = $region20
        $region19: #{patchgan_dis_forward.8} parent=11 // pred_region
          %s176 = ssub.s32 16, 16
          %177 = vsyncadd [#allocation6], %s176
          %s178 = smul.addr %s22, 16
          %s179 = scalar_lea.hbm %s2, %s178
          %s181 = sshll.u32 [#allocation5], 4
          %s182 = int_to_ptr.vmem [resolvable:$true] %s181
          %184 = dma.hbm_to_vmem [thread:$0]  %s179, 16, %s182, [#allocation6]
        $region20: #{patchgan_dis_forward.8} parent=11 // pred_fallthru
          _
      $region12: #{patchgan_dis_forward.8} parent=5 // pred_fallthru
        _
      %p185 = scmp.lt.s32.totalorder %s11, 2
      // Predicated region
      $region21: #{patchgan_dis_forward.8} parent=5 // pred_check
        %p186 = pneg %p185
      $region22: #{patchgan_dis_forward.8} parent=5 // pred_check_branch
        %188 = sbr.rel (%p186) target = $region24
      $region23: #{patchgan_dis_forward.8} parent=5 // pred_region
        // Predicated region
        $region25: #{patchgan_dis_forward.8} parent=23 // pred_check
          %p189 = pneg %p52
        $region26: #{patchgan_dis_forward.8} parent=23 // pred_check_branch
          %191 = sbr.rel (%p189) target = $region28
        $region27: #{patchgan_dis_forward.8} parent=23 // pred_region
          %s192 = smul.u32 32, %s18
          %p193 = scmp.lt.s32.totalorder %s192, 63
          %s194 = scalar_select %p193, %s192, 63
          %p195 = scmp.lt.s32.totalorder %s20, 0
          %s196 = scalar_select %p195, %s20, 0
          %s197 = sadd.s32 %s196, %s194
          %s198 = smul.addr %s197, 8
          %s199 = scalar_lea.vmem %s0, %s198
          %s200 = smul.u32 32, %s18
        $region28: #{patchgan_dis_forward.8} parent=23 // pred_fallthru
          _
      $region24: #{patchgan_dis_forward.8} parent=5 // pred_fallthru
        _
      %p201 = scmp.le.s32.totalorder 1, %s11
      %p202 = scmp.lt.s32.totalorder %s11, 3
      %p203 = pnand %p201, %p202
      %p204 = pneg %p203
      // Predicated region
      $region29: #{patchgan_dis_forward.8} parent=5 // pred_check
        _
      $region30: #{patchgan_dis_forward.8} parent=5 // pred_check_branch
        %206 = sbr.rel (%p203) target = $region32
      $region31: #{patchgan_dis_forward.8} parent=5 // pred_region
        %s207 = ssub.s32 %s11, 1
        // Predicated region
        $region33: #{patchgan_dis_forward.8} parent=31 // pred_check
          %p208 = pneg %p86
        $region34: #{patchgan_dis_forward.8} parent=31 // pred_check_branch
          %210 = sbr.rel (%p208) target = $region36
        $region35: #{patchgan_dis_forward.8} parent=31 // pred_region
          %211 = dma.done [#allocation4], 2048
        $region36: #{patchgan_dis_forward.8} parent=31 // pred_fallthru
          _
        // Predicated region
        $region37: #{patchgan_dis_forward.8} parent=31 // pred_check
          %p212 = pneg %p112
        $region38: #{patchgan_dis_forward.8} parent=31 // pred_check_branch
          %214 = sbr.rel (%p212) target = $region40
        $region39: #{patchgan_dis_forward.8} parent=31 // pred_region
          %215 = dma.done [#allocation6], 16
        $region40: #{patchgan_dis_forward.8} parent=31 // pred_fallthru
          _
        %s216 = smul.u32 32, %s21
        %p217 = scmp.lt.s32.totalorder %s216, 63
        %s218 = scalar_select %p217, %s216, 63
        %p219 = scmp.lt.s32.totalorder %s23, 0
        %s220 = scalar_select %p219, %s23, 0
        %s221 = sadd.s32 %s220, %s218
        %s222 = smul.addr %s221, 8
        %s223 = scalar_lea.vmem %s0, %s222
        %p224 = pneg %p58
        %p225 = pneg %p55
        %p226 = pneg %p86
        %p227 = pneg %p83
        %p228 = pneg %p112
        %p229 = pneg %p109
        %p230 = pneg %p140
        %p231 = pneg %p137
        %s232 = smul.u32 32, %s21
        %p233 = scmp.lt.s32.totalorder %s232, 63
        %s234 = scalar_select %p233, %s232, 63
        %p235 = scmp.lt.s32.totalorder %s22, 0
        %s236 = scalar_select %p235, %s22, 0
        %s237 = sadd.s32 %s236, %s234
        %s238 = smul.addr %s237, 8
        %s239 = scalar_lea.vmem %s3, %s238
        %s240 = smul.u32 32, %s21
        %p241 = scmp.lt.s32.totalorder %s240, 63
        %s242 = scalar_select %p241, %s240, 63
        %p243 = scmp.lt.s32.totalorder %s23, 0
        %s244 = scalar_select %p243, %s23, 0
        %s245 = sadd.s32 %s244, %s242
        %s246 = smul.addr %s245, 8
        %s247 = scalar_lea.vmem %s0, %s246
        %s248 = smul.u32 32, %s21
        %s249 = smul.u32 16, %s23
        %s250 = smul.u32 32, %s21
        %p251 = scmp.lt.s32.totalorder %s250, 63
        %s252 = scalar_select %p251, %s250, 63
        %p253 = scmp.lt.s32.totalorder %s22, 0
        %s254 = scalar_select %p253, %s22, 0
        %s255 = sadd.s32 %s254, %s252
        %s256 = smul.addr %s255, 8
        %s257 = scalar_lea.vmem %s3, %s256
        %s258 = smul.u32 32, %s21
        %p259 = scmp.eq.s32.totalorder %s23, 0
        // Predicated region
        $region41: #{patchgan_dis_forward.8} parent=31 // pred_check
          %p260 = pneg %p259
        $region42: #{patchgan_dis_forward.8} parent=31 // pred_check_branch
          %262 = sbr.rel (%p260) target = $region44
        $region43: #{patchgan_dis_forward.8} parent=31 // pred_region
          %263 = vst [vmem:[#allocation2] sm:$0xff] 0.0
          %264 = vst [vmem:[#allocation2 + $0x8] sm:$0xff] 0.0
          %265 = vst [vmem:[#allocation2 + $0x10] sm:$0xff] 0.0
          %266 = vst [vmem:[#allocation2 + $0x18] sm:$0xff] 0.0
          %267 = vst [vmem:[#allocation2 + $0x20] sm:$0xff] 0.0
          %268 = vst [vmem:[#allocation2 + $0x28] sm:$0xff] 0.0
          %269 = vst [vmem:[#allocation2 + $0x30] sm:$0xff] 0.0
          %270 = vst [vmem:[#allocation2 + $0x38] sm:$0xff] 0.0
          %271 = vst [vmem:[#allocation2 + $0x40] sm:$0xff] 0.0
          %272 = vst [vmem:[#allocation2 + $0x48] sm:$0xff] 0.0
          %273 = vst [vmem:[#allocation2 + $0x50] sm:$0xff] 0.0
          %274 = vst [vmem:[#allocation2 + $0x58] sm:$0xff] 0.0
          %275 = vst [vmem:[#allocation2 + $0x60] sm:$0xff] 0.0
          %276 = vst [vmem:[#allocation2 + $0x68] sm:$0xff] 0.0
          %277 = vst [vmem:[#allocation2 + $0x70] sm:$0xff] 0.0
          %278 = vst [vmem:[#allocation2 + $0x78] sm:$0xff] 0.0
          %279 = vst [vmem:[#allocation2 + $0x80] sm:$0xff] 0.0
          %280 = vst [vmem:[#allocation2 + $0x88] sm:$0xff] 0.0
          %281 = vst [vmem:[#allocation2 + $0x90] sm:$0xff] 0.0
          %282 = vst [vmem:[#allocation2 + $0x98] sm:$0xff] 0.0
          %283 = vst [vmem:[#allocation2 + $0xa0] sm:$0xff] 0.0
          %284 = vst [vmem:[#allocation2 + $0xa8] sm:$0xff] 0.0
          %285 = vst [vmem:[#allocation2 + $0xb0] sm:$0xff] 0.0
          %286 = vst [vmem:[#allocation2 + $0xb8] sm:$0xff] 0.0
          %287 = vst [vmem:[#allocation2 + $0xc0] sm:$0xff] 0.0
          %288 = vst [vmem:[#allocation2 + $0xc8] sm:$0xff] 0.0
          %289 = vst [vmem:[#allocation2 + $0xd0] sm:$0xff] 0.0
          %290 = vst [vmem:[#allocation2 + $0xd8] sm:$0xff] 0.0
          %291 = vst [vmem:[#allocation2 + $0xe0] sm:$0xff] 0.0
          %292 = vst [vmem:[#allocation2 + $0xe8] sm:$0xff] 0.0
          %293 = vst [vmem:[#allocation2 + $0xf0] sm:$0xff] 0.0
          %294 = vst [vmem:[#allocation2 + $0xf8] sm:$0xff] 0.0
        $region44: #{patchgan_dis_forward.8} parent=31 // pred_fallthru
          _
        %v295 = vld [vmem:[#allocation2] sm:$0xff]
        %v296 = vld [vmem:[#allocation2 + $0x8] sm:$0xff]
        %v297 = vld [vmem:[#allocation2 + $0x10] sm:$0xff]
        %v298 = vld [vmem:[#allocation2 + $0x18] sm:$0xff]
        %v299 = vld [vmem:[#allocation2 + $0x20] sm:$0xff]
        %v300 = vld [vmem:[#allocation2 + $0x28] sm:$0xff]
        %v301 = vld [vmem:[#allocation2 + $0x30] sm:$0xff]
        %v302 = vld [vmem:[#allocation2 + $0x38] sm:$0xff]
        %v303 = vld [vmem:[#allocation2 + $0x40] sm:$0xff]
        %v304 = vld [vmem:[#allocation2 + $0x48] sm:$0xff]
        %v305 = vld [vmem:[#allocation2 + $0x50] sm:$0xff]
        %v306 = vld [vmem:[#allocation2 + $0x58] sm:$0xff]
        %v307 = vld [vmem:[#allocation2 + $0x60] sm:$0xff]
        %v308 = vld [vmem:[#allocation2 + $0x68] sm:$0xff]
        %v309 = vld [vmem:[#allocation2 + $0x70] sm:$0xff]
        %v310 = vld [vmem:[#allocation2 + $0x78] sm:$0xff]
        %v311 = vld [vmem:[#allocation2 + $0x80] sm:$0xff]
        %v312 = vld [vmem:[#allocation2 + $0x88] sm:$0xff]
        %v313 = vld [vmem:[#allocation2 + $0x90] sm:$0xff]
        %v314 = vld [vmem:[#allocation2 + $0x98] sm:$0xff]
        %v315 = vld [vmem:[#allocation2 + $0xa0] sm:$0xff]
        %v316 = vld [vmem:[#allocation2 + $0xa8] sm:$0xff]
        %v317 = vld [vmem:[#allocation2 + $0xb0] sm:$0xff]
        %v318 = vld [vmem:[#allocation2 + $0xb8] sm:$0xff]
        %v319 = vld [vmem:[#allocation2 + $0xc0] sm:$0xff]
        %v320 = vld [vmem:[#allocation2 + $0xc8] sm:$0xff]
        %v321 = vld [vmem:[#allocation2 + $0xd0] sm:$0xff]
        %v322 = vld [vmem:[#allocation2 + $0xd8] sm:$0xff]
        %v323 = vld [vmem:[#allocation2 + $0xe0] sm:$0xff]
        %v324 = vld [vmem:[#allocation2 + $0xe8] sm:$0xff]
        %v325 = vld [vmem:[#allocation2 + $0xf0] sm:$0xff]
        %v326 = vld [vmem:[#allocation2 + $0xf8] sm:$0xff]
        %v327 = vld [vmem:[%s247] sm:$0xff]
        %v328 = vld [vmem:[%s247 + $0x8] sm:$0xff]
        %v329 = vld [vmem:[%s247 + $0x10] sm:$0xff]
        %v330 = vld [vmem:[%s247 + $0x18] sm:$0xff]
        %v331 = vld [vmem:[%s247 + $0x20] sm:$0xff]
        %v332 = vld [vmem:[%s247 + $0x28] sm:$0xff]
        %v333 = vld [vmem:[%s247 + $0x30] sm:$0xff]
        %v334 = vld [vmem:[%s247 + $0x38] sm:$0xff]
        %v335 = vld [vmem:[%s247 + $0x40] sm:$0xff]
        %v336 = vld [vmem:[%s247 + $0x48] sm:$0xff]
        %v337 = vld [vmem:[%s247 + $0x50] sm:$0xff]
        %v338 = vld [vmem:[%s247 + $0x58] sm:$0xff]
        %v339 = vld [vmem:[%s247 + $0x60] sm:$0xff]
        %v340 = vld [vmem:[%s247 + $0x68] sm:$0xff]
        %v341 = vld [vmem:[%s247 + $0x70] sm:$0xff]
        %v342 = vld [vmem:[%s247 + $0x78] sm:$0xff]
        %v343 = vld [vmem:[%s247 + $0x80] sm:$0xff]
        %v344 = vld [vmem:[%s247 + $0x88] sm:$0xff]
        %v345 = vld [vmem:[%s247 + $0x90] sm:$0xff]
        %v346 = vld [vmem:[%s247 + $0x98] sm:$0xff]
        %v347 = vld [vmem:[%s247 + $0xa0] sm:$0xff]
        %v348 = vld [vmem:[%s247 + $0xa8] sm:$0xff]
        %v349 = vld [vmem:[%s247 + $0xb0] sm:$0xff]
        %v350 = vld [vmem:[%s247 + $0xb8] sm:$0xff]
        %v351 = vld [vmem:[%s247 + $0xc0] sm:$0xff]
        %v352 = vld [vmem:[%s247 + $0xc8] sm:$0xff]
        %v353 = vld [vmem:[%s247 + $0xd0] sm:$0xff]
        %v354 = vld [vmem:[%s247 + $0xd8] sm:$0xff]
        %v355 = vld [vmem:[%s247 + $0xe0] sm:$0xff]
        %v356 = vld [vmem:[%s247 + $0xe8] sm:$0xff]
        %v357 = vld [vmem:[%s247 + $0xf0] sm:$0xff]
        %v358 = vld [vmem:[%s247 + $0xf8] sm:$0xff]
        %v359 = vld [vmem:[#allocation3] sm:$0xff]
        %v360 = vld [vmem:[#allocation3 + $0x8] sm:$0xff]
        %v361 = vld [vmem:[#allocation3 + $0x10] sm:$0xff]
        %v362 = vld [vmem:[#allocation3 + $0x18] sm:$0xff]
        %v363 = vld [vmem:[#allocation3 + $0x20] sm:$0xff]
        %v364 = vld [vmem:[#allocation3 + $0x28] sm:$0xff]
        %v365 = vld [vmem:[#allocation3 + $0x30] sm:$0xff]
        %v366 = vld [vmem:[#allocation3 + $0x38] sm:$0xff]
        %v367 = vld [vmem:[#allocation3 + $0x40] sm:$0xff]
        %v368 = vld [vmem:[#allocation3 + $0x48] sm:$0xff]
        %v369 = vld [vmem:[#allocation3 + $0x50] sm:$0xff]
        %v370 = vld [vmem:[#allocation3 + $0x58] sm:$0xff]
        %v371 = vld [vmem:[#allocation3 + $0x60] sm:$0xff]
        %v372 = vld [vmem:[#allocation3 + $0x68] sm:$0xff]
        %v373 = vld [vmem:[#allocation3 + $0x70] sm:$0xff]
        %v374 = vld [vmem:[#allocation3 + $0x78] sm:$0xff]
        %375 = vmatprep.subr.mxu0 0.0
        %376 = vmatpush1.msra.mxu0 %v359
        %377 = vmatprep.subr.mxu0 0.0
        %378 = vmatpush1.msra.mxu0 %v360
        %379 = vmatprep.subr.mxu0 0.0
        %380 = vmatpush1.msra.mxu0 %v361
        %381 = vmatprep.subr.mxu0 0.0
        %382 = vmatpush1.msra.mxu0 %v362
        %383 = vmatprep.subr.mxu0 0.0
        %384 = vmatpush1.msra.mxu0 %v363
        %385 = vmatprep.subr.mxu0 0.0
        %386 = vmatpush1.msra.mxu0 %v364
        %387 = vmatprep.subr.mxu0 0.0
        %388 = vmatpush1.msra.mxu0 %v365
        %389 = vmatprep.subr.mxu0 0.0
        %390 = vmatpush1.msra.mxu0 %v366
        %391 = vmatprep.subr.mxu0 0.0
        %392 = vmatpush1.msra.mxu0 %v367
        %393 = vmatprep.subr.mxu0 0.0
        %394 = vmatpush1.msra.mxu0 %v368
        %395 = vmatprep.subr.mxu0 0.0
        %396 = vmatpush1.msra.mxu0 %v369
        %397 = vmatprep.subr.mxu0 0.0
        %398 = vmatpush1.msra.mxu0 %v370
        %399 = vmatprep.subr.mxu0 0.0
        %400 = vmatpush1.msra.mxu0 %v371
        %401 = vmatprep.subr.mxu0 0.0
        %402 = vmatpush1.msra.mxu0 %v372
        %403 = vmatprep.subr.mxu0 0.0
        %404 = vmatpush1.msra.mxu0 %v373
        %405 = vmatprep.subr.mxu0 0.0
        %406 = vmatpush1.msra.mxu0 %v374
        %407 = vmatprep.subr.mxu0 0.0
        %408 = vmatpush1.msra.mxu0 0.0
        %409 = vmatprep.subr.mxu0 0.0
        %410 = vmatpush1.msra.mxu0 0.0
        %411 = vmatprep.subr.mxu0 0.0
        %412 = vmatpush1.msra.mxu0 0.0
        %413 = vmatprep.subr.mxu0 0.0
        %414 = vmatpush1.msra.mxu0 0.0
        %415 = vmatprep.subr.mxu0 0.0
        %416 = vmatpush1.msra.mxu0 0.0
        %417 = vmatprep.subr.mxu0 0.0
        %418 = vmatpush1.msra.mxu0 0.0
        %419 = vmatprep.subr.mxu0 0.0
        %420 = vmatpush1.msra.mxu0 0.0
        %421 = vmatprep.subr.mxu0 0.0
        %422 = vmatpush1.msra.mxu0 0.0
        %423 = vmatprep.subr.mxu0 0.0
        %424 = vmatpush1.msra.mxu0 0.0
        %425 = vmatprep.subr.mxu0 0.0
        %426 = vmatpush1.msra.mxu0 0.0
        %427 = vmatprep.subr.mxu0 0.0
        %428 = vmatpush1.msra.mxu0 0.0
        %429 = vmatprep.subr.mxu0 0.0
        %430 = vmatpush1.msra.mxu0 0.0
        %431 = vmatprep.subr.mxu0 0.0
        %432 = vmatpush1.msra.mxu0 0.0
        %433 = vmatprep.subr.mxu0 0.0
        %434 = vmatpush1.msra.mxu0 0.0
        %435 = vmatprep.subr.mxu0 0.0
        %436 = vmatpush1.msra.mxu0 0.0
        %437 = vmatprep.subr.mxu0 0.0
        %438 = vmatpush1.msra.mxu0 0.0
        %439 = vmatprep.mubr.f32.mxu0 0.0
        %440 = vmatmul.mubr.f32.gmra.mrb[0].mxu0 %v327
        %v441 = vpop.f32.mrb[0].mxu0
        %v442 = vadd.f32 0.0, %v441
        %v443 = vpop.f32.mrb[0].mxu0
        %444 = vmatprep.mubr.f32.mxu0 0.0
        %445 = vmatmul.mubr.f32.gmra.mrb[0].mxu0 %v328
        %v446 = vpop.f32.mrb[0].mxu0
        %v447 = vadd.f32 0.0, %v446
        %v448 = vpop.f32.mrb[0].mxu0
        %449 = vmatprep.mubr.f32.mxu0 0.0
        %450 = vmatmul.mubr.f32.gmra.mrb[0].mxu0 %v329
        %v451 = vpop.f32.mrb[0].mxu0
        %v452 = vadd.f32 0.0, %v451
        %v453 = vpop.f32.mrb[0].mxu0
        %454 = vmatprep.mubr.f32.mxu0 0.0
        %455 = vmatmul.mubr.f32.gmra.mrb[0].mxu0 %v330
        %v456 = vpop.f32.mrb[0].mxu0
        %v457 = vadd.f32 0.0, %v456
        %v458 = vpop.f32.mrb[0].mxu0
        %459 = vmatprep.mubr.f32.mxu0 0.0
        %460 = vmatmul.mubr.f32.gmra.mrb[0].mxu0 %v331
        %v461 = vpop.f32.mrb[0].mxu0
        %v462 = vadd.f32 0.0, %v461
        %v463 = vpop.f32.mrb[0].mxu0
        %464 = vmatprep.mubr.f32.mxu0 0.0
        %465 = vmatmul.mubr.f32.gmra.mrb[0].mxu0 %v332
        %v466 = vpop.f32.mrb[0].mxu0
        %v467 = vadd.f32 0.0, %v466
        %v468 = vpop.f32.mrb[0].mxu0
        %469 = vmatprep.mubr.f32.mxu0 0.0
        %470 = vmatmul.mubr.f32.gmra.mrb[0].mxu0 %v333
        %v471 = vpop.f32.mrb[0].mxu0
        %v472 = vadd.f32 0.0, %v471
        %v473 = vpop.f32.mrb[0].mxu0
        %474 = vmatprep.mubr.f32.mxu0 0.0
        %475 = vmatmul.mubr.f32.gmra.mrb[0].mxu0 %v334
        %v476 = vpop.f32.mrb[0].mxu0
        %v477 = vadd.f32 0.0, %v476
        %v478 = vpop.f32.mrb[0].mxu0
        %479 = vmatprep.mubr.f32.mxu0 0.0
        %480 = vmatmul.mubr.f32.gmra.mrb[0].mxu0 %v335
        %v481 = vpop.f32.mrb[0].mxu0
        %v482 = vadd.f32 0.0, %v481
        %v483 = vpop.f32.mrb[0].mxu0
        %484 = vmatprep.mubr.f32.mxu0 0.0
        %485 = vmatmul.mubr.f32.gmra.mrb[0].mxu0 %v336
        %v486 = vpop.f32.mrb[0].mxu0
        %v487 = vadd.f32 0.0, %v486
        %v488 = vpop.f32.mrb[0].mxu0
        %489 = vmatprep.mubr.f32.mxu0 0.0
        %490 = vmatmul.mubr.f32.gmra.mrb[0].mxu0 %v337
        %v491 = vpop.f32.mrb[0].mxu0
        %v492 = vadd.f32 0.0, %v491
        %v493 = vpop.f32.mrb[0].mxu0
        %494 = vmatprep.mubr.f32.mxu0 0.0
        %495 = vmatmul.mubr.f32.gmra.mrb[0].mxu0 %v338
        %v496 = vpop.f32.mrb[0].mxu0
        %v497 = vadd.f32 0.0, %v496
        %v498 = vpop.f32.mrb[0].mxu0
        %499 = vmatprep.mubr.f32.mxu0 0.0
        %500 = vmatmul.mubr.f32.gmra.mrb[0].mxu0 %v339
        %v501 = vpop.f32.mrb[0].mxu0
        %v502 = vadd.f32 0.0, %v501
        %v503 = vpop.f32.mrb[0].mxu0
        %504 = vmatprep.mubr.f32.mxu0 0.0
        %505 = vmatmul.mubr.f32.gmra.mrb[0].mxu0 %v340
        %v506 = vpop.f32.mrb[0].mxu0
        %v507 = vadd.f32 0.0, %v506
        %v508 = vpop.f32.mrb[0].mxu0
        %509 = vmatprep.mubr.f32.mxu0 0.0
        %510 = vmatmul.mubr.f32.gmra.mrb[0].mxu0 %v341
        %v511 = vpop.f32.mrb[0].mxu0
        %v512 = vadd.f32 0.0, %v511
        %v513 = vpop.f32.mrb[0].mxu0
        %514 = vmatprep.mubr.f32.mxu0 0.0
        %515 = vmatmul.mubr.f32.gmra.mrb[0].mxu0 %v342
        %v516 = vpop.f32.mrb[0].mxu0
        %v517 = vadd.f32 0.0, %v516
        %v518 = vpop.f32.mrb[0].mxu0
        %519 = vmatprep.mubr.f32.mxu0 0.0
        %520 = vmatmul.mubr.f32.gmra.mrb[0].mxu0 %v343
        %v521 = vpop.f32.mrb[0].mxu0
        %v522 = vadd.f32 0.0, %v521
        %v523 = vpop.f32.mrb[0].mxu0
        %524 = vmatprep.mubr.f32.mxu0 0.0
        %525 = vmatmul.mubr.f32.gmra.mrb[0].mxu0 %v344
        %v526 = vpop.f32.mrb[0].mxu0
        %v527 = vadd.f32 0.0, %v526
        %v528 = vpop.f32.mrb[0].mxu0
        %529 = vmatprep.mubr.f32.mxu0 0.0
        %530 = vmatmul.mubr.f32.gmra.mrb[0].mxu0 %v345
        %v531 = vpop.f32.mrb[0].mxu0
        %v532 = vadd.f32 0.0, %v531
        %v533 = vpop.f32.mrb[0].mxu0
        %534 = vmatprep.mubr.f32.mxu0 0.0
        %535 = vmatmul.mubr.f32.gmra.mrb[0].mxu0 %v346
        %v536 = vpop.f32.mrb[0].mxu0
        %v537 = vadd.f32 0.0, %v536
        %v538 = vpop.f32.mrb[0].mxu0
        %539 = vmatprep.mubr.f32.mxu0 0.0
        %540 = vmatmul.mubr.f32.gmra.mrb[0].mxu0 %v347
        %v541 = vpop.f32.mrb[0].mxu0
        %v542 = vadd.f32 0.0, %v541
        %v543 = vpop.f32.mrb[0].mxu0
        %544 = vmatprep.mubr.f32.mxu0 0.0
        %545 = vmatmul.mubr.f32.gmra.mrb[0].mxu0 %v348
        %v546 = vpop.f32.mrb[0].mxu0
        %v547 = vadd.f32 0.0, %v546
        %v548 = vpop.f32.mrb[0].mxu0
        %549 = vmatprep.mubr.f32.mxu0 0.0
        %550 = vmatmul.mubr.f32.gmra.mrb[0].mxu0 %v349
        %v551 = vpop.f32.mrb[0].mxu0
        %v552 = vadd.f32 0.0, %v551
        %v553 = vpop.f32.mrb[0].mxu0
        %554 = vmatprep.mubr.f32.mxu0 0.0
        %555 = vmatmul.mubr.f32.gmra.mrb[0].mxu0 %v350
        %v556 = vpop.f32.mrb[0].mxu0
        %v557 = vadd.f32 0.0, %v556
        %v558 = vpop.f32.mrb[0].mxu0
        %559 = vmatprep.mubr.f32.mxu0 0.0
        %560 = vmatmul.mubr.f32.gmra.mrb[0].mxu0 %v351
        %v561 = vpop.f32.mrb[0].mxu0
        %v562 = vadd.f32 0.0, %v561
        %v563 = vpop.f32.mrb[0].mxu0
        %564 = vmatprep.mubr.f32.mxu0 0.0
        %565 = vmatmul.mubr.f32.gmra.mrb[0].mxu0 %v352
        %v566 = vpop.f32.mrb[0].mxu0
        %v567 = vadd.f32 0.0, %v566
        %v568 = vpop.f32.mrb[0].mxu0
        %569 = vmatprep.mubr.f32.mxu0 0.0
        %570 = vmatmul.mubr.f32.gmra.mrb[0].mxu0 %v353
        %v571 = vpop.f32.mrb[0].mxu0
        %v572 = vadd.f32 0.0, %v571
        %v573 = vpop.f32.mrb[0].mxu0
        %574 = vmatprep.mubr.f32.mxu0 0.0
        %575 = vmatmul.mubr.f32.gmra.mrb[0].mxu0 %v354
        %v576 = vpop.f32.mrb[0].mxu0
        %v577 = vadd.f32 0.0, %v576
        %v578 = vpop.f32.mrb[0].mxu0
        %579 = vmatprep.mubr.f32.mxu0 0.0
        %580 = vmatmul.mubr.f32.gmra.mrb[0].mxu0 %v355
        %v581 = vpop.f32.mrb[0].mxu0
        %v582 = vadd.f32 0.0, %v581
        %v583 = vpop.f32.mrb[0].mxu0
        %584 = vmatprep.mubr.f32.mxu0 0.0
        %585 = vmatmul.mubr.f32.gmra.mrb[0].mxu0 %v356
        %v586 = vpop.f32.mrb[0].mxu0
        %v587 = vadd.f32 0.0, %v586
        %v588 = vpop.f32.mrb[0].mxu0
        %589 = vmatprep.mubr.f32.mxu0 0.0
        %590 = vmatmul.mubr.f32.gmra.mrb[0].mxu0 %v357
        %v591 = vpop.f32.mrb[0].mxu0
        %v592 = vadd.f32 0.0, %v591
        %v593 = vpop.f32.mrb[0].mxu0
        %594 = vmatprep.mubr.f32.mxu0 0.0
        %595 = vmatmul.mubr.f32.gmra.mrb[0].mxu0 %v358
        %v596 = vpop.f32.mrb[0].mxu0
        %v597 = vadd.f32 0.0, %v596
        %v598 = vpop.f32.mrb[0].mxu0
        %599 = vdwg.mxu0
        %v600 = vadd.f32 %v295, %v442
        %v601 = vadd.f32 %v296, %v447
        %v602 = vadd.f32 %v297, %v452
        %v603 = vadd.f32 %v298, %v457
        %v604 = vadd.f32 %v299, %v462
        %v605 = vadd.f32 %v300, %v467
        %v606 = vadd.f32 %v301, %v472
        %v607 = vadd.f32 %v302, %v477
        %v608 = vadd.f32 %v303, %v482
        %v609 = vadd.f32 %v304, %v487
        %v610 = vadd.f32 %v305, %v492
        %v611 = vadd.f32 %v306, %v497
        %v612 = vadd.f32 %v307, %v502
        %v613 = vadd.f32 %v308, %v507
        %v614 = vadd.f32 %v309, %v512
        %v615 = vadd.f32 %v310, %v517
        %v616 = vadd.f32 %v311, %v522
        %v617 = vadd.f32 %v312, %v527
        %v618 = vadd.f32 %v313, %v532
        %v619 = vadd.f32 %v314, %v537
        %v620 = vadd.f32 %v315, %v542
        %v621 = vadd.f32 %v316, %v547
        %v622 = vadd.f32 %v317, %v552
        %v623 = vadd.f32 %v318, %v557
        %v624 = vadd.f32 %v319, %v562
        %v625 = vadd.f32 %v320, %v567
        %v626 = vadd.f32 %v321, %v572
        %v627 = vadd.f32 %v322, %v577
        %v628 = vadd.f32 %v323, %v582
        %v629 = vadd.f32 %v324, %v587
        %v630 = vadd.f32 %v325, %v592
        %v631 = vadd.f32 %v326, %v597
        %632 = vst [vmem:[#allocation2] sm:$0xff] %v600
        %633 = vst [vmem:[#allocation2 + $0x8] sm:$0xff] %v601
        %634 = vst [vmem:[#allocation2 + $0x10] sm:$0xff] %v602
        %635 = vst [vmem:[#allocation2 + $0x18] sm:$0xff] %v603
        %636 = vst [vmem:[#allocation2 + $0x20] sm:$0xff] %v604
        %637 = vst [vmem:[#allocation2 + $0x28] sm:$0xff] %v605
        %638 = vst [vmem:[#allocation2 + $0x30] sm:$0xff] %v606
        %639 = vst [vmem:[#allocation2 + $0x38] sm:$0xff] %v607
        %640 = vst [vmem:[#allocation2 + $0x40] sm:$0xff] %v608
        %641 = vst [vmem:[#allocation2 + $0x48] sm:$0xff] %v609
        %642 = vst [vmem:[#allocation2 + $0x50] sm:$0xff] %v610
        %643 = vst [vmem:[#allocation2 + $0x58] sm:$0xff] %v611
        %644 = vst [vmem:[#allocation2 + $0x60] sm:$0xff] %v612
        %645 = vst [vmem:[#allocation2 + $0x68] sm:$0xff] %v613
        %646 = vst [vmem:[#allocation2 + $0x70] sm:$0xff] %v614
        %647 = vst [vmem:[#allocation2 + $0x78] sm:$0xff] %v615
        %648 = vst [vmem:[#allocation2 + $0x80] sm:$0xff] %v616
        %649 = vst [vmem:[#allocation2 + $0x88] sm:$0xff] %v617
        %650 = vst [vmem:[#allocation2 + $0x90] sm:$0xff] %v618
        %651 = vst [vmem:[#allocation2 + $0x98] sm:$0xff] %v619
        %652 = vst [vmem:[#allocation2 + $0xa0] sm:$0xff] %v620
        %653 = vst [vmem:[#allocation2 + $0xa8] sm:$0xff] %v621
        %654 = vst [vmem:[#allocation2 + $0xb0] sm:$0xff] %v622
        %655 = vst [vmem:[#allocation2 + $0xb8] sm:$0xff] %v623
        %656 = vst [vmem:[#allocation2 + $0xc0] sm:$0xff] %v624
        %657 = vst [vmem:[#allocation2 + $0xc8] sm:$0xff] %v625
        %658 = vst [vmem:[#allocation2 + $0xd0] sm:$0xff] %v626
        %659 = vst [vmem:[#allocation2 + $0xd8] sm:$0xff] %v627
        %660 = vst [vmem:[#allocation2 + $0xe0] sm:$0xff] %v628
        %661 = vst [vmem:[#allocation2 + $0xe8] sm:$0xff] %v629
        %662 = vst [vmem:[#allocation2 + $0xf0] sm:$0xff] %v630
        %663 = vst [vmem:[#allocation2 + $0xf8] sm:$0xff] %v631
        // Predicated region
        $region45: #{patchgan_dis_forward.8} parent=31 // pred_check
          %p664 = pneg %p259
        $region46: #{patchgan_dis_forward.8} parent=31 // pred_check_branch
          %666 = sbr.rel (%p664) target = $region48
        $region47: #{patchgan_dis_forward.8} parent=31 // pred_region
          %v667 = vld [vmem:[#allocation2] sm:$0xff]
          %v668 = vld [vmem:[#allocation2 + $0x8] sm:$0xff]
          %v669 = vld [vmem:[#allocation2 + $0x10] sm:$0xff]
          %v670 = vld [vmem:[#allocation2 + $0x18] sm:$0xff]
          %v671 = vld [vmem:[#allocation2 + $0x20] sm:$0xff]
          %v672 = vld [vmem:[#allocation2 + $0x28] sm:$0xff]
          %v673 = vld [vmem:[#allocation2 + $0x30] sm:$0xff]
          %v674 = vld [vmem:[#allocation2 + $0x38] sm:$0xff]
          %v675 = vld [vmem:[#allocation2 + $0x40] sm:$0xff]
          %v676 = vld [vmem:[#allocation2 + $0x48] sm:$0xff]
          %v677 = vld [vmem:[#allocation2 + $0x50] sm:$0xff]
          %v678 = vld [vmem:[#allocation2 + $0x58] sm:$0xff]
          %v679 = vld [vmem:[#allocation2 + $0x60] sm:$0xff]
          %v680 = vld [vmem:[#allocation2 + $0x68] sm:$0xff]
          %v681 = vld [vmem:[#allocation2 + $0x70] sm:$0xff]
          %v682 = vld [vmem:[#allocation2 + $0x78] sm:$0xff]
          %v683 = vld [vmem:[#allocation2 + $0x80] sm:$0xff]
          %v684 = vld [vmem:[#allocation2 + $0x88] sm:$0xff]
          %v685 = vld [vmem:[#allocation2 + $0x90] sm:$0xff]
          %v686 = vld [vmem:[#allocation2 + $0x98] sm:$0xff]
          %v687 = vld [vmem:[#allocation2 + $0xa0] sm:$0xff]
          %v688 = vld [vmem:[#allocation2 + $0xa8] sm:$0xff]
          %v689 = vld [vmem:[#allocation2 + $0xb0] sm:$0xff]
          %v690 = vld [vmem:[#allocation2 + $0xb8] sm:$0xff]
          %v691 = vld [vmem:[#allocation2 + $0xc0] sm:$0xff]
          %v692 = vld [vmem:[#allocation2 + $0xc8] sm:$0xff]
          %v693 = vld [vmem:[#allocation2 + $0xd0] sm:$0xff]
          %v694 = vld [vmem:[#allocation2 + $0xd8] sm:$0xff]
          %v695 = vld [vmem:[#allocation2 + $0xe0] sm:$0xff]
          %v696 = vld [vmem:[#allocation2 + $0xe8] sm:$0xff]
          %v697 = vld [vmem:[#allocation2 + $0xf0] sm:$0xff]
          %v698 = vld [vmem:[#allocation2 + $0xf8] sm:$0xff]
          %v699 = vld [vmem:[#allocation5] sm:$0x1]
          %v701 = vlaneseq
          %v702 = vshrl.u32 %v701, 7
          %v703 = vsub.s32 0, %v702
          %v704 = vrot.slane %v699, %v703
          %v706 = vadd.f32 %v667, %v704
          %v707 = vadd.f32 %v668, %v704
          %v708 = vadd.f32 %v669, %v704
          %v709 = vadd.f32 %v670, %v704
          %v710 = vadd.f32 %v671, %v704
          %v711 = vadd.f32 %v672, %v704
          %v712 = vadd.f32 %v673, %v704
          %v713 = vadd.f32 %v674, %v704
          %v714 = vadd.f32 %v675, %v704
          %v715 = vadd.f32 %v676, %v704
          %v716 = vadd.f32 %v677, %v704
          %v717 = vadd.f32 %v678, %v704
          %v718 = vadd.f32 %v679, %v704
          %v719 = vadd.f32 %v680, %v704
          %v720 = vadd.f32 %v681, %v704
          %v721 = vadd.f32 %v682, %v704
          %v722 = vadd.f32 %v683, %v704
          %v723 = vadd.f32 %v684, %v704
          %v724 = vadd.f32 %v685, %v704
          %v725 = vadd.f32 %v686, %v704
          %v726 = vadd.f32 %v687, %v704
          %v727 = vadd.f32 %v688, %v704
          %v728 = vadd.f32 %v689, %v704
          %v729 = vadd.f32 %v690, %v704
          %v730 = vadd.f32 %v691, %v704
          %v731 = vadd.f32 %v692, %v704
          %v732 = vadd.f32 %v693, %v704
          %v733 = vadd.f32 %v694, %v704
          %v734 = vadd.f32 %v695, %v704
          %v735 = vadd.f32 %v696, %v704
          %v736 = vadd.f32 %v697, %v704
          %v737 = vadd.f32 %v698, %v704
          %vm738 = vcmp.ge.f32.partialorder %v706, 0.0
          %vm739 = vcmp.ge.f32.partialorder %v707, 0.0
          %vm740 = vcmp.ge.f32.partialorder %v708, 0.0
          %vm741 = vcmp.ge.f32.partialorder %v709, 0.0
          %vm742 = vcmp.ge.f32.partialorder %v710, 0.0
          %vm743 = vcmp.ge.f32.partialorder %v711, 0.0
          %vm744 = vcmp.ge.f32.partialorder %v712, 0.0
          %vm745 = vcmp.ge.f32.partialorder %v713, 0.0
          %vm746 = vcmp.ge.f32.partialorder %v714, 0.0
          %vm747 = vcmp.ge.f32.partialorder %v715, 0.0
          %vm748 = vcmp.ge.f32.partialorder %v716, 0.0
          %vm749 = vcmp.ge.f32.partialorder %v717, 0.0
          %vm750 = vcmp.ge.f32.partialorder %v718, 0.0
          %vm751 = vcmp.ge.f32.partialorder %v719, 0.0
          %vm752 = vcmp.ge.f32.partialorder %v720, 0.0
          %vm753 = vcmp.ge.f32.partialorder %v721, 0.0
          %vm754 = vcmp.ge.f32.partialorder %v722, 0.0
          %vm755 = vcmp.ge.f32.partialorder %v723, 0.0
          %vm756 = vcmp.ge.f32.partialorder %v724, 0.0
          %vm757 = vcmp.ge.f32.partialorder %v725, 0.0
          %vm758 = vcmp.ge.f32.partialorder %v726, 0.0
          %vm759 = vcmp.ge.f32.partialorder %v727, 0.0
          %vm760 = vcmp.ge.f32.partialorder %v728, 0.0
          %vm761 = vcmp.ge.f32.partialorder %v729, 0.0
          %vm762 = vcmp.ge.f32.partialorder %v730, 0.0
          %vm763 = vcmp.ge.f32.partialorder %v731, 0.0
          %vm764 = vcmp.ge.f32.partialorder %v732, 0.0
          %vm765 = vcmp.ge.f32.partialorder %v733, 0.0
          %vm766 = vcmp.ge.f32.partialorder %v734, 0.0
          %vm767 = vcmp.ge.f32.partialorder %v735, 0.0
          %vm768 = vcmp.ge.f32.partialorder %v736, 0.0
          %vm769 = vcmp.ge.f32.partialorder %v737, 0.0
          %v770 = vmul.f32 %v706, 0.2
          %v771 = vmul.f32 %v707, 0.2
          %v772 = vmul.f32 %v708, 0.2
          %v773 = vmul.f32 %v709, 0.2
          %v774 = vmul.f32 %v710, 0.2
          %v775 = vmul.f32 %v711, 0.2
          %v776 = vmul.f32 %v712, 0.2
          %v777 = vmul.f32 %v713, 0.2
          %v778 = vmul.f32 %v714, 0.2
          %v779 = vmul.f32 %v715, 0.2
          %v780 = vmul.f32 %v716, 0.2
          %v781 = vmul.f32 %v717, 0.2
          %v782 = vmul.f32 %v718, 0.2
          %v783 = vmul.f32 %v719, 0.2
          %v784 = vmul.f32 %v720, 0.2
          %v785 = vmul.f32 %v721, 0.2
          %v786 = vmul.f32 %v722, 0.2
          %v787 = vmul.f32 %v723, 0.2
          %v788 = vmul.f32 %v724, 0.2
          %v789 = vmul.f32 %v725, 0.2
          %v790 = vmul.f32 %v726, 0.2
          %v791 = vmul.f32 %v727, 0.2
          %v792 = vmul.f32 %v728, 0.2
          %v793 = vmul.f32 %v729, 0.2
          %v794 = vmul.f32 %v730, 0.2
          %v795 = vmul.f32 %v731, 0.2
          %v796 = vmul.f32 %v732, 0.2
          %v797 = vmul.f32 %v733, 0.2
          %v798 = vmul.f32 %v734, 0.2
          %v799 = vmul.f32 %v735, 0.2
          %v800 = vmul.f32 %v736, 0.2
          %v801 = vmul.f32 %v737, 0.2
          %v802 = vsel %vm738, %v706, %v770
          %v803 = vsel %vm739, %v707, %v771
          %v804 = vsel %vm740, %v708, %v772
          %v805 = vsel %vm741, %v709, %v773
          %v806 = vsel %vm742, %v710, %v774
          %v807 = vsel %vm743, %v711, %v775
          %v808 = vsel %vm744, %v712, %v776
          %v809 = vsel %vm745, %v713, %v777
          %v810 = vsel %vm746, %v714, %v778
          %v811 = vsel %vm747, %v715, %v779
          %v812 = vsel %vm748, %v716, %v780
          %v813 = vsel %vm749, %v717, %v781
          %v814 = vsel %vm750, %v718, %v782
          %v815 = vsel %vm751, %v719, %v783
          %v816 = vsel %vm752, %v720, %v784
          %v817 = vsel %vm753, %v721, %v785
          %v818 = vsel %vm754, %v722, %v786
          %v819 = vsel %vm755, %v723, %v787
          %v820 = vsel %vm756, %v724, %v788
          %v821 = vsel %vm757, %v725, %v789
          %v822 = vsel %vm758, %v726, %v790
          %v823 = vsel %vm759, %v727, %v791
          %v824 = vsel %vm760, %v728, %v792
          %v825 = vsel %vm761, %v729, %v793
          %v826 = vsel %vm762, %v730, %v794
          %v827 = vsel %vm763, %v731, %v795
          %v828 = vsel %vm764, %v732, %v796
          %v829 = vsel %vm765, %v733, %v797
          %v830 = vsel %vm766, %v734, %v798
          %v831 = vsel %vm767, %v735, %v799
          %v832 = vsel %vm768, %v736, %v800
          %v833 = vsel %vm769, %v737, %v801
          %834 = vst [vmem:[%s257] sm:$0xff] %v802
          %835 = vst [vmem:[%s257 + $0x8] sm:$0xff] %v803
          %836 = vst [vmem:[%s257 + $0x10] sm:$0xff] %v804
          %837 = vst [vmem:[%s257 + $0x18] sm:$0xff] %v805
          %838 = vst [vmem:[%s257 + $0x20] sm:$0xff] %v806
          %839 = vst [vmem:[%s257 + $0x28] sm:$0xff] %v807
          %840 = vst [vmem:[%s257 + $0x30] sm:$0xff] %v808
          %841 = vst [vmem:[%s257 + $0x38] sm:$0xff] %v809
          %842 = vst [vmem:[%s257 + $0x40] sm:$0xff] %v810
          %843 = vst [vmem:[%s257 + $0x48] sm:$0xff] %v811
          %844 = vst [vmem:[%s257 + $0x50] sm:$0xff] %v812
          %845 = vst [vmem:[%s257 + $0x58] sm:$0xff] %v813
          %846 = vst [vmem:[%s257 + $0x60] sm:$0xff] %v814
          %847 = vst [vmem:[%s257 + $0x68] sm:$0xff] %v815
          %848 = vst [vmem:[%s257 + $0x70] sm:$0xff] %v816
          %849 = vst [vmem:[%s257 + $0x78] sm:$0xff] %v817
          %850 = vst [vmem:[%s257 + $0x80] sm:$0xff] %v818
          %851 = vst [vmem:[%s257 + $0x88] sm:$0xff] %v819
          %852 = vst [vmem:[%s257 + $0x90] sm:$0xff] %v820
          %853 = vst [vmem:[%s257 + $0x98] sm:$0xff] %v821
          %854 = vst [vmem:[%s257 + $0xa0] sm:$0xff] %v822
          %855 = vst [vmem:[%s257 + $0xa8] sm:$0xff] %v823
          %856 = vst [vmem:[%s257 + $0xb0] sm:$0xff] %v824
          %857 = vst [vmem:[%s257 + $0xb8] sm:$0xff] %v825
          %858 = vst [vmem:[%s257 + $0xc0] sm:$0xff] %v826
          %859 = vst [vmem:[%s257 + $0xc8] sm:$0xff] %v827
          %860 = vst [vmem:[%s257 + $0xd0] sm:$0xff] %v828
          %861 = vst [vmem:[%s257 + $0xd8] sm:$0xff] %v829
          %862 = vst [vmem:[%s257 + $0xe0] sm:$0xff] %v830
          %863 = vst [vmem:[%s257 + $0xe8] sm:$0xff] %v831
          %864 = vst [vmem:[%s257 + $0xf0] sm:$0xff] %v832
          %865 = vst [vmem:[%s257 + $0xf8] sm:$0xff] %v833
        $region48: #{patchgan_dis_forward.8} parent=31 // pred_fallthru
          _
        %s866 = smul.u32 32, %s21
        %p867 = scmp.lt.s32.totalorder %s866, 63
        %s868 = scalar_select %p867, %s866, 63
        %p869 = scmp.lt.s32.totalorder %s22, 0
        %s870 = scalar_select %p869, %s22, 0
        %s871 = sadd.s32 %s870, %s868
        %s872 = smul.addr %s871, 8
        %s873 = scalar_lea.vmem %s3, %s872
        // Predicated region
        $region49: #{patchgan_dis_forward.8} parent=31 // pred_check
          %p874 = pneg %p137
        $region50: #{patchgan_dis_forward.8} parent=31 // pred_check_branch
          %876 = sbr.rel (%p874) target = $region52
        $region51: #{patchgan_dis_forward.8} parent=31 // pred_region
          %s877 = smul.u32 32, %s21
        $region52: #{patchgan_dis_forward.8} parent=31 // pred_fallthru
          _
      $region32: #{patchgan_dis_forward.8} parent=5 // pred_fallthru
        _
      %p878 = scmp.le.s32.totalorder 2, %s11
      // Predicated region
      $region53: #{patchgan_dis_forward.8} parent=5 // pred_check
        %p879 = pneg %p878
      $region54: #{patchgan_dis_forward.8} parent=5 // pred_check_branch
        %881 = sbr.rel (%p879) target = $region56
      $region55: #{patchgan_dis_forward.8} parent=5 // pred_region
        %s882 = ssub.s32 %s11, 2
        // Predicated region
        $region57: #{patchgan_dis_forward.8} parent=55 // pred_check
          %p883 = pneg %p143
        $region58: #{patchgan_dis_forward.8} parent=55 // pred_check_branch
          %885 = sbr.rel (%p883) target = $region60
        $region59: #{patchgan_dis_forward.8} parent=55 // pred_region
          %s886 = smul.u32 32, %s24
          %p887 = scmp.lt.s32.totalorder %s886, 63
          %s888 = scalar_select %p887, %s886, 63
          %p889 = scmp.lt.s32.totalorder %s25, 0
          %s890 = scalar_select %p889, %s25, 0
          %s891 = sadd.s32 %s890, %s888
          %s892 = smul.addr %s891, 8
          %s893 = scalar_lea.vmem %s3, %s892
        $region60: #{patchgan_dis_forward.8} parent=55 // pred_fallthru
          _
      $region56: #{patchgan_dis_forward.8} parent=5 // pred_fallthru
        _
    $region6: #{patchgan_dis_forward.8} parent=1 // loop_footer
      %s15 = sadd.s32 1, %s11
    $region7: #{patchgan_dis_forward.8} parent=1 // loop_footer_branch
      %10 = sbr.rel target = $region3
    $region8: #{patchgan_dis_forward.8} parent=1 // loop_exit
      _
    %894 = vsyncpa [#allocation4], 1
    %s895 = scalar_lea.sflag [#allocation4], 1
    %896 = vsyncpa %s895, 1
    %897 = vsyncpa [#allocation6], 1

// kernel: patchgan_dis_forward.10
$region0: #{patchgan_dis_forward.10}
  #allocation0 [shape = 'u32[]', space=smem, size = 0x4, offset = 0x4, fixed_abs, tag = 'smem constant byte address 0x4 - core index']
  #allocation1 [shape = 'u32[144,128]{1,0:T(1,128)}', space=vmem, size = 0x12000, scoped, tag = 'internal scratch']
  %s0 = inlined_call_operand.vmem [shape: f32[2,64,128], index: 0, kind: input, shape index: {}]
  %s1 = inlined_call_operand.vmem [shape: f32[2,64,128], index: 1, kind: output, shape index: {}]
  %s2 = sld [smem:[#allocation0]]
  $region37: #{patchgan_dis_forward.10} parent=0
    _
  %s4 = ssub.s32 1, %s2
  %s5 = scalar_select 0, %s4, %s2
  loop: start=0, step=1, limit=4
  $region2: #{patchgan_dis_forward.10} parent=0 // loop_pre_header
    _
  $region3: #{patchgan_dis_forward.10} parent=0 // loop_header
    %s7 = sphi 0, %s11
    %p8 = scmp.ge.s32.totalorder %s7, 4
    %s14 = sphi 0, %s26
    %s15 = sphi 0, %s22
    %s16 = sphi 0, %s14
    %s17 = sphi 0, %s15
    %s18 = sphi 0, %s16
    %s19 = sphi 0, %s17
    %s31 = sphi 0, %s33
    %s34 = sphi 0, %s31
    %s35 = sphi 0, %s34
    %s51 = sphi 0, %s35
    %s59 = sphi 0, %s61
    %s62 = sphi 0, %s59
    %s63 = sphi 0, %s62
    %s79 = sphi 0, %s63
  $region4: #{patchgan_dis_forward.10} parent=0 // loop_header_branch
    %10 = sbr.rel (%p8) target = $region8
  $region5: #{patchgan_dis_forward.10} parent=0 // loop_body
    %s12 = ssub.s32 %s7, 1
    %s13 = ssub.s32 %s7, 2
    %s20 = sadd.s32 1, %s15
    %p21 = scmp.ge.s32.totalorder %s20, 1
    %s22 = scalar_select %p21, 0, %s20
    %s23 = sadd.s32 1, %s14
    %s24 = scalar_select %p21, %s23, %s14
    %p25 = scmp.ge.s32.totalorder %s24, 2
    %s26 = scalar_select %p25, 0, %s24
    %s27 = ssub.s32 %s14, %s26
    %s28 = ssub.s32 %s15, %s22
    %s29 = sor.u32 %s27, %s28
    %p30 = scmp.eq.s32.totalorder %s29, 0
    %s32 = sadd.s32 %s31, 1
    %s33 = scalar_select %p30, %s31, %s32
    %p36 = pneg %p30
    %p37 = scmp.eq.s32.totalorder %s7, 1
    %p38 = por %p36, %p37
    %p39 = scmp.ne.s32.totalorder %s31, %s34
    %p40 = scmp.eq.s32.totalorder %s7, 0
    %p41 = por %p39, %p40
    %p42 = scmp.ne.s32.totalorder %s31, %s34
    %p43 = scmp.eq.s32.totalorder %s12, 1
    %p44 = por %p42, %p43
    %p45 = scmp.ne.s32.totalorder %s34, %s35
    %p46 = scmp.eq.s32.totalorder %s12, 0
    %p47 = por %p45, %p46
    %p48 = scmp.ne.s32.totalorder %s34, %s35
    %p49 = scmp.eq.s32.totalorder %s13, 1
    %p50 = por %p48, %p49
    %p52 = scmp.ne.s32.totalorder %s35, %s51
    %p53 = scmp.eq.s32.totalorder %s13, 0
    %p54 = por %p52, %p53
    %s55 = ssub.s32 %s14, %s26
    %s56 = ssub.s32 %s15, %s22
    %s57 = sor.u32 %s55, %s56
    %p58 = scmp.eq.s32.totalorder %s57, 0
    %s60 = sadd.s32 %s59, 1
    %s61 = scalar_select %p58, %s59, %s60
    %p64 = pneg %p58
    %p65 = scmp.eq.s32.totalorder %s7, 1
    %p66 = por %p64, %p65
    %p67 = scmp.ne.s32.totalorder %s59, %s62
    %p68 = scmp.eq.s32.totalorder %s7, 0
    %p69 = por %p67, %p68
    %p70 = scmp.ne.s32.totalorder %s59, %s62
    %p71 = scmp.eq.s32.totalorder %s12, 1
    %p72 = por %p70, %p71
    %p73 = scmp.ne.s32.totalorder %s62, %s63
    %p74 = scmp.eq.s32.totalorder %s12, 0
    %p75 = por %p73, %p74
    %p76 = scmp.ne.s32.totalorder %s62, %s63
    %p77 = scmp.eq.s32.totalorder %s13, 1
    %p78 = por %p76, %p77
    %p80 = scmp.ne.s32.totalorder %s63, %s79
    %p81 = scmp.eq.s32.totalorder %s13, 0
    %p82 = por %p80, %p81
    %p83 = scmp.le.s32.totalorder 1, %s7
    %p84 = scmp.lt.s32.totalorder %s7, 3
    %p85 = pnand %p83, %p84
    %p86 = pneg %p85
    // Predicated region
    $region9: #{patchgan_dis_forward.10} parent=5 // pred_check
      _
    $region10: #{patchgan_dis_forward.10} parent=5 // pred_check_branch
      %88 = sbr.rel (%p85) target = $region12
    $region11: #{patchgan_dis_forward.10} parent=5 // pred_region
      %s89 = ssub.s32 %s7, 1
    $region12: #{patchgan_dis_forward.10} parent=5 // pred_fallthru
      _
    %p90 = scmp.lt.s32.totalorder %s7, 2
    // Predicated region
    $region13: #{patchgan_dis_forward.10} parent=5 // pred_check
      %p91 = pneg %p90
    $region14: #{patchgan_dis_forward.10} parent=5 // pred_check_branch
      %93 = sbr.rel (%p91) target = $region16
    $region15: #{patchgan_dis_forward.10} parent=5 // pred_region
      // Predicated region
      $region17: #{patchgan_dis_forward.10} parent=15 // pred_check
        %p94 = pneg %p41
      $region18: #{patchgan_dis_forward.10} parent=15 // pred_check_branch
        %96 = sbr.rel (%p94) target = $region20
      $region19: #{patchgan_dis_forward.10} parent=15 // pred_region
        %p97 = scmp.lt.s32.totalorder %s14, 1
        %s98 = scalar_select %p97, %s14, 1
        %p99 = scmp.lt.s32.totalorder %s15, 0
        %s100 = scalar_select %p99, %s15, 0
        %s101 = smul.addr %s98, 8
        %s102 = sadd.s32 %s100, %s101
        %s103 = smul.addr %s102, 8
        %s104 = scalar_lea.vmem %s0, %s103
      $region20: #{patchgan_dis_forward.10} parent=15 // pred_fallthru
        _
    $region16: #{patchgan_dis_forward.10} parent=5 // pred_fallthru
      _
    %p105 = scmp.le.s32.totalorder 1, %s7
    %p106 = scmp.lt.s32.totalorder %s7, 3
    %p107 = pnand %p105, %p106
    %p108 = pneg %p107
    // Predicated region
    $region21: #{patchgan_dis_forward.10} parent=5 // pred_check
      _
    $region22: #{patchgan_dis_forward.10} parent=5 // pred_check_branch
      %110 = sbr.rel (%p107) target = $region24
    $region23: #{patchgan_dis_forward.10} parent=5 // pred_region
      %s111 = ssub.s32 %s7, 1
      %p112 = scmp.lt.s32.totalorder %s16, 1
      %s113 = scalar_select %p112, %s16, 1
      %p114 = scmp.lt.s32.totalorder %s17, 0
      %s115 = scalar_select %p114, %s17, 0
      %s116 = smul.addr %s113, 8
      %s117 = sadd.s32 %s115, %s116
      %s118 = smul.addr %s117, 8
      %s119 = scalar_lea.vmem %s0, %s118
      %p120 = pneg %p47
      %p121 = pneg %p44
      %p122 = pneg %p75
      %p123 = pneg %p72
      %p124 = scmp.lt.s32.totalorder %s16, 1
      %s125 = scalar_select %p124, %s16, 1
      %p126 = scmp.lt.s32.totalorder %s17, 0
      %s127 = scalar_select %p126, %s17, 0
      %s128 = smul.addr %s125, 8
      %s129 = sadd.s32 %s127, %s128
      %s130 = smul.addr %s129, 8
      %s131 = scalar_lea.vmem %s1, %s130
      %p132 = scmp.lt.s32.totalorder %s16, 1
      %s133 = scalar_select %p132, %s16, 1
      %p134 = scmp.lt.s32.totalorder %s17, 0
      %s135 = scalar_select %p134, %s17, 0
      %s136 = smul.addr %s133, 8
      %s137 = sadd.s32 %s135, %s136
      %s138 = smul.addr %s137, 8
      %s139 = scalar_lea.vmem %s0, %s138
      %p140 = scmp.lt.s32.totalorder %s16, 1
      %s141 = scalar_select %p140, %s16, 1
      %p142 = scmp.lt.s32.totalorder %s17, 0
      %s143 = scalar_select %p142, %s17, 0
      %s144 = smul.addr %s141, 8
      %s145 = sadd.s32 %s143, %s144
      %s146 = smul.addr %s145, 8
      %s147 = scalar_lea.vmem %s1, %s146
      %v148 = vld [vmem:[%s139] sm:$0xff]
      %v149 = vld [vmem:[%s139 + $0x8] sm:$0xff]
      %v150 = vld [vmem:[%s139 + $0x10] sm:$0xff]
      %v151 = vld [vmem:[%s139 + $0x18] sm:$0xff]
      %v152 = vld [vmem:[%s139 + $0x20] sm:$0xff]
      %v153 = vld [vmem:[%s139 + $0x28] sm:$0xff]
      %v154 = vld [vmem:[%s139 + $0x30] sm:$0xff]
      %v155 = vld [vmem:[%s139 + $0x38] sm:$0xff]
      %v156 = vadd.f32 %v148, %v149
      %v157 = vadd.f32 %v156, %v150
      %v158 = vadd.f32 %v157, %v151
      %v159 = vadd.f32 %v158, %v152
      %v160 = vadd.f32 %v159, %v153
      %v161 = vadd.f32 %v160, %v154
      %v162 = vadd.f32 %v161, %v155
      %v163 = vrot.slane %v162, 4
      %v164 = vadd.f32 %v162, %v163
      %v165 = vrot.slane %v164, 2
      %v166 = vadd.f32 %v164, %v165
      %v167 = vrot.slane %v166, 1
      %v168 = vadd.f32 %v166, %v167
      %v169 = vrcp.pop 64.0
      %v170 = vmul.f32 %v168, %v169
      %v171 = vsub.f32 %v148, %v170
      %v172 = vsub.f32 %v149, %v170
      %v173 = vsub.f32 %v150, %v170
      %v174 = vsub.f32 %v151, %v170
      %v175 = vsub.f32 %v152, %v170
      %v176 = vsub.f32 %v153, %v170
      %v177 = vsub.f32 %v154, %v170
      %v178 = vsub.f32 %v155, %v170
      %v179 = vmul.f32 %v171, %v171
      %v180 = vmul.f32 %v172, %v172
      %v181 = vmul.f32 %v173, %v173
      %v182 = vmul.f32 %v174, %v174
      %v183 = vmul.f32 %v175, %v175
      %v184 = vmul.f32 %v176, %v176
      %v185 = vmul.f32 %v177, %v177
      %v186 = vmul.f32 %v178, %v178
      %v187 = vadd.f32 %v179, %v180
      %v188 = vadd.f32 %v187, %v181
      %v189 = vadd.f32 %v188, %v182
      %v190 = vadd.f32 %v189, %v183
      %v191 = vadd.f32 %v190, %v184
      %v192 = vadd.f32 %v191, %v185
      %v193 = vadd.f32 %v192, %v186
      %v194 = vrot.slane %v193, 4
      %v195 = vadd.f32 %v193, %v194
      %v196 = vrot.slane %v195, 2
      %v197 = vadd.f32 %v195, %v196
      %v198 = vrot.slane %v197, 1
      %v199 = vadd.f32 %v197, %v198
      %v200 = vmul.f32 %v199, %v169
      %v201 = vadd.f32 %v200, 1e-05
      %v202 = vrsqrt.pop %v201
      %v203 = vmul.f32 %v171, %v202
      %v204 = vmul.f32 %v172, %v202
      %v205 = vmul.f32 %v173, %v202
      %v206 = vmul.f32 %v174, %v202
      %v207 = vmul.f32 %v175, %v202
      %v208 = vmul.f32 %v176, %v202
      %v209 = vmul.f32 %v177, %v202
      %v210 = vmul.f32 %v178, %v202
      %vm211 = vcmp.ge.f32.partialorder %v203, 0.0
      %vm212 = vcmp.ge.f32.partialorder %v204, 0.0
      %vm213 = vcmp.ge.f32.partialorder %v205, 0.0
      %vm214 = vcmp.ge.f32.partialorder %v206, 0.0
      %vm215 = vcmp.ge.f32.partialorder %v207, 0.0
      %vm216 = vcmp.ge.f32.partialorder %v208, 0.0
      %vm217 = vcmp.ge.f32.partialorder %v209, 0.0
      %vm218 = vcmp.ge.f32.partialorder %v210, 0.0
      %v219 = vmul.f32 %v203, 0.2
      %v220 = vmul.f32 %v204, 0.2
      %v221 = vmul.f32 %v205, 0.2
      %v222 = vmul.f32 %v206, 0.2
      %v223 = vmul.f32 %v207, 0.2
      %v224 = vmul.f32 %v208, 0.2
      %v225 = vmul.f32 %v209, 0.2
      %v226 = vmul.f32 %v210, 0.2
      %v227 = vsel %vm211, %v203, %v219
      %v228 = vsel %vm212, %v204, %v220
      %v229 = vsel %vm213, %v205, %v221
      %v230 = vsel %vm214, %v206, %v222
      %v231 = vsel %vm215, %v207, %v223
      %v232 = vsel %vm216, %v208, %v224
      %v233 = vsel %vm217, %v209, %v225
      %v234 = vsel %vm218, %v210, %v226
      %235 = vst [vmem:[%s147] sm:$0xff] %v227
      %236 = vst [vmem:[%s147 + $0x8] sm:$0xff] %v228
      %237 = vst [vmem:[%s147 + $0x10] sm:$0xff] %v229
      %238 = vst [vmem:[%s147 + $0x18] sm:$0xff] %v230
      %239 = vst [vmem:[%s147 + $0x20] sm:$0xff] %v231
      %240 = vst [vmem:[%s147 + $0x28] sm:$0xff] %v232
      %241 = vst [vmem:[%s147 + $0x30] sm:$0xff] %v233
      %242 = vst [vmem:[%s147 + $0x38] sm:$0xff] %v234
      %p243 = scmp.lt.s32.totalorder %s16, 1
      %s244 = scalar_select %p243, %s16, 1
      %p245 = scmp.lt.s32.totalorder %s17, 0
      %s246 = scalar_select %p245, %s17, 0
      %s247 = smul.addr %s244, 8
      %s248 = sadd.s32 %s246, %s247
      %s249 = smul.addr %s248, 8
      %s250 = scalar_lea.vmem %s1, %s249
      // Predicated region
      $region25: #{patchgan_dis_forward.10} parent=23 // pred_check
        %p251 = pneg %p72
      $region26: #{patchgan_dis_forward.10} parent=23 // pred_check_branch
        %253 = sbr.rel (%p251) target = $region28
      $region27: #{patchgan_dis_forward.10} parent=23 // pred_region
        _
      $region28: #{patchgan_dis_forward.10} parent=23 // pred_fallthru
        _
    $region24: #{patchgan_dis_forward.10} parent=5 // pred_fallthru
      _
    %p254 = scmp.le.s32.totalorder 2, %s7
    // Predicated region
    $region29: #{patchgan_dis_forward.10} parent=5 // pred_check
      %p255 = pneg %p254
    $region30: #{patchgan_dis_forward.10} parent=5 // pred_check_branch
      %257 = sbr.rel (%p255) target = $region32
    $region31: #{patchgan_dis_forward.10} parent=5 // pred_region
      %s258 = ssub.s32 %s7, 2
      // Predicated region
      $region33: #{patchgan_dis_forward.10} parent=31 // pred_check
        %p259 = pneg %p78
      $region34: #{patchgan_dis_forward.10} parent=31 // pred_check_branch
        %261 = sbr.rel (%p259) target = $region36
      $region35: #{patchgan_dis_forward.10} parent=31 // pred_region
        %p262 = scmp.lt.s32.totalorder %s18, 1
        %s263 = scalar_select %p262, %s18, 1
        %p264 = scmp.lt.s32.totalorder %s19, 0
        %s265 = scalar_select %p264, %s19, 0
        %s266 = smul.addr %s263, 8
        %s267 = sadd.s32 %s265, %s266
        %s268 = smul.addr %s267, 8
        %s269 = scalar_lea.vmem %s1, %s268
      $region36: #{patchgan_dis_forward.10} parent=31 // pred_fallthru
        _
    $region32: #{patchgan_dis_forward.10} parent=5 // pred_fallthru
      _
  $region6: #{patchgan_dis_forward.10} parent=0 // loop_footer
    %s11 = sadd.s32 1, %s7
  $region7: #{patchgan_dis_forward.10} parent=0 // loop_footer_branch
    %6 = sbr.rel target = $region3
  $region8: #{patchgan_dis_forward.10} parent=0 // loop_exit
    _

// kernel: patchgan_dis_forward.9
$region0: #{patchgan_dis_forward.9}
  #allocation0 [shape = 'u32[]', space=smem, size = 0x4, offset = 0x4, fixed_abs, tag = 'smem constant byte address 0x4 - core index']
  #allocation1 [shape = 'u32[144,128]{1,0:T(1,128)}', space=vmem, size = 0x12000, scoped, tag = 'internal scratch']
  #allocation2 [shape = 'f32[128,128]{1,0:T(8,128)}', space=vmem, size = 0x10000, scoped, tag = 'scratch operand']
  %s0 = inlined_call_operand.vmem [shape: f32[128,1024], index: 0, kind: input, shape index: {}]
  %s1 = inlined_call_operand.vmem [shape: f32[1024,128], index: 1, kind: input, shape index: {}]
  %s2 = inlined_call_operand.vmem [shape: f32[1,128], index: 2, kind: input, shape index: {}]
  %s3 = inlined_call_operand.vmem [shape: f32[128,128], index: 3, kind: output, shape index: {}]
  %s4 = sld [smem:[#allocation0]]
  $region76: #{patchgan_dis_forward.9} parent=0
    _
  %s6 = ssub.s32 1, %s4
  %s7 = scalar_select 0, %s6, %s4
  $region1: #{patchgan_dis_forward.9} parent=0
    #allocation3 [shape = 'u8[524288]{0}', space=vmem, size = 0x80000, scoped, tag = 'input window, operand 0']
    loop: start=0, step=1, limit=4
    $region2: #{patchgan_dis_forward.9} parent=1 // loop_pre_header
      _
    $region3: #{patchgan_dis_forward.9} parent=1 // loop_header
      %s9 = sphi 0, %s13
      %p10 = scmp.ge.s32.totalorder %s9, 4
      %s16 = sphi 0, %s35
      %s17 = sphi 0, %s31
      %s18 = sphi 0, %s27
      %s19 = sphi 0, %s16
      %s20 = sphi 0, %s17
      %s21 = sphi 0, %s18
      %s22 = sphi 0, %s19
      %s23 = sphi 0, %s20
      %s24 = sphi 0, %s21
      %s40 = sphi 0, %s42
      %s43 = sphi 0, %s40
      %s44 = sphi 0, %s43
      %s60 = sphi 0, %s44
      %s68 = sphi 0, %s70
      %s71 = sphi 0, %s68
      %s72 = sphi 0, %s71
      %s88 = sphi 0, %s72
      %s94 = sphi 0, %s96
      %s97 = sphi 0, %s94
      %s98 = sphi 0, %s97
      %s114 = sphi 0, %s98
      %s122 = sphi 0, %s124
      %s125 = sphi 0, %s122
      %s126 = sphi 0, %s125
      %s142 = sphi 0, %s126
    $region4: #{patchgan_dis_forward.9} parent=1 // loop_header_branch
      %12 = sbr.rel (%p10) target = $region8
    $region5: #{patchgan_dis_forward.9} parent=1 // loop_body
      %s14 = ssub.s32 %s9, 1
      %s15 = ssub.s32 %s9, 2
      %s25 = sadd.s32 1, %s18
      %p26 = scmp.ge.s32.totalorder %s25, 2
      %s27 = scalar_select %p26, 0, %s25
      %s28 = sadd.s32 1, %s17
      %s29 = scalar_select %p26, %s28, %s17
      %p30 = scmp.ge.s32.totalorder %s29, 1
      %s31 = scalar_select %p30, 0, %s29
      %s32 = sadd.s32 1, %s16
      %s33 = scalar_select %p30, %s32, %s16
      %p34 = scmp.ge.s32.totalorder %s33, 1
      %s35 = scalar_select %p34, 0, %s33
      %s36 = ssub.s32 %s16, %s35
      %s37 = ssub.s32 %s18, %s27
      %s38 = sor.u32 %s36, %s37
      %p39 = scmp.eq.s32.totalorder %s38, 0
      %s41 = sadd.s32 %s40, 1
      %s42 = scalar_select %p39, %s40, %s41
      %p45 = pneg %p39
      %p46 = scmp.eq.s32.totalorder %s9, 1
      %p47 = por %p45, %p46
      %p48 = scmp.ne.s32.totalorder %s40, %s43
      %p49 = scmp.eq.s32.totalorder %s9, 0
      %p50 = por %p48, %p49
      %p51 = scmp.ne.s32.totalorder %s40, %s43
      %p52 = scmp.eq.s32.totalorder %s14, 1
      %p53 = por %p51, %p52
      %p54 = scmp.ne.s32.totalorder %s43, %s44
      %p55 = scmp.eq.s32.totalorder %s14, 0
      %p56 = por %p54, %p55
      %p57 = scmp.ne.s32.totalorder %s43, %s44
      %p58 = scmp.eq.s32.totalorder %s15, 1
      %p59 = por %p57, %p58
      %p61 = scmp.ne.s32.totalorder %s44, %s60
      %p62 = scmp.eq.s32.totalorder %s15, 0
      %p63 = por %p61, %p62
      %s64 = ssub.s32 %s18, %s27
      %s65 = ssub.s32 %s17, %s31
      %s66 = sor.u32 %s64, %s65
      %p67 = scmp.eq.s32.totalorder %s66, 0
      %s69 = sadd.s32 %s68, 1
      %s70 = scalar_select %p67, %s68, %s69
      %p73 = pneg %p67
      %p74 = scmp.eq.s32.totalorder %s9, 1
      %p75 = por %p73, %p74
      %p76 = scmp.ne.s32.totalorder %s68, %s71
      %p77 = scmp.eq.s32.totalorder %s9, 0
      %p78 = por %p76, %p77
      %p79 = scmp.ne.s32.totalorder %s68, %s71
      %p80 = scmp.eq.s32.totalorder %s14, 1
      %p81 = por %p79, %p80
      %p82 = scmp.ne.s32.totalorder %s71, %s72
      %p83 = scmp.eq.s32.totalorder %s14, 0
      %p84 = por %p82, %p83
      %p85 = scmp.ne.s32.totalorder %s71, %s72
      %p86 = scmp.eq.s32.totalorder %s15, 1
      %p87 = por %p85, %p86
      %p89 = scmp.ne.s32.totalorder %s72, %s88
      %p90 = scmp.eq.s32.totalorder %s15, 0
      %p91 = por %p89, %p90
      %s92 = ssub.s32 %s17, %s31
      %p93 = scmp.eq.s32.totalorder %s92, 0
      %s95 = sadd.s32 %s94, 1
      %s96 = scalar_select %p93, %s94, %s95
      %p99 = pneg %p93
      %p100 = scmp.eq.s32.totalorder %s9, 1
      %p101 = por %p99, %p100
      %p102 = scmp.ne.s32.totalorder %s94, %s97
      %p103 = scmp.eq.s32.totalorder %s9, 0
      %p104 = por %p102, %p103
      %p105 = scmp.ne.s32.totalorder %s94, %s97
      %p106 = scmp.eq.s32.totalorder %s14, 1
      %p107 = por %p105, %p106
      %p108 = scmp.ne.s32.totalorder %s97, %s98
      %p109 = scmp.eq.s32.totalorder %s14, 0
      %p110 = por %p108, %p109
      %p111 = scmp.ne.s32.totalorder %s97, %s98
      %p112 = scmp.eq.s32.totalorder %s15, 1
      %p113 = por %p111, %p112
      %p115 = scmp.ne.s32.totalorder %s98, %s114
      %p116 = scmp.eq.s32.totalorder %s15, 0
      %p117 = por %p115, %p116
      %s118 = ssub.s32 %s16, %s35
      %s119 = ssub.s32 %s17, %s31
      %s120 = sor.u32 %s118, %s119
      %p121 = scmp.eq.s32.totalorder %s120, 0
      %s123 = sadd.s32 %s122, 1
      %s124 = scalar_select %p121, %s122, %s123
      %p127 = pneg %p121
      %p128 = scmp.eq.s32.totalorder %s9, 1
      %p129 = por %p127, %p128
      %p130 = scmp.ne.s32.totalorder %s122, %s125
      %p131 = scmp.eq.s32.totalorder %s9, 0
      %p132 = por %p130, %p131
      %p133 = scmp.ne.s32.totalorder %s122, %s125
      %p134 = scmp.eq.s32.totalorder %s14, 1
      %p135 = por %p133, %p134
      %p136 = scmp.ne.s32.totalorder %s125, %s126
      %p137 = scmp.eq.s32.totalorder %s14, 0
      %p138 = por %p136, %p137
      %p139 = scmp.ne.s32.totalorder %s125, %s126
      %p140 = scmp.eq.s32.totalorder %s15, 1
      %p141 = por %p139, %p140
      %p143 = scmp.ne.s32.totalorder %s126, %s142
      %p144 = scmp.eq.s32.totalorder %s15, 0
      %p145 = por %p143, %p144
      %p146 = scmp.le.s32.totalorder 1, %s9
      %p147 = scmp.lt.s32.totalorder %s9, 3
      %p148 = pnand %p146, %p147
      %p149 = pneg %p148
      // Predicated region
      $region9: #{patchgan_dis_forward.9} parent=5 // pred_check
        _
      $region10: #{patchgan_dis_forward.9} parent=5 // pred_check_branch
        %151 = sbr.rel (%p148) target = $region12
      $region11: #{patchgan_dis_forward.9} parent=5 // pred_region
        %s152 = ssub.s32 %s9, 1
        // Predicated region
        $region13: #{patchgan_dis_forward.9} parent=11 // pred_check
          %p153 = pneg %p110
        $region14: #{patchgan_dis_forward.9} parent=11 // pred_check_branch
          %155 = sbr.rel (%p153) target = $region16
        $region15: #{patchgan_dis_forward.9} parent=11 // pred_region
          %p156 = scmp.lt.s32.totalorder %s20, 0
          %s157 = scalar_select %p156, %s20, 0
          %s158 = scalar_lea.vmem %s2, %s157
        $region16: #{patchgan_dis_forward.9} parent=11 // pred_fallthru
          _
      $region12: #{patchgan_dis_forward.9} parent=5 // pred_fallthru
        _
      %p159 = scmp.lt.s32.totalorder %s9, 2
      // Predicated region
      $region17: #{patchgan_dis_forward.9} parent=5 // pred_check
        %p160 = pneg %p159
      $region18: #{patchgan_dis_forward.9} parent=5 // pred_check_branch
        %162 = sbr.rel (%p160) target = $region20
      $region19: #{patchgan_dis_forward.9} parent=5 // pred_region
        // Predicated region
        $region21: #{patchgan_dis_forward.9} parent=19 // pred_check
          %p163 = pneg %p50
        $region22: #{patchgan_dis_forward.9} parent=19 // pred_check_branch
          %165 = sbr.rel (%p163) target = $region24
        $region23: #{patchgan_dis_forward.9} parent=19 // pred_region
          %s166 = sand.u32 %s40, 1
          %s167 = sand.u32 %s40, 1
          %s168 = smul.addr %s167, 512
          %s169 = scalar_lea.vmem [#allocation3], %s168
          %s170 = smul.u32 16, %s16
          %s171 = smul.u32 4, %s18
          %s172 = smul.addr %s170, 8
          %s173 = sadd.s32 %s171, %s172
          %s174 = smul.addr %s173, 8
          %s175 = scalar_lea.vmem %s0, %s174
          // Predicated region
          $region25: #{patchgan_dis_forward.9} parent=23 // pred_check
            _
          $region26: #{patchgan_dis_forward.9} parent=23 // pred_check_branch
            %177 = sbr.rel (0) target = $region28
          $region27: #{patchgan_dis_forward.9} parent=23 // pred_region
            // Predicated region
            $region29: #{patchgan_dis_forward.9} parent=27 // pred_check
              _
            $region30: #{patchgan_dis_forward.9} parent=27 // pred_check_branch
              %179 = sbr.rel (0) target = $region32
            $region31: #{patchgan_dis_forward.9} parent=27 // pred_region
              loop: start=0, step=1, limit=1
              $region33: #{patchgan_dis_forward.9} parent=31 // loop_pre_header
                _
              $region34: #{patchgan_dis_forward.9} parent=31 // loop_header
                %s181 = sphi 0, %s185
                %p182 = scmp.ge.s32.totalorder %s181, 1
                %s186 = sphi %s175, %s175
                %s187 = sphi %s169, %s169
              $region35: #{patchgan_dis_forward.9} parent=31 // loop_header_branch
                %184 = sbr.rel (%p182) target = $region39
              $region36: #{patchgan_dis_forward.9} parent=31 // loop_body
                %v188 = vld [vmem:[%s186] sm:$0xff]
                %189 = vst [vmem:[%s187] sm:$0xff] %v188
                %v190 = vld [vmem:[%s186 + $0x8] sm:$0xff]
                %191 = vst [vmem:[%s187 + $0x8] sm:$0xff] %v190
                %v192 = vld [vmem:[%s186 + $0x10] sm:$0xff]
                %193 = vst [vmem:[%s187 + $0x10] sm:$0xff] %v192
                %v194 = vld [vmem:[%s186 + $0x18] sm:$0xff]
                %195 = vst [vmem:[%s187 + $0x18] sm:$0xff] %v194
                %v196 = vld [vmem:[%s186 + $0x40] sm:$0xff]
                %197 = vst [vmem:[%s187 + $0x20] sm:$0xff] %v196
                %v198 = vld [vmem:[%s186 + $0x48] sm:$0xff]
                %199 = vst [vmem:[%s187 + $0x28] sm:$0xff] %v198
                %v200 = vld [vmem:[%s186 + $0x50] sm:$0xff]
                %201 = vst [vmem:[%s187 + $0x30] sm:$0xff] %v200
                %v202 = vld [vmem:[%s186 + $0x58] sm:$0xff]
                %203 = vst [vmem:[%s187 + $0x38] sm:$0xff] %v202
                %v204 = vld [vmem:[%s186 + $0x80] sm:$0xff]
                %205 = vst [vmem:[%s187 + $0x40] sm:$0xff] %v204
                %v206 = vld [vmem:[%s186 + $0x88] sm:$0xff]
                %207 = vst [vmem:[%s187 + $0x48] sm:$0xff] %v206
                %v208 = vld [vmem:[%s186 + $0x90] sm:$0xff]
                %209 = vst [vmem:[%s187 + $0x50] sm:$0xff] %v208
                %v210 = vld [vmem:[%s186 + $0x98] sm:$0xff]
                %211 = vst [vmem:[%s187 + $0x58] sm:$0xff] %v210
                %v212 = vld [vmem:[%s186 + $0xc0] sm:$0xff]
                %213 = vst [vmem:[%s187 + $0x60] sm:$0xff] %v212
                %v214 = vld [vmem:[%s186 + $0xc8] sm:$0xff]
                %215 = vst [vmem:[%s187 + $0x68] sm:$0xff] %v214
                %v216 = vld [vmem:[%s186 + $0xd0] sm:$0xff]
                %217 = vst [vmem:[%s187 + $0x70] sm:$0xff] %v216
                %v218 = vld [vmem:[%s186 + $0xd8] sm:$0xff]
                %219 = vst [vmem:[%s187 + $0x78] sm:$0xff] %v218
                %v220 = vld [vmem:[%s186 + $0x100] sm:$0xff]
                %221 = vst [vmem:[%s187 + $0x80] sm:$0xff] %v220
                %v222 = vld [vmem:[%s186 + $0x108] sm:$0xff]
                %223 = vst [vmem:[%s187 + $0x88] sm:$0xff] %v222
                %v224 = vld [vmem:[%s186 + $0x110] sm:$0xff]
                %225 = vst [vmem:[%s187 + $0x90] sm:$0xff] %v224
                %v226 = vld [vmem:[%s186 + $0x118] sm:$0xff]
                %227 = vst [vmem:[%s187 + $0x98] sm:$0xff] %v226
                %v228 = vld [vmem:[%s186 + $0x140] sm:$0xff]
                %229 = vst [vmem:[%s187 + $0xa0] sm:$0xff] %v228
                %v230 = vld [vmem:[%s186 + $0x148] sm:$0xff]
                %231 = vst [vmem:[%s187 + $0xa8] sm:$0xff] %v230
                %v232 = vld [vmem:[%s186 + $0x150] sm:$0xff]
                %233 = vst [vmem:[%s187 + $0xb0] sm:$0xff] %v232
                %v234 = vld [vmem:[%s186 + $0x158] sm:$0xff]
                %235 = vst [vmem:[%s187 + $0xb8] sm:$0xff] %v234
                %v236 = vld [vmem:[%s186 + $0x180] sm:$0xff]
                %237 = vst [vmem:[%s187 + $0xc0] sm:$0xff] %v236
                %v238 = vld [vmem:[%s186 + $0x188] sm:$0xff]
                %239 = vst [vmem:[%s187 + $0xc8] sm:$0xff] %v238
                %v240 = vld [vmem:[%s186 + $0x190] sm:$0xff]
                %241 = vst [vmem:[%s187 + $0xd0] sm:$0xff] %v240
                %v242 = vld [vmem:[%s186 + $0x198] sm:$0xff]
                %243 = vst [vmem:[%s187 + $0xd8] sm:$0xff] %v242
                %v244 = vld [vmem:[%s186 + $0x1c0] sm:$0xff]
                %245 = vst [vmem:[%s187 + $0xe0] sm:$0xff] %v244
                %v246 = vld [vmem:[%s186 + $0x1c8] sm:$0xff]
                %247 = vst [vmem:[%s187 + $0xe8] sm:$0xff] %v246
                %v248 = vld [vmem:[%s186 + $0x1d0] sm:$0xff]
                %249 = vst [vmem:[%s187 + $0xf0] sm:$0xff] %v248
                %v250 = vld [vmem:[%s186 + $0x1d8] sm:$0xff]
                %251 = vst [vmem:[%s187 + $0xf8] sm:$0xff] %v250
                %v252 = vld [vmem:[%s186 + $0x200] sm:$0xff]
                %253 = vst [vmem:[%s187 + $0x100] sm:$0xff] %v252
                %v254 = vld [vmem:[%s186 + $0x208] sm:$0xff]
                %255 = vst [vmem:[%s187 + $0x108] sm:$0xff] %v254
                %v256 = vld [vmem:[%s186 + $0x210] sm:$0xff]
                %257 = vst [vmem:[%s187 + $0x110] sm:$0xff] %v256
                %v258 = vld [vmem:[%s186 + $0x218] sm:$0xff]
                %259 = vst [vmem:[%s187 + $0x118] sm:$0xff] %v258
                %v260 = vld [vmem:[%s186 + $0x240] sm:$0xff]
                %261 = vst [vmem:[%s187 + $0x120] sm:$0xff] %v260
                %v262 = vld [vmem:[%s186 + $0x248] sm:$0xff]
                %263 = vst [vmem:[%s187 + $0x128] sm:$0xff] %v262
                %v264 = vld [vmem:[%s186 + $0x250] sm:$0xff]
                %265 = vst [vmem:[%s187 + $0x130] sm:$0xff] %v264
                %v266 = vld [vmem:[%s186 + $0x258] sm:$0xff]
                %267 = vst [vmem:[%s187 + $0x138] sm:$0xff] %v266
                %v268 = vld [vmem:[%s186 + $0x280] sm:$0xff]
                %269 = vst [vmem:[%s187 + $0x140] sm:$0xff] %v268
                %v270 = vld [vmem:[%s186 + $0x288] sm:$0xff]
                %271 = vst [vmem:[%s187 + $0x148] sm:$0xff] %v270
                %v272 = vld [vmem:[%s186 + $0x290] sm:$0xff]
                %273 = vst [vmem:[%s187 + $0x150] sm:$0xff] %v272
                %v274 = vld [vmem:[%s186 + $0x298] sm:$0xff]
                %275 = vst [vmem:[%s187 + $0x158] sm:$0xff] %v274
                %v276 = vld [vmem:[%s186 + $0x2c0] sm:$0xff]
                %277 = vst [vmem:[%s187 + $0x160] sm:$0xff] %v276
                %v278 = vld [vmem:[%s186 + $0x2c8] sm:$0xff]
                %279 = vst [vmem:[%s187 + $0x168] sm:$0xff] %v278
                %v280 = vld [vmem:[%s186 + $0x2d0] sm:$0xff]
                %281 = vst [vmem:[%s187 + $0x170] sm:$0xff] %v280
                %v282 = vld [vmem:[%s186 + $0x2d8] sm:$0xff]
                %283 = vst [vmem:[%s187 + $0x178] sm:$0xff] %v282
                %v284 = vld [vmem:[%s186 + $0x300] sm:$0xff]
                %285 = vst [vmem:[%s187 + $0x180] sm:$0xff] %v284
                %v286 = vld [vmem:[%s186 + $0x308] sm:$0xff]
                %287 = vst [vmem:[%s187 + $0x188] sm:$0xff] %v286
                %v288 = vld [vmem:[%s186 + $0x310] sm:$0xff]
                %289 = vst [vmem:[%s187 + $0x190] sm:$0xff] %v288
                %v290 = vld [vmem:[%s186 + $0x318] sm:$0xff]
                %291 = vst [vmem:[%s187 + $0x198] sm:$0xff] %v290
                %v292 = vld [vmem:[%s186 + $0x340] sm:$0xff]
                %293 = vst [vmem:[%s187 + $0x1a0] sm:$0xff] %v292
                %v294 = vld [vmem:[%s186 + $0x348] sm:$0xff]
                %295 = vst [vmem:[%s187 + $0x1a8] sm:$0xff] %v294
                %v296 = vld [vmem:[%s186 + $0x350] sm:$0xff]
                %297 = vst [vmem:[%s187 + $0x1b0] sm:$0xff] %v296
                %v298 = vld [vmem:[%s186 + $0x358] sm:$0xff]
                %299 = vst [vmem:[%s187 + $0x1b8] sm:$0xff] %v298
                %v300 = vld [vmem:[%s186 + $0x380] sm:$0xff]
                %301 = vst [vmem:[%s187 + $0x1c0] sm:$0xff] %v300
                %v302 = vld [vmem:[%s186 + $0x388] sm:$0xff]
                %303 = vst [vmem:[%s187 + $0x1c8] sm:$0xff] %v302
                %v304 = vld [vmem:[%s186 + $0x390] sm:$0xff]
                %305 = vst [vmem:[%s187 + $0x1d0] sm:$0xff] %v304
                %v306 = vld [vmem:[%s186 + $0x398] sm:$0xff]
                %307 = vst [vmem:[%s187 + $0x1d8] sm:$0xff] %v306
                %v308 = vld [vmem:[%s186 + $0x3c0] sm:$0xff]
                %309 = vst [vmem:[%s187 + $0x1e0] sm:$0xff] %v308
                %v310 = vld [vmem:[%s186 + $0x3c8] sm:$0xff]
                %311 = vst [vmem:[%s187 + $0x1e8] sm:$0xff] %v310
                %v312 = vld [vmem:[%s186 + $0x3d0] sm:$0xff]
                %313 = vst [vmem:[%s187 + $0x1f0] sm:$0xff] %v312
                %v314 = vld [vmem:[%s186 + $0x3d8] sm:$0xff]
                %315 = vst [vmem:[%s187 + $0x1f8] sm:$0xff] %v314
              $region37: #{patchgan_dis_forward.9} parent=31 // loop_footer
                %s185 = sadd.s32 1, %s181
              $region38: #{patchgan_dis_forward.9} parent=31 // loop_footer_branch
                %180 = sbr.rel target = $region34
              $region39: #{patchgan_dis_forward.9} parent=31 // loop_exit
                _
            $region32: #{patchgan_dis_forward.9} parent=27 // pred_fallthru
              _
            // Predicated region
            $region40: #{patchgan_dis_forward.9} parent=27 // pred_check
              _
            $region41: #{patchgan_dis_forward.9} parent=27 // pred_check_branch
              %317 = sbr.rel target = $region43
            $region42: #{patchgan_dis_forward.9} parent=27 // pred_region
              _
            $region43: #{patchgan_dis_forward.9} parent=27 // pred_fallthru
              _
          $region28: #{patchgan_dis_forward.9} parent=23 // pred_fallthru
            _
          %318 = vnop
        $region24: #{patchgan_dis_forward.9} parent=19 // pred_fallthru
          _
        // Predicated region
        $region44: #{patchgan_dis_forward.9} parent=19 // pred_check
          %p319 = pneg %p78
        $region45: #{patchgan_dis_forward.9} parent=19 // pred_check_branch
          %321 = sbr.rel (%p319) target = $region47
        $region46: #{patchgan_dis_forward.9} parent=19 // pred_region
          %s322 = smul.u32 64, %s18
          %p323 = scmp.lt.s32.totalorder %s322, 127
          %s324 = scalar_select %p323, %s322, 127
          %p325 = scmp.lt.s32.totalorder %s17, 0
          %s326 = scalar_select %p325, %s17, 0
          %s327 = sadd.s32 %s326, %s324
          %s328 = smul.addr %s327, 8
          %s329 = scalar_lea.vmem %s1, %s328
          %s330 = smul.u32 64, %s18
        $region47: #{patchgan_dis_forward.9} parent=19 // pred_fallthru
          _
      $region20: #{patchgan_dis_forward.9} parent=5 // pred_fallthru
        _
      %p331 = scmp.le.s32.totalorder 1, %s9
      %p332 = scmp.lt.s32.totalorder %s9, 3
      %p333 = pnand %p331, %p332
      %p334 = pneg %p333
      // Predicated region
      $region48: #{patchgan_dis_forward.9} parent=5 // pred_check
        _
      $region49: #{patchgan_dis_forward.9} parent=5 // pred_check_branch
        %336 = sbr.rel (%p333) target = $region51
      $region50: #{patchgan_dis_forward.9} parent=5 // pred_region
        %s337 = ssub.s32 %s9, 1
        %s338 = sand.u32 %s43, 1
        %s339 = sand.u32 %s43, 1
        %s340 = smul.addr %s339, 512
        %s341 = scalar_lea.vmem [#allocation3], %s340
        // Predicated region
        $region52: #{patchgan_dis_forward.9} parent=50 // pred_check
          %p342 = pneg %p56
        $region53: #{patchgan_dis_forward.9} parent=50 // pred_check_branch
          %344 = sbr.rel (%p342) target = $region55
        $region54: #{patchgan_dis_forward.9} parent=50 // pred_region
          _
        $region55: #{patchgan_dis_forward.9} parent=50 // pred_fallthru
          _
        %s345 = sand.u32 %s43, 1
        %s346 = sand.u32 %s43, 1
        %s347 = smul.addr %s346, 512
        %s348 = scalar_lea.vmem [#allocation3], %s347
        %p349 = pneg %p56
        %p350 = pneg %p53
        %s351 = smul.u32 64, %s21
        %p352 = scmp.lt.s32.totalorder %s351, 127
        %s353 = scalar_select %p352, %s351, 127
        %p354 = scmp.lt.s32.totalorder %s20, 0
        %s355 = scalar_select %p354, %s20, 0
        %s356 = sadd.s32 %s355, %s353
        %s357 = smul.addr %s356, 8
        %s358 = scalar_lea.vmem %s1, %s357
        %p359 = pneg %p84
        %p360 = pneg %p81
        %p361 = scmp.lt.s32.totalorder %s20, 0
        %s362 = scalar_select %p361, %s20, 0
        %s363 = scalar_lea.vmem %s2, %s362
        %p364 = pneg %p110
        %p365 = pneg %p107
        %p366 = pneg %p138
        %p367 = pneg %p135
        %s368 = smul.u32 16, %s19
        %p369 = scmp.lt.s32.totalorder %s368, 15
        %s370 = scalar_select %p369, %s368, 15
        %p371 = scmp.lt.s32.totalorder %s20, 0
        %s372 = scalar_select %p371, %s20, 0
        %s373 = sadd.s32 %s372, %s370
        %s374 = smul.addr %s373, 8
        %s375 = scalar_lea.vmem %s3, %s374
        %s376 = smul.u32 16, %s19
        %s377 = smul.u32 4, %s21
        %s378 = smul.u32 64, %s21
        %p379 = scmp.lt.s32.totalorder %s378, 127
        %s380 = scalar_select %p379, %s378, 127
        %p381 = scmp.lt.s32.totalorder %s20, 0
        %s382 = scalar_select %p381, %s20, 0
        %s383 = sadd.s32 %s382, %s380
        %s384 = smul.addr %s383, 8
        %s385 = scalar_lea.vmem %s1, %s384
        %s386 = smul.u32 64, %s21
        %p387 = scmp.lt.s32.totalorder %s20, 0
        %s388 = scalar_select %p387, %s20, 0
        %s389 = scalar_lea.vmem %s2, %s388
        %s390 = smul.u32 16, %s19
        %p391 = scmp.lt.s32.totalorder %s390, 15
        %s392 = scalar_select %p391, %s390, 15
        %p393 = scmp.lt.s32.totalorder %s20, 0
        %s394 = scalar_select %p393, %s20, 0
        %s395 = sadd.s32 %s394, %s392
        %s396 = smul.addr %s395, 8
        %s397 = scalar_lea.vmem %s3, %s396
        %s398 = smul.u32 16, %s19
        %p399 = scmp.eq.s32.totalorder %s21, 0
        // Predicated region
        $region56: #{patchgan_dis_forward.9} parent=50 // pred_check
          %p400 = pneg %p399
        $region57: #{patchgan_dis_forward.9} parent=50 // pred_check_branch
          %402 = sbr.rel (%p400) target = $region59
        $region58: #{patchgan_dis_forward.9} parent=50 // pred_region
          %403 = vst [vmem:[#allocation2] sm:$0xff] 0.0
          %404 = vst [vmem:[#allocation2 + $0x8] sm:$0xff] 0.0
          %405 = vst [vmem:[#allocation2 + $0x10] sm:$0xff] 0.0
          %406 = vst [vmem:[#allocation2 + $0x18] sm:$0xff] 0.0
          %407 = vst [vmem:[#allocation2 + $0x20] sm:$0xff] 0.0
          %408 = vst [vmem:[#allocation2 + $0x28] sm:$0xff] 0.0
          %409 = vst [vmem:[#allocation2 + $0x30] sm:$0xff] 0.0
          %410 = vst [vmem:[#allocation2 + $0x38] sm:$0xff] 0.0
          %411 = vst [vmem:[#allocation2 + $0x40] sm:$0xff] 0.0
          %412 = vst [vmem:[#allocation2 + $0x48] sm:$0xff] 0.0
          %413 = vst [vmem:[#allocation2 + $0x50] sm:$0xff] 0.0
          %414 = vst [vmem:[#allocation2 + $0x58] sm:$0xff] 0.0
          %415 = vst [vmem:[#allocation2 + $0x60] sm:$0xff] 0.0
          %416 = vst [vmem:[#allocation2 + $0x68] sm:$0xff] 0.0
          %417 = vst [vmem:[#allocation2 + $0x70] sm:$0xff] 0.0
          %418 = vst [vmem:[#allocation2 + $0x78] sm:$0xff] 0.0
        $region59: #{patchgan_dis_forward.9} parent=50 // pred_fallthru
          _
        %v419 = vld [vmem:[#allocation2] sm:$0xff]
        %v420 = vld [vmem:[#allocation2 + $0x8] sm:$0xff]
        %v421 = vld [vmem:[#allocation2 + $0x10] sm:$0xff]
        %v422 = vld [vmem:[#allocation2 + $0x18] sm:$0xff]
        %v423 = vld [vmem:[#allocation2 + $0x20] sm:$0xff]
        %v424 = vld [vmem:[#allocation2 + $0x28] sm:$0xff]
        %v425 = vld [vmem:[#allocation2 + $0x30] sm:$0xff]
        %v426 = vld [vmem:[#allocation2 + $0x38] sm:$0xff]
        %v427 = vld [vmem:[#allocation2 + $0x40] sm:$0xff]
        %v428 = vld [vmem:[#allocation2 + $0x48] sm:$0xff]
        %v429 = vld [vmem:[#allocation2 + $0x50] sm:$0xff]
        %v430 = vld [vmem:[#allocation2 + $0x58] sm:$0xff]
        %v431 = vld [vmem:[#allocation2 + $0x60] sm:$0xff]
        %v432 = vld [vmem:[#allocation2 + $0x68] sm:$0xff]
        %v433 = vld [vmem:[#allocation2 + $0x70] sm:$0xff]
        %v434 = vld [vmem:[#allocation2 + $0x78] sm:$0xff]
        %v435 = vld [vmem:[%s341] sm:$0xff]
        %v436 = vld [vmem:[%s341 + $0x8] sm:$0xff]
        %v437 = vld [vmem:[%s341 + $0x10] sm:$0xff]
        %v438 = vld [vmem:[%s341 + $0x18] sm:$0xff]
        %v439 = vld [vmem:[%s341 + $0x20] sm:$0xff]
        %v440 = vld [vmem:[%s341 + $0x28] sm:$0xff]
        %v441 = vld [vmem:[%s341 + $0x30] sm:$0xff]
        %v442 = vld [vmem:[%s341 + $0x38] sm:$0xff]
        %v443 = vld [vmem:[%s341 + $0x40] sm:$0xff]
        %v444 = vld [vmem:[%s341 + $0x48] sm:$0xff]
        %v445 = vld [vmem:[%s341 + $0x50] sm:$0xff]
        %v446 = vld [vmem:[%s341 + $0x58] sm:$0xff]
        %v447 = vld [vmem:[%s341 + $0x60] sm:$0xff]
        %v448 = vld [vmem:[%s341 + $0x68] sm:$0xff]
        %v449 = vld [vmem:[%s341 + $0x70] sm:$0xff]
        %v450 = vld [vmem:[%s341 + $0x78] sm:$0xff]
        %v451 = vld [vmem:[%s341 + $0x80] sm:$0xff]
        %v452 = vld [vmem:[%s341 + $0x88] sm:$0xff]
        %v453 = vld [vmem:[%s341 + $0x90] sm:$0xff]
        %v454 = vld [vmem:[%s341 + $0x98] sm:$0xff]
        %v455 = vld [vmem:[%s341 + $0xa0] sm:$0xff]
        %v456 = vld [vmem:[%s341 + $0xa8] sm:$0xff]
        %v457 = vld [vmem:[%s341 + $0xb0] sm:$0xff]
        %v458 = vld [vmem:[%s341 + $0xb8] sm:$0xff]
        %v459 = vld [vmem:[%s341 + $0xc0] sm:$0xff]
        %v460 = vld [vmem:[%s341 + $0xc8] sm:$0xff]
        %v461 = vld [vmem:[%s341 + $0xd0] sm:$0xff]
        %v462 = vld [vmem:[%s341 + $0xd8] sm:$0xff]
        %v463 = vld [vmem:[%s341 + $0xe0] sm:$0xff]
        %v464 = vld [vmem:[%s341 + $0xe8] sm:$0xff]
        %v465 = vld [vmem:[%s341 + $0xf0] sm:$0xff]
        %v466 = vld [vmem:[%s341 + $0xf8] sm:$0xff]
        %v467 = vld [vmem:[%s341 + $0x100] sm:$0xff]
        %v468 = vld [vmem:[%s341 + $0x108] sm:$0xff]
        %v469 = vld [vmem:[%s341 + $0x110] sm:$0xff]
        %v470 = vld [vmem:[%s341 + $0x118] sm:$0xff]
        %v471 = vld [vmem:[%s341 + $0x120] sm:$0xff]
        %v472 = vld [vmem:[%s341 + $0x128] sm:$0xff]
        %v473 = vld [vmem:[%s341 + $0x130] sm:$0xff]
        %v474 = vld [vmem:[%s341 + $0x138] sm:$0xff]
        %v475 = vld [vmem:[%s341 + $0x140] sm:$0xff]
        %v476 = vld [vmem:[%s341 + $0x148] sm:$0xff]
        %v477 = vld [vmem:[%s341 + $0x150] sm:$0xff]
        %v478 = vld [vmem:[%s341 + $0x158] sm:$0xff]
        %v479 = vld [vmem:[%s341 + $0x160] sm:$0xff]
        %v480 = vld [vmem:[%s341 + $0x168] sm:$0xff]
        %v481 = vld [vmem:[%s341 + $0x170] sm:$0xff]
        %v482 = vld [vmem:[%s341 + $0x178] sm:$0xff]
        %v483 = vld [vmem:[%s341 + $0x180] sm:$0xff]
        %v484 = vld [vmem:[%s341 + $0x188] sm:$0xff]
        %v485 = vld [vmem:[%s341 + $0x190] sm:$0xff]
        %v486 = vld [vmem:[%s341 + $0x198] sm:$0xff]
        %v487 = vld [vmem:[%s341 + $0x1a0] sm:$0xff]
        %v488 = vld [vmem:[%s341 + $0x1a8] sm:$0xff]
        %v489 = vld [vmem:[%s341 + $0x1b0] sm:$0xff]
        %v490 = vld [vmem:[%s341 + $0x1b8] sm:$0xff]
        %v491 = vld [vmem:[%s341 + $0x1c0] sm:$0xff]
        %v492 = vld [vmem:[%s341 + $0x1c8] sm:$0xff]
        %v493 = vld [vmem:[%s341 + $0x1d0] sm:$0xff]
        %v494 = vld [vmem:[%s341 + $0x1d8] sm:$0xff]
        %v495 = vld [vmem:[%s341 + $0x1e0] sm:$0xff]
        %v496 = vld [vmem:[%s341 + $0x1e8] sm:$0xff]
        %v497 = vld [vmem:[%s341 + $0x1f0] sm:$0xff]
        %v498 = vld [vmem:[%s341 + $0x1f8] sm:$0xff]
        %v499 = vld [vmem:[%s385] sm:$0xff]
        %v500 = vld [vmem:[%s385 + $0x8] sm:$0xff]
        %v501 = vld [vmem:[%s385 + $0x10] sm:$0xff]
        %v502 = vld [vmem:[%s385 + $0x18] sm:$0xff]
        %v503 = vld [vmem:[%s385 + $0x20] sm:$0xff]
        %v504 = vld [vmem:[%s385 + $0x28] sm:$0xff]
        %v505 = vld [vmem:[%s385 + $0x30] sm:$0xff]
        %v506 = vld [vmem:[%s385 + $0x38] sm:$0xff]
        %v507 = vld [vmem:[%s385 + $0x40] sm:$0xff]
        %v508 = vld [vmem:[%s385 + $0x48] sm:$0xff]
        %v509 = vld [vmem:[%s385 + $0x50] sm:$0xff]
        %v510 = vld [vmem:[%s385 + $0x58] sm:$0xff]
        %v511 = vld [vmem:[%s385 + $0x60] sm:$0xff]
        %v512 = vld [vmem:[%s385 + $0x68] sm:$0xff]
        %v513 = vld [vmem:[%s385 + $0x70] sm:$0xff]
        %v514 = vld [vmem:[%s385 + $0x78] sm:$0xff]
        %v515 = vld [vmem:[%s385 + $0x80] sm:$0xff]
        %v516 = vld [vmem:[%s385 + $0x88] sm:$0xff]
        %v517 = vld [vmem:[%s385 + $0x90] sm:$0xff]
        %v518 = vld [vmem:[%s385 + $0x98] sm:$0xff]
        %v519 = vld [vmem:[%s385 + $0xa0] sm:$0xff]
        %v520 = vld [vmem:[%s385 + $0xa8] sm:$0xff]
        %v521 = vld [vmem:[%s385 + $0xb0] sm:$0xff]
        %v522 = vld [vmem:[%s385 + $0xb8] sm:$0xff]
        %v523 = vld [vmem:[%s385 + $0xc0] sm:$0xff]
        %v524 = vld [vmem:[%s385 + $0xc8] sm:$0xff]
        %v525 = vld [vmem:[%s385 + $0xd0] sm:$0xff]
        %v526 = vld [vmem:[%s385 + $0xd8] sm:$0xff]
        %v527 = vld [vmem:[%s385 + $0xe0] sm:$0xff]
        %v528 = vld [vmem:[%s385 + $0xe8] sm:$0xff]
        %v529 = vld [vmem:[%s385 + $0xf0] sm:$0xff]
        %v530 = vld [vmem:[%s385 + $0xf8] sm:$0xff]
        %v531 = vld [vmem:[%s385 + $0x100] sm:$0xff]
        %v532 = vld [vmem:[%s385 + $0x108] sm:$0xff]
        %v533 = vld [vmem:[%s385 + $0x110] sm:$0xff]
        %v534 = vld [vmem:[%s385 + $0x118] sm:$0xff]
        %v535 = vld [vmem:[%s385 + $0x120] sm:$0xff]
        %v536 = vld [vmem:[%s385 + $0x128] sm:$0xff]
        %v537 = vld [vmem:[%s385 + $0x130] sm:$0xff]
        %v538 = vld [vmem:[%s385 + $0x138] sm:$0xff]
        %v539 = vld [vmem:[%s385 + $0x140] sm:$0xff]
        %v540 = vld [vmem:[%s385 + $0x148] sm:$0xff]
        %v541 = vld [vmem:[%s385 + $0x150] sm:$0xff]
        %v542 = vld [vmem:[%s385 + $0x158] sm:$0xff]
        %v543 = vld [vmem:[%s385 + $0x160] sm:$0xff]
        %v544 = vld [vmem:[%s385 + $0x168] sm:$0xff]
        %v545 = vld [vmem:[%s385 + $0x170] sm:$0xff]
        %v546 = vld [vmem:[%s385 + $0x178] sm:$0xff]
        %v547 = vld [vmem:[%s385 + $0x180] sm:$0xff]
        %v548 = vld [vmem:[%s385 + $0x188] sm:$0xff]
        %v549 = vld [vmem:[%s385 + $0x190] sm:$0xff]
        %v550 = vld [vmem:[%s385 + $0x198] sm:$0xff]
        %v551 = vld [vmem:[%s385 + $0x1a0] sm:$0xff]
        %v552 = vld [vmem:[%s385 + $0x1a8] sm:$0xff]
        %v553 = vld [vmem:[%s385 + $0x1b0] sm:$0xff]
        %v554 = vld [vmem:[%s385 + $0x1b8] sm:$0xff]
        %v555 = vld [vmem:[%s385 + $0x1c0] sm:$0xff]
        %v556 = vld [vmem:[%s385 + $0x1c8] sm:$0xff]
        %v557 = vld [vmem:[%s385 + $0x1d0] sm:$0xff]
        %v558 = vld [vmem:[%s385 + $0x1d8] sm:$0xff]
        %v559 = vld [vmem:[%s385 + $0x1e0] sm:$0xff]
        %v560 = vld [vmem:[%s385 + $0x1e8] sm:$0xff]
        %v561 = vld [vmem:[%s385 + $0x1f0] sm:$0xff]
        %v562 = vld [vmem:[%s385 + $0x1f8] sm:$0xff]
        %563 = vmatprep.subr.mxu0 0.0
        %564 = vmatpush1.msra.mxu0 %v499
        %565 = vmatprep.subr.mxu0 0.0
        %566 = vmatpush1.msra.mxu0 %v500
        %567 = vmatprep.subr.mxu0 0.0
        %568 = vmatpush1.msra.mxu0 %v501
        %569 = vmatprep.subr.mxu0 0.0
        %570 = vmatpush1.msra.mxu0 %v502
        %571 = vmatprep.subr.mxu0 0.0
        %572 = vmatpush1.msra.mxu0 %v503
        %573 = vmatprep.subr.mxu0 0.0
        %574 = vmatpush1.msra.mxu0 %v504
        %575 = vmatprep.subr.mxu0 0.0
        %576 = vmatpush1.msra.mxu0 %v505
        %577 = vmatprep.subr.mxu0 0.0
        %578 = vmatpush1.msra.mxu0 %v506
        %579 = vmatprep.subr.mxu0 0.0
        %580 = vmatpush1.msra.mxu0 %v507
        %581 = vmatprep.subr.mxu0 0.0
        %582 = vmatpush1.msra.mxu0 %v508
        %583 = vmatprep.subr.mxu0 0.0
        %584 = vmatpush1.msra.mxu0 %v509
        %585 = vmatprep.subr.mxu0 0.0
        %586 = vmatpush1.msra.mxu0 %v510
        %587 = vmatprep.subr.mxu0 0.0
        %588 = vmatpush1.msra.mxu0 %v511
        %589 = vmatprep.subr.mxu0 0.0
        %590 = vmatpush1.msra.mxu0 %v512
        %591 = vmatprep.subr.mxu0 0.0
        %592 = vmatpush1.msra.mxu0 %v513
        %593 = vmatprep.subr.mxu0 0.0
        %594 = vmatpush1.msra.mxu0 %v514
        %595 = vmatprep.subr.mxu0 0.0
        %596 = vmatpush1.msra.mxu0 %v515
        %597 = vmatprep.subr.mxu0 0.0
        %598 = vmatpush1.msra.mxu0 %v516
        %599 = vmatprep.subr.mxu0 0.0
        %600 = vmatpush1.msra.mxu0 %v517
        %601 = vmatprep.subr.mxu0 0.0
        %602 = vmatpush1.msra.mxu0 %v518
        %603 = vmatprep.subr.mxu0 0.0
        %604 = vmatpush1.msra.mxu0 %v519
        %605 = vmatprep.subr.mxu0 0.0
        %606 = vmatpush1.msra.mxu0 %v520
        %607 = vmatprep.subr.mxu0 0.0
        %608 = vmatpush1.msra.mxu0 %v521
        %609 = vmatprep.subr.mxu0 0.0
        %610 = vmatpush1.msra.mxu0 %v522
        %611 = vmatprep.subr.mxu0 0.0
        %612 = vmatpush1.msra.mxu0 %v523
        %613 = vmatprep.subr.mxu0 0.0
        %614 = vmatpush1.msra.mxu0 %v524
        %615 = vmatprep.subr.mxu0 0.0
        %616 = vmatpush1.msra.mxu0 %v525
        %617 = vmatprep.subr.mxu0 0.0
        %618 = vmatpush1.msra.mxu0 %v526
        %619 = vmatprep.subr.mxu0 0.0
        %620 = vmatpush1.msra.mxu0 %v527
        %621 = vmatprep.subr.mxu0 0.0
        %622 = vmatpush1.msra.mxu0 %v528
        %623 = vmatprep.subr.mxu0 0.0
        %624 = vmatpush1.msra.mxu0 %v529
        %625 = vmatprep.subr.mxu0 0.0
        %626 = vmatpush1.msra.mxu0 %v530
        %627 = vmatprep.mubr.f32.mxu0 %v436
        %628 = vmatmul.mubr.f32.gmra.mrb[0].mxu0 %v435
        %v629 = vpop.f32.mrb[0].mxu0
        %v630 = vadd.f32 0.0, %v629
        %v631 = vpop.f32.mrb[0].mxu0
        %632 = vmatprep.mubr.f32.mxu0 %v440
        %633 = vmatmul.mubr.f32.gmra.mrb[0].mxu0 %v439
        %v634 = vpop.f32.mrb[0].mxu0
        %v635 = vadd.f32 0.0, %v634
        %v636 = vpop.f32.mrb[0].mxu0
        %637 = vmatprep.mubr.f32.mxu0 %v444
        %638 = vmatmul.mubr.f32.gmra.mrb[0].mxu0 %v443
        %v639 = vpop.f32.mrb[0].mxu0
        %v640 = vadd.f32 0.0, %v639
        %v641 = vpop.f32.mrb[0].mxu0
        %642 = vmatprep.mubr.f32.mxu0 %v448
        %643 = vmatmul.mubr.f32.gmra.mrb[0].mxu0 %v447
        %v644 = vpop.f32.mrb[0].mxu0
        %v645 = vadd.f32 0.0, %v644
        %v646 = vpop.f32.mrb[0].mxu0
        %647 = vmatprep.mubr.f32.mxu0 %v452
        %648 = vmatmul.mubr.f32.gmra.mrb[0].mxu0 %v451
        %v649 = vpop.f32.mrb[0].mxu0
        %v650 = vadd.f32 0.0, %v649
        %v651 = vpop.f32.mrb[0].mxu0
        %652 = vmatprep.mubr.f32.mxu0 %v456
        %653 = vmatmul.mubr.f32.gmra.mrb[0].mxu0 %v455
        %v654 = vpop.f32.mrb[0].mxu0
        %v655 = vadd.f32 0.0, %v654
        %v656 = vpop.f32.mrb[0].mxu0
        %657 = vmatprep.mubr.f32.mxu0 %v460
        %658 = vmatmul.mubr.f32.gmra.mrb[0].mxu0 %v459
        %v659 = vpop.f32.mrb[0].mxu0
        %v660 = vadd.f32 0.0, %v659
        %v661 = vpop.f32.mrb[0].mxu0
        %662 = vmatprep.mubr.f32.mxu0 %v464
        %663 = vmatmul.mubr.f32.gmra.mrb[0].mxu0 %v463
        %v664 = vpop.f32.mrb[0].mxu0
        %v665 = vadd.f32 0.0, %v664
        %v666 = vpop.f32.mrb[0].mxu0
        %667 = vmatprep.mubr.f32.mxu0 %v468
        %668 = vmatmul.mubr.f32.gmra.mrb[0].mxu0 %v467
        %v669 = vpop.f32.mrb[0].mxu0
        %v670 = vadd.f32 0.0, %v669
        %v671 = vpop.f32.mrb[0].mxu0
        %672 = vmatprep.mubr.f32.mxu0 %v472
        %673 = vmatmul.mubr.f32.gmra.mrb[0].mxu0 %v471
        %v674 = vpop.f32.mrb[0].mxu0
        %v675 = vadd.f32 0.0, %v674
        %v676 = vpop.f32.mrb[0].mxu0
        %677 = vmatprep.mubr.f32.mxu0 %v476
        %678 = vmatmul.mubr.f32.gmra.mrb[0].mxu0 %v475
        %v679 = vpop.f32.mrb[0].mxu0
        %v680 = vadd.f32 0.0, %v679
        %v681 = vpop.f32.mrb[0].mxu0
        %682 = vmatprep.mubr.f32.mxu0 %v480
        %683 = vmatmul.mubr.f32.gmra.mrb[0].mxu0 %v479
        %v684 = vpop.f32.mrb[0].mxu0
        %v685 = vadd.f32 0.0, %v684
        %v686 = vpop.f32.mrb[0].mxu0
        %687 = vmatprep.mubr.f32.mxu0 %v484
        %688 = vmatmul.mubr.f32.gmra.mrb[0].mxu0 %v483
        %v689 = vpop.f32.mrb[0].mxu0
        %v690 = vadd.f32 0.0, %v689
        %v691 = vpop.f32.mrb[0].mxu0
        %692 = vmatprep.mubr.f32.mxu0 %v488
        %693 = vmatmul.mubr.f32.gmra.mrb[0].mxu0 %v487
        %v694 = vpop.f32.mrb[0].mxu0
        %v695 = vadd.f32 0.0, %v694
        %v696 = vpop.f32.mrb[0].mxu0
        %697 = vmatprep.mubr.f32.mxu0 %v492
        %698 = vmatmul.mubr.f32.gmra.mrb[0].mxu0 %v491
        %v699 = vpop.f32.mrb[0].mxu0
        %v700 = vadd.f32 0.0, %v699
        %v701 = vpop.f32.mrb[0].mxu0
        %702 = vmatprep.mubr.f32.mxu0 %v496
        %703 = vmatmul.mubr.f32.gmra.mrb[0].mxu0 %v495
        %v704 = vpop.f32.mrb[0].mxu0
        %v705 = vadd.f32 0.0, %v704
        %v706 = vpop.f32.mrb[0].mxu0
        %707 = vdwg.mxu0
        %708 = vmatprep.subr.mxu0 0.0
        %709 = vmatpush1.msra.mxu0 %v531
        %710 = vmatprep.subr.mxu0 0.0
        %711 = vmatpush1.msra.mxu0 %v532
        %712 = vmatprep.subr.mxu0 0.0
        %713 = vmatpush1.msra.mxu0 %v533
        %714 = vmatprep.subr.mxu0 0.0
        %715 = vmatpush1.msra.mxu0 %v534
        %716 = vmatprep.subr.mxu0 0.0
        %717 = vmatpush1.msra.mxu0 %v535
        %718 = vmatprep.subr.mxu0 0.0
        %719 = vmatpush1.msra.mxu0 %v536
        %720 = vmatprep.subr.mxu0 0.0
        %721 = vmatpush1.msra.mxu0 %v537
        %722 = vmatprep.subr.mxu0 0.0
        %723 = vmatpush1.msra.mxu0 %v538
        %724 = vmatprep.subr.mxu0 0.0
        %725 = vmatpush1.msra.mxu0 %v539
        %726 = vmatprep.subr.mxu0 0.0
        %727 = vmatpush1.msra.mxu0 %v540
        %728 = vmatprep.subr.mxu0 0.0
        %729 = vmatpush1.msra.mxu0 %v541
        %730 = vmatprep.subr.mxu0 0.0
        %731 = vmatpush1.msra.mxu0 %v542
        %732 = vmatprep.subr.mxu0 0.0
        %733 = vmatpush1.msra.mxu0 %v543
        %734 = vmatprep.subr.mxu0 0.0
        %735 = vmatpush1.msra.mxu0 %v544
        %736 = vmatprep.subr.mxu0 0.0
        %737 = vmatpush1.msra.mxu0 %v545
        %738 = vmatprep.subr.mxu0 0.0
        %739 = vmatpush1.msra.mxu0 %v546
        %740 = vmatprep.subr.mxu0 0.0
        %741 = vmatpush1.msra.mxu0 %v547
        %742 = vmatprep.subr.mxu0 0.0
        %743 = vmatpush1.msra.mxu0 %v548
        %744 = vmatprep.subr.mxu0 0.0
        %745 = vmatpush1.msra.mxu0 %v549
        %746 = vmatprep.subr.mxu0 0.0
        %747 = vmatpush1.msra.mxu0 %v550
        %748 = vmatprep.subr.mxu0 0.0
        %749 = vmatpush1.msra.mxu0 %v551
        %750 = vmatprep.subr.mxu0 0.0
        %751 = vmatpush1.msra.mxu0 %v552
        %752 = vmatprep.subr.mxu0 0.0
        %753 = vmatpush1.msra.mxu0 %v553
        %754 = vmatprep.subr.mxu0 0.0
        %755 = vmatpush1.msra.mxu0 %v554
        %756 = vmatprep.subr.mxu0 0.0
        %757 = vmatpush1.msra.mxu0 %v555
        %758 = vmatprep.subr.mxu0 0.0
        %759 = vmatpush1.msra.mxu0 %v556
        %760 = vmatprep.subr.mxu0 0.0
        %761 = vmatpush1.msra.mxu0 %v557
        %762 = vmatprep.subr.mxu0 0.0
        %763 = vmatpush1.msra.mxu0 %v558
        %764 = vmatprep.subr.mxu0 0.0
        %765 = vmatpush1.msra.mxu0 %v559
        %766 = vmatprep.subr.mxu0 0.0
        %767 = vmatpush1.msra.mxu0 %v560
        %768 = vmatprep.subr.mxu0 0.0
        %769 = vmatpush1.msra.mxu0 %v561
        %770 = vmatprep.subr.mxu0 0.0
        %771 = vmatpush1.msra.mxu0 %v562
        %772 = vmatprep.mubr.f32.mxu0 %v438
        %773 = vmatmul.mubr.f32.gmra.mrb[0].mxu0 %v437
        %v774 = vpop.f32.mrb[0].mxu0
        %v775 = vadd.f32 %v630, %v774
        %v776 = vpop.f32.mrb[0].mxu0
        %777 = vmatprep.mubr.f32.mxu0 %v442
        %778 = vmatmul.mubr.f32.gmra.mrb[0].mxu0 %v441
        %v779 = vpop.f32.mrb[0].mxu0
        %v780 = vadd.f32 %v635, %v779
        %v781 = vpop.f32.mrb[0].mxu0
        %782 = vmatprep.mubr.f32.mxu0 %v446
        %783 = vmatmul.mubr.f32.gmra.mrb[0].mxu0 %v445
        %v784 = vpop.f32.mrb[0].mxu0
        %v785 = vadd.f32 %v640, %v784
        %v786 = vpop.f32.mrb[0].mxu0
        %787 = vmatprep.mubr.f32.mxu0 %v450
        %788 = vmatmul.mubr.f32.gmra.mrb[0].mxu0 %v449
        %v789 = vpop.f32.mrb[0].mxu0
        %v790 = vadd.f32 %v645, %v789
        %v791 = vpop.f32.mrb[0].mxu0
        %792 = vmatprep.mubr.f32.mxu0 %v454
        %793 = vmatmul.mubr.f32.gmra.mrb[0].mxu0 %v453
        %v794 = vpop.f32.mrb[0].mxu0
        %v795 = vadd.f32 %v650, %v794
        %v796 = vpop.f32.mrb[0].mxu0
        %797 = vmatprep.mubr.f32.mxu0 %v458
        %798 = vmatmul.mubr.f32.gmra.mrb[0].mxu0 %v457
        %v799 = vpop.f32.mrb[0].mxu0
        %v800 = vadd.f32 %v655, %v799
        %v801 = vpop.f32.mrb[0].mxu0
        %802 = vmatprep.mubr.f32.mxu0 %v462
        %803 = vmatmul.mubr.f32.gmra.mrb[0].mxu0 %v461
        %v804 = vpop.f32.mrb[0].mxu0
        %v805 = vadd.f32 %v660, %v804
        %v806 = vpop.f32.mrb[0].mxu0
        %807 = vmatprep.mubr.f32.mxu0 %v466
        %808 = vmatmul.mubr.f32.gmra.mrb[0].mxu0 %v465
        %v809 = vpop.f32.mrb[0].mxu0
        %v810 = vadd.f32 %v665, %v809
        %v811 = vpop.f32.mrb[0].mxu0
        %812 = vmatprep.mubr.f32.mxu0 %v470
        %813 = vmatmul.mubr.f32.gmra.mrb[0].mxu0 %v469
        %v814 = vpop.f32.mrb[0].mxu0
        %v815 = vadd.f32 %v670, %v814
        %v816 = vpop.f32.mrb[0].mxu0
        %817 = vmatprep.mubr.f32.mxu0 %v474
        %818 = vmatmul.mubr.f32.gmra.mrb[0].mxu0 %v473
        %v819 = vpop.f32.mrb[0].mxu0
        %v820 = vadd.f32 %v675, %v819
        %v821 = vpop.f32.mrb[0].mxu0
        %822 = vmatprep.mubr.f32.mxu0 %v478
        %823 = vmatmul.mubr.f32.gmra.mrb[0].mxu0 %v477
        %v824 = vpop.f32.mrb[0].mxu0
        %v825 = vadd.f32 %v680, %v824
        %v826 = vpop.f32.mrb[0].mxu0
        %827 = vmatprep.mubr.f32.mxu0 %v482
        %828 = vmatmul.mubr.f32.gmra.mrb[0].mxu0 %v481
        %v829 = vpop.f32.mrb[0].mxu0
        %v830 = vadd.f32 %v685, %v829
        %v831 = vpop.f32.mrb[0].mxu0
        %832 = vmatprep.mubr.f32.mxu0 %v486
        %833 = vmatmul.mubr.f32.gmra.mrb[0].mxu0 %v485
        %v834 = vpop.f32.mrb[0].mxu0
        %v835 = vadd.f32 %v690, %v834
        %v836 = vpop.f32.mrb[0].mxu0
        %837 = vmatprep.mubr.f32.mxu0 %v490
        %838 = vmatmul.mubr.f32.gmra.mrb[0].mxu0 %v489
        %v839 = vpop.f32.mrb[0].mxu0
        %v840 = vadd.f32 %v695, %v839
        %v841 = vpop.f32.mrb[0].mxu0
        %842 = vmatprep.mubr.f32.mxu0 %v494
        %843 = vmatmul.mubr.f32.gmra.mrb[0].mxu0 %v493
        %v844 = vpop.f32.mrb[0].mxu0
        %v845 = vadd.f32 %v700, %v844
        %v846 = vpop.f32.mrb[0].mxu0
        %847 = vmatprep.mubr.f32.mxu0 %v498
        %848 = vmatmul.mubr.f32.gmra.mrb[0].mxu0 %v497
        %v849 = vpop.f32.mrb[0].mxu0
        %v850 = vadd.f32 %v705, %v849
        %v851 = vpop.f32.mrb[0].mxu0
        %852 = vdwg.mxu0
        %v853 = vadd.f32 %v419, %v775
        %v854 = vadd.f32 %v420, %v780
        %v855 = vadd.f32 %v421, %v785
        %v856 = vadd.f32 %v422, %v790
        %v857 = vadd.f32 %v423, %v795
        %v858 = vadd.f32 %v424, %v800
        %v859 = vadd.f32 %v425, %v805
        %v860 = vadd.f32 %v426, %v810
        %v861 = vadd.f32 %v427, %v815
        %v862 = vadd.f32 %v428, %v820
        %v863 = vadd.f32 %v429, %v825
        %v864 = vadd.f32 %v430, %v830
        %v865 = vadd.f32 %v431, %v835
        %v866 = vadd.f32 %v432, %v840
        %v867 = vadd.f32 %v433, %v845
        %v868 = vadd.f32 %v434, %v850
        %869 = vst [vmem:[#allocation2] sm:$0xff] %v853
        %870 = vst [vmem:[#allocation2 + $0x8] sm:$0xff] %v854
        %871 = vst [vmem:[#allocation2 + $0x10] sm:$0xff] %v855
        %872 = vst [vmem:[#allocation2 + $0x18] sm:$0xff] %v856
        %873 = vst [vmem:[#allocation2 + $0x20] sm:$0xff] %v857
        %874 = vst [vmem:[#allocation2 + $0x28] sm:$0xff] %v858
        %875 = vst [vmem:[#allocation2 + $0x30] sm:$0xff] %v859
        %876 = vst [vmem:[#allocation2 + $0x38] sm:$0xff] %v860
        %877 = vst [vmem:[#allocation2 + $0x40] sm:$0xff] %v861
        %878 = vst [vmem:[#allocation2 + $0x48] sm:$0xff] %v862
        %879 = vst [vmem:[#allocation2 + $0x50] sm:$0xff] %v863
        %880 = vst [vmem:[#allocation2 + $0x58] sm:$0xff] %v864
        %881 = vst [vmem:[#allocation2 + $0x60] sm:$0xff] %v865
        %882 = vst [vmem:[#allocation2 + $0x68] sm:$0xff] %v866
        %883 = vst [vmem:[#allocation2 + $0x70] sm:$0xff] %v867
        %884 = vst [vmem:[#allocation2 + $0x78] sm:$0xff] %v868
        %p885 = scmp.eq.s32.totalorder %s21, 1
        // Predicated region
        $region60: #{patchgan_dis_forward.9} parent=50 // pred_check
          %p886 = pneg %p885
        $region61: #{patchgan_dis_forward.9} parent=50 // pred_check_branch
          %888 = sbr.rel (%p886) target = $region63
        $region62: #{patchgan_dis_forward.9} parent=50 // pred_region
          %v889 = vld [vmem:[#allocation2] sm:$0xff]
          %v890 = vld [vmem:[#allocation2 + $0x8] sm:$0xff]
          %v891 = vld [vmem:[#allocation2 + $0x10] sm:$0xff]
          %v892 = vld [vmem:[#allocation2 + $0x18] sm:$0xff]
          %v893 = vld [vmem:[#allocation2 + $0x20] sm:$0xff]
          %v894 = vld [vmem:[#allocation2 + $0x28] sm:$0xff]
          %v895 = vld [vmem:[#allocation2 + $0x30] sm:$0xff]
          %v896 = vld [vmem:[#allocation2 + $0x38] sm:$0xff]
          %v897 = vld [vmem:[#allocation2 + $0x40] sm:$0xff]
          %v898 = vld [vmem:[#allocation2 + $0x48] sm:$0xff]
          %v899 = vld [vmem:[#allocation2 + $0x50] sm:$0xff]
          %v900 = vld [vmem:[#allocation2 + $0x58] sm:$0xff]
          %v901 = vld [vmem:[#allocation2 + $0x60] sm:$0xff]
          %v902 = vld [vmem:[#allocation2 + $0x68] sm:$0xff]
          %v903 = vld [vmem:[#allocation2 + $0x70] sm:$0xff]
          %v904 = vld [vmem:[#allocation2 + $0x78] sm:$0xff]
          %v905 = vld [vmem:[%s389] sm:$0x1]
          %v907 = vlaneseq
          %v908 = vshrl.u32 %v907, 7
          %v909 = vsub.s32 0, %v908
          %v910 = vrot.slane %v905, %v909
          %v912 = vadd.f32 %v889, %v910
          %v913 = vadd.f32 %v890, %v910
          %v914 = vadd.f32 %v891, %v910
          %v915 = vadd.f32 %v892, %v910
          %v916 = vadd.f32 %v893, %v910
          %v917 = vadd.f32 %v894, %v910
          %v918 = vadd.f32 %v895, %v910
          %v919 = vadd.f32 %v896, %v910
          %v920 = vadd.f32 %v897, %v910
          %v921 = vadd.f32 %v898, %v910
          %v922 = vadd.f32 %v899, %v910
          %v923 = vadd.f32 %v900, %v910
          %v924 = vadd.f32 %v901, %v910
          %v925 = vadd.f32 %v902, %v910
          %v926 = vadd.f32 %v903, %v910
          %v927 = vadd.f32 %v904, %v910
          %928 = vst [vmem:[%s397] sm:$0xff] %v912
          %929 = vst [vmem:[%s397 + $0x8] sm:$0xff] %v913
          %930 = vst [vmem:[%s397 + $0x10] sm:$0xff] %v914
          %931 = vst [vmem:[%s397 + $0x18] sm:$0xff] %v915
          %932 = vst [vmem:[%s397 + $0x20] sm:$0xff] %v916
          %933 = vst [vmem:[%s397 + $0x28] sm:$0xff] %v917
          %934 = vst [vmem:[%s397 + $0x30] sm:$0xff] %v918
          %935 = vst [vmem:[%s397 + $0x38] sm:$0xff] %v919
          %936 = vst [vmem:[%s397 + $0x40] sm:$0xff] %v920
          %937 = vst [vmem:[%s397 + $0x48] sm:$0xff] %v921
          %938 = vst [vmem:[%s397 + $0x50] sm:$0xff] %v922
          %939 = vst [vmem:[%s397 + $0x58] sm:$0xff] %v923
          %940 = vst [vmem:[%s397 + $0x60] sm:$0xff] %v924
          %941 = vst [vmem:[%s397 + $0x68] sm:$0xff] %v925
          %942 = vst [vmem:[%s397 + $0x70] sm:$0xff] %v926
          %943 = vst [vmem:[%s397 + $0x78] sm:$0xff] %v927
        $region63: #{patchgan_dis_forward.9} parent=50 // pred_fallthru
          _
        %s944 = smul.u32 16, %s19
        %p945 = scmp.lt.s32.totalorder %s944, 15
        %s946 = scalar_select %p945, %s944, 15
        %p947 = scmp.lt.s32.totalorder %s20, 0
        %s948 = scalar_select %p947, %s20, 0
        %s949 = sadd.s32 %s948, %s946
        %s950 = smul.addr %s949, 8
        %s951 = scalar_lea.vmem %s3, %s950
        // Predicated region
        $region64: #{patchgan_dis_forward.9} parent=50 // pred_check
          %p952 = pneg %p135
        $region65: #{patchgan_dis_forward.9} parent=50 // pred_check_branch
          %954 = sbr.rel (%p952) target = $region67
        $region66: #{patchgan_dis_forward.9} parent=50 // pred_region
          %s955 = smul.u32 16, %s19
        $region67: #{patchgan_dis_forward.9} parent=50 // pred_fallthru
          _
        // Predicated region
        $region68: #{patchgan_dis_forward.9} parent=50 // pred_check
          %p956 = pneg %p135
        $region69: #{patchgan_dis_forward.9} parent=50 // pred_check_branch
          %958 = sbr.rel (%p956) target = $region71
        $region70: #{patchgan_dis_forward.9} parent=50 // pred_region
          %s959 = smul.u32 16, %s19
          %p960 = scmp.lt.s32.totalorder %s959, 15
          %s961 = scalar_select %p960, %s959, 15
          %p962 = scmp.lt.s32.totalorder %s20, 0
          %s963 = scalar_select %p962, %s20, 0
          %s964 = sadd.s32 %s963, %s961
          %s965 = smul.addr %s964, 8
          %s966 = scalar_lea.vmem %s3, %s965
        $region71: #{patchgan_dis_forward.9} parent=50 // pred_fallthru
          _
      $region51: #{patchgan_dis_forward.9} parent=5 // pred_fallthru
        _
      %p967 = scmp.le.s32.totalorder 2, %s9
      // Predicated region
      $region72: #{patchgan_dis_forward.9} parent=5 // pred_check
        %p968 = pneg %p967
      $region73: #{patchgan_dis_forward.9} parent=5 // pred_check_branch
        %970 = sbr.rel (%p968) target = $region75
      $region74: #{patchgan_dis_forward.9} parent=5 // pred_region
        %s971 = ssub.s32 %s9, 2
      $region75: #{patchgan_dis_forward.9} parent=5 // pred_fallthru
        _
    $region6: #{patchgan_dis_forward.9} parent=1 // loop_footer
      %s13 = sadd.s32 1, %s9
    $region7: #{patchgan_dis_forward.9} parent=1 // loop_footer_branch
      %8 = sbr.rel target = $region3
    $region8: #{patchgan_dis_forward.9} parent=1 // loop_exit
      _

// kernel: patchgan_dis_forward.12
$region0: #{patchgan_dis_forward.12}
  #allocation0 [shape = 'u32[]', space=smem, size = 0x4, offset = 0x4, fixed_abs, tag = 'smem constant byte address 0x4 - core index']
  #allocation1 [shape = 'u32[144,128]{1,0:T(1,128)}', space=vmem, size = 0x12000, scoped, tag = 'internal scratch']
  %s0 = inlined_call_operand.vmem [shape: f32[2,16,256], index: 0, kind: input, shape index: {}]
  %s1 = inlined_call_operand.vmem [shape: f32[2,16,256], index: 1, kind: output, shape index: {}]
  %s2 = sld [smem:[#allocation0]]
  $region37: #{patchgan_dis_forward.12} parent=0
    _
  %s4 = ssub.s32 1, %s2
  %s5 = scalar_select 0, %s4, %s2
  loop: start=0, step=1, limit=4
  $region2: #{patchgan_dis_forward.12} parent=0 // loop_pre_header
    _
  $region3: #{patchgan_dis_forward.12} parent=0 // loop_header
    %s7 = sphi 0, %s11
    %p8 = scmp.ge.s32.totalorder %s7, 4
    %s14 = sphi 0, %s26
    %s15 = sphi 0, %s22
    %s16 = sphi 0, %s14
    %s17 = sphi 0, %s15
    %s18 = sphi 0, %s16
    %s19 = sphi 0, %s17
    %s31 = sphi 0, %s33
    %s34 = sphi 0, %s31
    %s35 = sphi 0, %s34
    %s51 = sphi 0, %s35
    %s59 = sphi 0, %s61
    %s62 = sphi 0, %s59
    %s63 = sphi 0, %s62
    %s79 = sphi 0, %s63
  $region4: #{patchgan_dis_forward.12} parent=0 // loop_header_branch
    %10 = sbr.rel (%p8) target = $region8
  $region5: #{patchgan_dis_forward.12} parent=0 // loop_body
    %s12 = ssub.s32 %s7, 1
    %s13 = ssub.s32 %s7, 2
    %s20 = sadd.s32 1, %s15
    %p21 = scmp.ge.s32.totalorder %s20, 1
    %s22 = scalar_select %p21, 0, %s20
    %s23 = sadd.s32 1, %s14
    %s24 = scalar_select %p21, %s23, %s14
    %p25 = scmp.ge.s32.totalorder %s24, 2
    %s26 = scalar_select %p25, 0, %s24
    %s27 = ssub.s32 %s14, %s26
    %s28 = ssub.s32 %s15, %s22
    %s29 = sor.u32 %s27, %s28
    %p30 = scmp.eq.s32.totalorder %s29, 0
    %s32 = sadd.s32 %s31, 1
    %s33 = scalar_select %p30, %s31, %s32
    %p36 = pneg %p30
    %p37 = scmp.eq.s32.totalorder %s7, 1
    %p38 = por %p36, %p37
    %p39 = scmp.ne.s32.totalorder %s31, %s34
    %p40 = scmp.eq.s32.totalorder %s7, 0
    %p41 = por %p39, %p40
    %p42 = scmp.ne.s32.totalorder %s31, %s34
    %p43 = scmp.eq.s32.totalorder %s12, 1
    %p44 = por %p42, %p43
    %p45 = scmp.ne.s32.totalorder %s34, %s35
    %p46 = scmp.eq.s32.totalorder %s12, 0
    %p47 = por %p45, %p46
    %p48 = scmp.ne.s32.totalorder %s34, %s35
    %p49 = scmp.eq.s32.totalorder %s13, 1
    %p50 = por %p48, %p49
    %p52 = scmp.ne.s32.totalorder %s35, %s51
    %p53 = scmp.eq.s32.totalorder %s13, 0
    %p54 = por %p52, %p53
    %s55 = ssub.s32 %s14, %s26
    %s56 = ssub.s32 %s15, %s22
    %s57 = sor.u32 %s55, %s56
    %p58 = scmp.eq.s32.totalorder %s57, 0
    %s60 = sadd.s32 %s59, 1
    %s61 = scalar_select %p58, %s59, %s60
    %p64 = pneg %p58
    %p65 = scmp.eq.s32.totalorder %s7, 1
    %p66 = por %p64, %p65
    %p67 = scmp.ne.s32.totalorder %s59, %s62
    %p68 = scmp.eq.s32.totalorder %s7, 0
    %p69 = por %p67, %p68
    %p70 = scmp.ne.s32.totalorder %s59, %s62
    %p71 = scmp.eq.s32.totalorder %s12, 1
    %p72 = por %p70, %p71
    %p73 = scmp.ne.s32.totalorder %s62, %s63
    %p74 = scmp.eq.s32.totalorder %s12, 0
    %p75 = por %p73, %p74
    %p76 = scmp.ne.s32.totalorder %s62, %s63
    %p77 = scmp.eq.s32.totalorder %s13, 1
    %p78 = por %p76, %p77
    %p80 = scmp.ne.s32.totalorder %s63, %s79
    %p81 = scmp.eq.s32.totalorder %s13, 0
    %p82 = por %p80, %p81
    %p83 = scmp.le.s32.totalorder 1, %s7
    %p84 = scmp.lt.s32.totalorder %s7, 3
    %p85 = pnand %p83, %p84
    %p86 = pneg %p85
    // Predicated region
    $region9: #{patchgan_dis_forward.12} parent=5 // pred_check
      _
    $region10: #{patchgan_dis_forward.12} parent=5 // pred_check_branch
      %88 = sbr.rel (%p85) target = $region12
    $region11: #{patchgan_dis_forward.12} parent=5 // pred_region
      %s89 = ssub.s32 %s7, 1
    $region12: #{patchgan_dis_forward.12} parent=5 // pred_fallthru
      _
    %p90 = scmp.lt.s32.totalorder %s7, 2
    // Predicated region
    $region13: #{patchgan_dis_forward.12} parent=5 // pred_check
      %p91 = pneg %p90
    $region14: #{patchgan_dis_forward.12} parent=5 // pred_check_branch
      %93 = sbr.rel (%p91) target = $region16
    $region15: #{patchgan_dis_forward.12} parent=5 // pred_region
      // Predicated region
      $region17: #{patchgan_dis_forward.12} parent=15 // pred_check
        %p94 = pneg %p41
      $region18: #{patchgan_dis_forward.12} parent=15 // pred_check_branch
        %96 = sbr.rel (%p94) target = $region20
      $region19: #{patchgan_dis_forward.12} parent=15 // pred_region
        %s97 = smul.u32 2, %s15
        %p98 = scmp.lt.s32.totalorder %s14, 1
        %s99 = scalar_select %p98, %s14, 1
        %p100 = scmp.lt.s32.totalorder %s97, 1
        %s101 = scalar_select %p100, %s97, 1
        %s102 = smul.addr %s99, 4
        %s103 = sadd.s32 %s101, %s102
        %s104 = smul.addr %s103, 8
        %s105 = scalar_lea.vmem %s0, %s104
        %s106 = smul.u32 2, %s15
      $region20: #{patchgan_dis_forward.12} parent=15 // pred_fallthru
        _
    $region16: #{patchgan_dis_forward.12} parent=5 // pred_fallthru
      _
    %p107 = scmp.le.s32.totalorder 1, %s7
    %p108 = scmp.lt.s32.totalorder %s7, 3
    %p109 = pnand %p107, %p108
    %p110 = pneg %p109
    // Predicated region
    $region21: #{patchgan_dis_forward.12} parent=5 // pred_check
      _
    $region22: #{patchgan_dis_forward.12} parent=5 // pred_check_branch
      %112 = sbr.rel (%p109) target = $region24
    $region23: #{patchgan_dis_forward.12} parent=5 // pred_region
      %s113 = ssub.s32 %s7, 1
      %s114 = smul.u32 2, %s17
      %p115 = scmp.lt.s32.totalorder %s16, 1
      %s116 = scalar_select %p115, %s16, 1
      %p117 = scmp.lt.s32.totalorder %s114, 1
      %s118 = scalar_select %p117, %s114, 1
      %s119 = smul.addr %s116, 4
      %s120 = sadd.s32 %s118, %s119
      %s121 = smul.addr %s120, 8
      %s122 = scalar_lea.vmem %s0, %s121
      %p123 = pneg %p47
      %p124 = pneg %p44
      %p125 = pneg %p75
      %p126 = pneg %p72
      %s127 = smul.u32 2, %s17
      %p128 = scmp.lt.s32.totalorder %s16, 1
      %s129 = scalar_select %p128, %s16, 1
      %p130 = scmp.lt.s32.totalorder %s127, 1
      %s131 = scalar_select %p130, %s127, 1
      %s132 = smul.addr %s129, 4
      %s133 = sadd.s32 %s131, %s132
      %s134 = smul.addr %s133, 8
      %s135 = scalar_lea.vmem %s1, %s134
      %s136 = smul.u32 2, %s17
      %p137 = scmp.lt.s32.totalorder %s16, 1
      %s138 = scalar_select %p137, %s16, 1
      %p139 = scmp.lt.s32.totalorder %s136, 1
      %s140 = scalar_select %p139, %s136, 1
      %s141 = smul.addr %s138, 4
      %s142 = sadd.s32 %s140, %s141
      %s143 = smul.addr %s142, 8
      %s144 = scalar_lea.vmem %s0, %s143
      %s145 = smul.u32 2, %s17
      %s146 = smul.u32 2, %s17
      %p147 = scmp.lt.s32.totalorder %s16, 1
      %s148 = scalar_select %p147, %s16, 1
      %p149 = scmp.lt.s32.totalorder %s146, 1
      %s150 = scalar_select %p149, %s146, 1
      %s151 = smul.addr %s148, 4
      %s152 = sadd.s32 %s150, %s151
      %s153 = smul.addr %s152, 8
      %s154 = scalar_lea.vmem %s1, %s153
      %s155 = smul.u32 2, %s17
      %v156 = vld [vmem:[%s144] sm:$0xff]
      %v157 = vld [vmem:[%s144 + $0x8] sm:$0xff]
      %v158 = vld [vmem:[%s144 + $0x10] sm:$0xff]
      %v159 = vld [vmem:[%s144 + $0x18] sm:$0xff]
      %v160 = vadd.f32 %v156, %v158
      %v161 = vrot.slane %v160, 4
      %v162 = vadd.f32 %v160, %v161
      %v163 = vrot.slane %v162, 2
      %v164 = vadd.f32 %v162, %v163
      %v165 = vrot.slane %v164, 1
      %v166 = vadd.f32 %v164, %v165
      %v167 = vadd.f32 %v157, %v159
      %v168 = vrot.slane %v167, 4
      %v169 = vadd.f32 %v167, %v168
      %v170 = vrot.slane %v169, 2
      %v171 = vadd.f32 %v169, %v170
      %v172 = vrot.slane %v171, 1
      %v173 = vadd.f32 %v171, %v172
      %v174 = vrcp.pop 16.0
      %v175 = vmul.f32 %v166, %v174
      %v176 = vmul.f32 %v173, %v174
      %v177 = vsub.f32 %v156, %v175
      %v178 = vsub.f32 %v157, %v176
      %v179 = vsub.f32 %v158, %v175
      %v180 = vsub.f32 %v159, %v176
      %v181 = vmul.f32 %v177, %v177
      %v182 = vmul.f32 %v178, %v178
      %v183 = vmul.f32 %v179, %v179
      %v184 = vmul.f32 %v180, %v180
      %v185 = vadd.f32 %v181, %v183
      %v186 = vrot.slane %v185, 4
      %v187 = vadd.f32 %v185, %v186
      %v188 = vrot.slane %v187, 2
      %v189 = vadd.f32 %v187, %v188
      %v190 = vrot.slane %v189, 1
      %v191 = vadd.f32 %v189, %v190
      %v192 = vadd.f32 %v182, %v184
      %v193 = vrot.slane %v192, 4
      %v194 = vadd.f32 %v192, %v193
      %v195 = vrot.slane %v194, 2
      %v196 = vadd.f32 %v194, %v195
      %v197 = vrot.slane %v196, 1
      %v198 = vadd.f32 %v196, %v197
      %v199 = vmul.f32 %v191, %v174
      %v200 = vmul.f32 %v198, %v174
      %v201 = vadd.f32 %v199, 1e-05
      %v202 = vadd.f32 %v200, 1e-05
      %v203 = vrsqrt.pop %v201
      %v204 = vrsqrt.pop %v202
      %v205 = vmul.f32 %v177, %v203
      %v206 = vmul.f32 %v178, %v204
      %v207 = vmul.f32 %v179, %v203
      %v208 = vmul.f32 %v180, %v204
      %vm209 = vcmp.ge.f32.partialorder %v205, 0.0
      %vm210 = vcmp.ge.f32.partialorder %v206, 0.0
      %vm211 = vcmp.ge.f32.partialorder %v207, 0.0
      %vm212 = vcmp.ge.f32.partialorder %v208, 0.0
      %v213 = vmul.f32 %v205, 0.2
      %v214 = vmul.f32 %v206, 0.2
      %v215 = vmul.f32 %v207, 0.2
      %v216 = vmul.f32 %v208, 0.2
      %v217 = vsel %vm209, %v205, %v213
      %v218 = vsel %vm210, %v206, %v214
      %v219 = vsel %vm211, %v207, %v215
      %v220 = vsel %vm212, %v208, %v216
      %221 = vst [vmem:[%s154] sm:$0xff] %v217
      %222 = vst [vmem:[%s154 + $0x8] sm:$0xff] %v218
      %223 = vst [vmem:[%s154 + $0x10] sm:$0xff] %v219
      %224 = vst [vmem:[%s154 + $0x18] sm:$0xff] %v220
      %s225 = smul.u32 2, %s17
      %p226 = scmp.lt.s32.totalorder %s16, 1
      %s227 = scalar_select %p226, %s16, 1
      %p228 = scmp.lt.s32.totalorder %s225, 1
      %s229 = scalar_select %p228, %s225, 1
      %s230 = smul.addr %s227, 4
      %s231 = sadd.s32 %s229, %s230
      %s232 = smul.addr %s231, 8
      %s233 = scalar_lea.vmem %s1, %s232
      // Predicated region
      $region25: #{patchgan_dis_forward.12} parent=23 // pred_check
        %p234 = pneg %p72
      $region26: #{patchgan_dis_forward.12} parent=23 // pred_check_branch
        %236 = sbr.rel (%p234) target = $region28
      $region27: #{patchgan_dis_forward.12} parent=23 // pred_region
        %s237 = smul.u32 2, %s17
      $region28: #{patchgan_dis_forward.12} parent=23 // pred_fallthru
        _
    $region24: #{patchgan_dis_forward.12} parent=5 // pred_fallthru
      _
    %p238 = scmp.le.s32.totalorder 2, %s7
    // Predicated region
    $region29: #{patchgan_dis_forward.12} parent=5 // pred_check
      %p239 = pneg %p238
    $region30: #{patchgan_dis_forward.12} parent=5 // pred_check_branch
      %241 = sbr.rel (%p239) target = $region32
    $region31: #{patchgan_dis_forward.12} parent=5 // pred_region
      %s242 = ssub.s32 %s7, 2
      // Predicated region
      $region33: #{patchgan_dis_forward.12} parent=31 // pred_check
        %p243 = pneg %p78
      $region34: #{patchgan_dis_forward.12} parent=31 // pred_check_branch
        %245 = sbr.rel (%p243) target = $region36
      $region35: #{patchgan_dis_forward.12} parent=31 // pred_region
        %s246 = smul.u32 2, %s19
        %p247 = scmp.lt.s32.totalorder %s18, 1
        %s248 = scalar_select %p247, %s18, 1
        %p249 = scmp.lt.s32.totalorder %s246, 1
        %s250 = scalar_select %p249, %s246, 1
        %s251 = smul.addr %s248, 4
        %s252 = sadd.s32 %s250, %s251
        %s253 = smul.addr %s252, 8
        %s254 = scalar_lea.vmem %s1, %s253
      $region36: #{patchgan_dis_forward.12} parent=31 // pred_fallthru
        _
    $region32: #{patchgan_dis_forward.12} parent=5 // pred_fallthru
      _
  $region6: #{patchgan_dis_forward.12} parent=0 // loop_footer
    %s11 = sadd.s32 1, %s7
  $region7: #{patchgan_dis_forward.12} parent=0 // loop_footer_branch
    %6 = sbr.rel target = $region3
  $region8: #{patchgan_dis_forward.12} parent=0 // loop_exit
    _

// kernel: patchgan_dis_forward.11
$region0: #{patchgan_dis_forward.11}
  #allocation0 [shape = 'u32[]', space=smem, size = 0x4, offset = 0x4, fixed_abs, tag = 'smem constant byte address 0x4 - core index']
  #allocation1 [shape = 'u32[144,128]{1,0:T(1,128)}', space=vmem, size = 0x12000, scoped, tag = 'internal scratch']
  #allocation2 [shape = 'f32[32,256]{1,0:T(8,128)}', space=vmem, size = 0x8000, scoped, tag = 'scratch operand']
  %s0 = inlined_call_operand.vmem [shape: f32[32,2048], index: 0, kind: input, shape index: {}]
  %s1 = inlined_call_operand.vmem [shape: f32[2048,256], index: 1, kind: input, shape index: {}]
  %s2 = inlined_call_operand.vmem [shape: f32[1,256], index: 2, kind: input, shape index: {}]
  %s3 = inlined_call_operand.vmem [shape: f32[32,256], index: 3, kind: output, shape index: {}]
  %s4 = sld [smem:[#allocation0]]
  $region76: #{patchgan_dis_forward.11} parent=0
    _
  %s6 = ssub.s32 1, %s4
  %s7 = scalar_select 0, %s6, %s4
  $region1: #{patchgan_dis_forward.11} parent=0
    #allocation3 [shape = 'u8[131072]{0}', space=vmem, size = 0x20000, scoped, tag = 'input window, operand 0']
    loop: start=0, step=1, limit=6
    $region2: #{patchgan_dis_forward.11} parent=1 // loop_pre_header
      _
    $region3: #{patchgan_dis_forward.11} parent=1 // loop_header
      %s9 = sphi 0, %s13
      %p10 = scmp.ge.s32.totalorder %s9, 6
      %s16 = sphi 0, %s35
      %s17 = sphi 0, %s31
      %s18 = sphi 0, %s27
      %s19 = sphi 0, %s16
      %s20 = sphi 0, %s17
      %s21 = sphi 0, %s18
      %s22 = sphi 0, %s19
      %s23 = sphi 0, %s20
      %s24 = sphi 0, %s21
      %s40 = sphi 0, %s42
      %s43 = sphi 0, %s40
      %s44 = sphi 0, %s43
      %s60 = sphi 0, %s44
      %s68 = sphi 0, %s70
      %s71 = sphi 0, %s68
      %s72 = sphi 0, %s71
      %s88 = sphi 0, %s72
      %s94 = sphi 0, %s96
      %s97 = sphi 0, %s94
      %s98 = sphi 0, %s97
      %s114 = sphi 0, %s98
      %s122 = sphi 0, %s124
      %s125 = sphi 0, %s122
      %s126 = sphi 0, %s125
      %s142 = sphi 0, %s126
    $region4: #{patchgan_dis_forward.11} parent=1 // loop_header_branch
      %12 = sbr.rel (%p10) target = $region8
    $region5: #{patchgan_dis_forward.11} parent=1 // loop_body
      %s14 = ssub.s32 %s9, 1
      %s15 = ssub.s32 %s9, 2
      %s25 = sadd.s32 1, %s18
      %p26 = scmp.ge.s32.totalorder %s25, 4
      %s27 = scalar_select %p26, 0, %s25
      %s28 = sadd.s32 1, %s17
      %s29 = scalar_select %p26, %s28, %s17
      %p30 = scmp.ge.s32.totalorder %s29, 1
      %s31 = scalar_select %p30, 0, %s29
      %s32 = sadd.s32 1, %s16
      %s33 = scalar_select %p30, %s32, %s16
      %p34 = scmp.ge.s32.totalorder %s33, 1
      %s35 = scalar_select %p34, 0, %s33
      %s36 = ssub.s32 %s16, %s35
      %s37 = ssub.s32 %s18, %s27
      %s38 = sor.u32 %s36, %s37
      %p39 = scmp.eq.s32.totalorder %s38, 0
      %s41 = sadd.s32 %s40, 1
      %s42 = scalar_select %p39, %s40, %s41
      %p45 = pneg %p39
      %p46 = scmp.eq.s32.totalorder %s9, 3
      %p47 = por %p45, %p46
      %p48 = scmp.ne.s32.totalorder %s40, %s43
      %p49 = scmp.eq.s32.totalorder %s9, 0
      %p50 = por %p48, %p49
      %p51 = scmp.ne.s32.totalorder %s40, %s43
      %p52 = scmp.eq.s32.totalorder %s14, 3
      %p53 = por %p51, %p52
      %p54 = scmp.ne.s32.totalorder %s43, %s44
      %p55 = scmp.eq.s32.totalorder %s14, 0
      %p56 = por %p54, %p55
      %p57 = scmp.ne.s32.totalorder %s43, %s44
      %p58 = scmp.eq.s32.totalorder %s15, 3
      %p59 = por %p57, %p58
      %p61 = scmp.ne.s32.totalorder %s44, %s60
      %p62 = scmp.eq.s32.totalorder %s15, 0
      %p63 = por %p61, %p62
      %s64 = ssub.s32 %s18, %s27
      %s65 = ssub.s32 %s17, %s31
      %s66 = sor.u32 %s64, %s65
      %p67 = scmp.eq.s32.totalorder %s66, 0
      %s69 = sadd.s32 %s68, 1
      %s70 = scalar_select %p67, %s68, %s69
      %p73 = pneg %p67
      %p74 = scmp.eq.s32.totalorder %s9, 3
      %p75 = por %p73, %p74
      %p76 = scmp.ne.s32.totalorder %s68, %s71
      %p77 = scmp.eq.s32.totalorder %s9, 0
      %p78 = por %p76, %p77
      %p79 = scmp.ne.s32.totalorder %s68, %s71
      %p80 = scmp.eq.s32.totalorder %s14, 3
      %p81 = por %p79, %p80
      %p82 = scmp.ne.s32.totalorder %s71, %s72
      %p83 = scmp.eq.s32.totalorder %s14, 0
      %p84 = por %p82, %p83
      %p85 = scmp.ne.s32.totalorder %s71, %s72
      %p86 = scmp.eq.s32.totalorder %s15, 3
      %p87 = por %p85, %p86
      %p89 = scmp.ne.s32.totalorder %s72, %s88
      %p90 = scmp.eq.s32.totalorder %s15, 0
      %p91 = por %p89, %p90
      %s92 = ssub.s32 %s17, %s31
      %p93 = scmp.eq.s32.totalorder %s92, 0
      %s95 = sadd.s32 %s94, 1
      %s96 = scalar_select %p93, %s94, %s95
      %p99 = pneg %p93
      %p100 = scmp.eq.s32.totalorder %s9, 3
      %p101 = por %p99, %p100
      %p102 = scmp.ne.s32.totalorder %s94, %s97
      %p103 = scmp.eq.s32.totalorder %s9, 0
      %p104 = por %p102, %p103
      %p105 = scmp.ne.s32.totalorder %s94, %s97
      %p106 = scmp.eq.s32.totalorder %s14, 3
      %p107 = por %p105, %p106
      %p108 = scmp.ne.s32.totalorder %s97, %s98
      %p109 = scmp.eq.s32.totalorder %s14, 0
      %p110 = por %p108, %p109
      %p111 = scmp.ne.s32.totalorder %s97, %s98
      %p112 = scmp.eq.s32.totalorder %s15, 3
      %p113 = por %p111, %p112
      %p115 = scmp.ne.s32.totalorder %s98, %s114
      %p116 = scmp.eq.s32.totalorder %s15, 0
      %p117 = por %p115, %p116
      %s118 = ssub.s32 %s16, %s35
      %s119 = ssub.s32 %s17, %s31
      %s120 = sor.u32 %s118, %s119
      %p121 = scmp.eq.s32.totalorder %s120, 0
      %s123 = sadd.s32 %s122, 1
      %s124 = scalar_select %p121, %s122, %s123
      %p127 = pneg %p121
      %p128 = scmp.eq.s32.totalorder %s9, 3
      %p129 = por %p127, %p128
      %p130 = scmp.ne.s32.totalorder %s122, %s125
      %p131 = scmp.eq.s32.totalorder %s9, 0
      %p132 = por %p130, %p131
      %p133 = scmp.ne.s32.totalorder %s122, %s125
      %p134 = scmp.eq.s32.totalorder %s14, 3
      %p135 = por %p133, %p134
      %p136 = scmp.ne.s32.totalorder %s125, %s126
      %p137 = scmp.eq.s32.totalorder %s14, 0
      %p138 = por %p136, %p137
      %p139 = scmp.ne.s32.totalorder %s125, %s126
      %p140 = scmp.eq.s32.totalorder %s15, 3
      %p141 = por %p139, %p140
      %p143 = scmp.ne.s32.totalorder %s126, %s142
      %p144 = scmp.eq.s32.totalorder %s15, 0
      %p145 = por %p143, %p144
      %p146 = scmp.le.s32.totalorder 1, %s9
      %p147 = scmp.lt.s32.totalorder %s9, 5
      %p148 = pnand %p146, %p147
      %p149 = pneg %p148
      // Predicated region
      $region9: #{patchgan_dis_forward.11} parent=5 // pred_check
        _
      $region10: #{patchgan_dis_forward.11} parent=5 // pred_check_branch
        %151 = sbr.rel (%p148) target = $region12
      $region11: #{patchgan_dis_forward.11} parent=5 // pred_region
        %s152 = ssub.s32 %s9, 1
        // Predicated region
        $region13: #{patchgan_dis_forward.11} parent=11 // pred_check
          %p153 = pneg %p110
        $region14: #{patchgan_dis_forward.11} parent=11 // pred_check_branch
          %155 = sbr.rel (%p153) target = $region16
        $region15: #{patchgan_dis_forward.11} parent=11 // pred_region
          %s156 = smul.u32 2, %s20
          %p157 = scmp.lt.s32.totalorder %s156, 1
          %s158 = scalar_select %p157, %s156, 1
          %s159 = scalar_lea.vmem %s2, %s158
          %s160 = smul.u32 2, %s20
        $region16: #{patchgan_dis_forward.11} parent=11 // pred_fallthru
          _
      $region12: #{patchgan_dis_forward.11} parent=5 // pred_fallthru
        _
      %p161 = scmp.lt.s32.totalorder %s9, 4
      // Predicated region
      $region17: #{patchgan_dis_forward.11} parent=5 // pred_check
        %p162 = pneg %p161
      $region18: #{patchgan_dis_forward.11} parent=5 // pred_check_branch
        %164 = sbr.rel (%p162) target = $region20
      $region19: #{patchgan_dis_forward.11} parent=5 // pred_region
        // Predicated region
        $region21: #{patchgan_dis_forward.11} parent=19 // pred_check
          %p165 = pneg %p50
        $region22: #{patchgan_dis_forward.11} parent=19 // pred_check_branch
          %167 = sbr.rel (%p165) target = $region24
        $region23: #{patchgan_dis_forward.11} parent=19 // pred_region
          %s168 = sand.u32 %s40, 1
          %s169 = sand.u32 %s40, 1
          %s170 = smul.addr %s169, 128
          %s171 = scalar_lea.vmem [#allocation3], %s170
          %s172 = smul.u32 4, %s16
          %s173 = smul.u32 4, %s18
          %s174 = smul.addr %s172, 16
          %s175 = sadd.s32 %s173, %s174
          %s176 = smul.addr %s175, 8
          %s177 = scalar_lea.vmem %s0, %s176
          // Predicated region
          $region25: #{patchgan_dis_forward.11} parent=23 // pred_check
            _
          $region26: #{patchgan_dis_forward.11} parent=23 // pred_check_branch
            %179 = sbr.rel (0) target = $region28
          $region27: #{patchgan_dis_forward.11} parent=23 // pred_region
            // Predicated region
            $region29: #{patchgan_dis_forward.11} parent=27 // pred_check
              _
            $region30: #{patchgan_dis_forward.11} parent=27 // pred_check_branch
              %181 = sbr.rel (0) target = $region32
            $region31: #{patchgan_dis_forward.11} parent=27 // pred_region
              loop: start=0, step=1, limit=1
              $region33: #{patchgan_dis_forward.11} parent=31 // loop_pre_header
                _
              $region34: #{patchgan_dis_forward.11} parent=31 // loop_header
                %s183 = sphi 0, %s187
                %p184 = scmp.ge.s32.totalorder %s183, 1
                %s188 = sphi %s177, %s177
                %s189 = sphi %s171, %s171
              $region35: #{patchgan_dis_forward.11} parent=31 // loop_header_branch
                %186 = sbr.rel (%p184) target = $region39
              $region36: #{patchgan_dis_forward.11} parent=31 // loop_body
                %v190 = vld [vmem:[%s188] sm:$0xff]
                %191 = vst [vmem:[%s189] sm:$0xff] %v190
                %v192 = vld [vmem:[%s188 + $0x8] sm:$0xff]
                %193 = vst [vmem:[%s189 + $0x8] sm:$0xff] %v192
                %v194 = vld [vmem:[%s188 + $0x10] sm:$0xff]
                %195 = vst [vmem:[%s189 + $0x10] sm:$0xff] %v194
                %v196 = vld [vmem:[%s188 + $0x18] sm:$0xff]
                %197 = vst [vmem:[%s189 + $0x18] sm:$0xff] %v196
                %v198 = vld [vmem:[%s188 + $0x80] sm:$0xff]
                %199 = vst [vmem:[%s189 + $0x20] sm:$0xff] %v198
                %v200 = vld [vmem:[%s188 + $0x88] sm:$0xff]
                %201 = vst [vmem:[%s189 + $0x28] sm:$0xff] %v200
                %v202 = vld [vmem:[%s188 + $0x90] sm:$0xff]
                %203 = vst [vmem:[%s189 + $0x30] sm:$0xff] %v202
                %v204 = vld [vmem:[%s188 + $0x98] sm:$0xff]
                %205 = vst [vmem:[%s189 + $0x38] sm:$0xff] %v204
                %v206 = vld [vmem:[%s188 + $0x100] sm:$0xff]
                %207 = vst [vmem:[%s189 + $0x40] sm:$0xff] %v206
                %v208 = vld [vmem:[%s188 + $0x108] sm:$0xff]
                %209 = vst [vmem:[%s189 + $0x48] sm:$0xff] %v208
                %v210 = vld [vmem:[%s188 + $0x110] sm:$0xff]
                %211 = vst [vmem:[%s189 + $0x50] sm:$0xff] %v210
                %v212 = vld [vmem:[%s188 + $0x118] sm:$0xff]
                %213 = vst [vmem:[%s189 + $0x58] sm:$0xff] %v212
                %v214 = vld [vmem:[%s188 + $0x180] sm:$0xff]
                %215 = vst [vmem:[%s189 + $0x60] sm:$0xff] %v214
                %v216 = vld [vmem:[%s188 + $0x188] sm:$0xff]
                %217 = vst [vmem:[%s189 + $0x68] sm:$0xff] %v216
                %v218 = vld [vmem:[%s188 + $0x190] sm:$0xff]
                %219 = vst [vmem:[%s189 + $0x70] sm:$0xff] %v218
                %v220 = vld [vmem:[%s188 + $0x198] sm:$0xff]
                %221 = vst [vmem:[%s189 + $0x78] sm:$0xff] %v220
              $region37: #{patchgan_dis_forward.11} parent=31 // loop_footer
                %s187 = sadd.s32 1, %s183
              $region38: #{patchgan_dis_forward.11} parent=31 // loop_footer_branch
                %182 = sbr.rel target = $region34
              $region39: #{patchgan_dis_forward.11} parent=31 // loop_exit
                _
            $region32: #{patchgan_dis_forward.11} parent=27 // pred_fallthru
              _
            // Predicated region
            $region40: #{patchgan_dis_forward.11} parent=27 // pred_check
              _
            $region41: #{patchgan_dis_forward.11} parent=27 // pred_check_branch
              %223 = sbr.rel target = $region43
            $region42: #{patchgan_dis_forward.11} parent=27 // pred_region
              _
            $region43: #{patchgan_dis_forward.11} parent=27 // pred_fallthru
              _
          $region28: #{patchgan_dis_forward.11} parent=23 // pred_fallthru
            _
          %224 = vnop
        $region24: #{patchgan_dis_forward.11} parent=19 // pred_fallthru
          _
        // Predicated region
        $region44: #{patchgan_dis_forward.11} parent=19 // pred_check
          %p225 = pneg %p78
        $region45: #{patchgan_dis_forward.11} parent=19 // pred_check_branch
          %227 = sbr.rel (%p225) target = $region47
        $region46: #{patchgan_dis_forward.11} parent=19 // pred_region
          %s228 = smul.u32 64, %s18
          %s229 = smul.u32 2, %s17
          %p230 = scmp.lt.s32.totalorder %s228, 255
          %s231 = scalar_select %p230, %s228, 255
          %p232 = scmp.lt.s32.totalorder %s229, 1
          %s233 = scalar_select %p232, %s229, 1
          %s234 = smul.addr %s231, 2
          %s235 = sadd.s32 %s233, %s234
          %s236 = smul.addr %s235, 8
          %s237 = scalar_lea.vmem %s1, %s236
          %s238 = smul.u32 64, %s18
          %s239 = smul.u32 2, %s17
        $region47: #{patchgan_dis_forward.11} parent=19 // pred_fallthru
          _
      $region20: #{patchgan_dis_forward.11} parent=5 // pred_fallthru
        _
      %p240 = scmp.le.s32.totalorder 1, %s9
      %p241 = scmp.lt.s32.totalorder %s9, 5
      %p242 = pnand %p240, %p241
      %p243 = pneg %p242
      // Predicated region
      $region48: #{patchgan_dis_forward.11} parent=5 // pred_check
        _
      $region49: #{patchgan_dis_forward.11} parent=5 // pred_check_branch
        %245 = sbr.rel (%p242) target = $region51
      $region50: #{patchgan_dis_forward.11} parent=5 // pred_region
        %s246 = ssub.s32 %s9, 1
        %s247 = sand.u32 %s43, 1
        %s248 = sand.u32 %s43, 1
        %s249 = smul.addr %s248, 128
        %s250 = scalar_lea.vmem [#allocation3], %s249
        // Predicated region
        $region52: #{patchgan_dis_forward.11} parent=50 // pred_check
          %p251 = pneg %p56
        $region53: #{patchgan_dis_forward.11} parent=50 // pred_check_branch
          %253 = sbr.rel (%p251) target = $region55
        $region54: #{patchgan_dis_forward.11} parent=50 // pred_region
          _
        $region55: #{patchgan_dis_forward.11} parent=50 // pred_fallthru
          _
        %s254 = sand.u32 %s43, 1
        %s255 = sand.u32 %s43, 1
        %s256 = smul.addr %s255, 128
        %s257 = scalar_lea.vmem [#allocation3], %s256
        %p258 = pneg %p56
        %p259 = pneg %p53
        %s260 = smul.u32 64, %s21
        %s261 = smul.u32 2, %s20
        %p262 = scmp.lt.s32.totalorder %s260, 255
        %s263 = scalar_select %p262, %s260, 255
        %p264 = scmp.lt.s32.totalorder %s261, 1
        %s265 = scalar_select %p264, %s261, 1
        %s266 = smul.addr %s263, 2
        %s267 = sadd.s32 %s265, %s266
        %s268 = smul.addr %s267, 8
        %s269 = scalar_lea.vmem %s1, %s268
        %p270 = pneg %p84
        %p271 = pneg %p81
        %s272 = smul.u32 2, %s20
        %p273 = scmp.lt.s32.totalorder %s272, 1
        %s274 = scalar_select %p273, %s272, 1
        %s275 = scalar_lea.vmem %s2, %s274
        %p276 = pneg %p110
        %p277 = pneg %p107
        %p278 = pneg %p138
        %p279 = pneg %p135
        %s280 = smul.u32 4, %s19
        %s281 = smul.u32 2, %s20
        %p282 = scmp.lt.s32.totalorder %s280, 3
        %s283 = scalar_select %p282, %s280, 3
        %p284 = scmp.lt.s32.totalorder %s281, 1
        %s285 = scalar_select %p284, %s281, 1
        %s286 = smul.addr %s283, 2
        %s287 = sadd.s32 %s285, %s286
        %s288 = smul.addr %s287, 8
        %s289 = scalar_lea.vmem %s3, %s288
        %s290 = smul.u32 4, %s19
        %s291 = smul.u32 4, %s21
        %s292 = smul.u32 64, %s21
        %s293 = smul.u32 2, %s20
        %p294 = scmp.lt.s32.totalorder %s292, 255
        %s295 = scalar_select %p294, %s292, 255
        %p296 = scmp.lt.s32.totalorder %s293, 1
        %s297 = scalar_select %p296, %s293, 1
        %s298 = smul.addr %s295, 2
        %s299 = sadd.s32 %s297, %s298
        %s300 = smul.addr %s299, 8
        %s301 = scalar_lea.vmem %s1, %s300
        %s302 = smul.u32 64, %s21
        %s303 = smul.u32 2, %s20
        %s304 = smul.u32 2, %s20
        %p305 = scmp.lt.s32.totalorder %s304, 1
        %s306 = scalar_select %p305, %s304, 1
        %s307 = scalar_lea.vmem %s2, %s306
        %s308 = smul.u32 2, %s20
        %s309 = smul.u32 4, %s19
        %s310 = smul.u32 2, %s20
        %p311 = scmp.lt.s32.totalorder %s309, 3
        %s312 = scalar_select %p311, %s309, 3
        %p313 = scmp.lt.s32.totalorder %s310, 1
        %s314 = scalar_select %p313, %s310, 1
        %s315 = smul.addr %s312, 2
        %s316 = sadd.s32 %s314, %s315
        %s317 = smul.addr %s316, 8
        %s318 = scalar_lea.vmem %s3, %s317
        %s319 = smul.u32 4, %s19
        %s320 = smul.u32 2, %s20
        %p321 = scmp.eq.s32.totalorder %s21, 0
        // Predicated region
        $region56: #{patchgan_dis_forward.11} parent=50 // pred_check
          %p322 = pneg %p321
        $region57: #{patchgan_dis_forward.11} parent=50 // pred_check_branch
          %324 = sbr.rel (%p322) target = $region59
        $region58: #{patchgan_dis_forward.11} parent=50 // pred_region
          %325 = vst [vmem:[#allocation2] sm:$0xff] 0.0
          %326 = vst [vmem:[#allocation2 + $0x8] sm:$0xff] 0.0
          %327 = vst [vmem:[#allocation2 + $0x10] sm:$0xff] 0.0
          %328 = vst [vmem:[#allocation2 + $0x18] sm:$0xff] 0.0
          %329 = vst [vmem:[#allocation2 + $0x20] sm:$0xff] 0.0
          %330 = vst [vmem:[#allocation2 + $0x28] sm:$0xff] 0.0
          %331 = vst [vmem:[#allocation2 + $0x30] sm:$0xff] 0.0
          %332 = vst [vmem:[#allocation2 + $0x38] sm:$0xff] 0.0
        $region59: #{patchgan_dis_forward.11} parent=50 // pred_fallthru
          _
        %v333 = vld [vmem:[#allocation2] sm:$0xff]
        %v334 = vld [vmem:[#allocation2 + $0x8] sm:$0xff]
        %v335 = vld [vmem:[#allocation2 + $0x10] sm:$0xff]
        %v336 = vld [vmem:[#allocation2 + $0x18] sm:$0xff]
        %v337 = vld [vmem:[#allocation2 + $0x20] sm:$0xff]
        %v338 = vld [vmem:[#allocation2 + $0x28] sm:$0xff]
        %v339 = vld [vmem:[#allocation2 + $0x30] sm:$0xff]
        %v340 = vld [vmem:[#allocation2 + $0x38] sm:$0xff]
        %v341 = vld [vmem:[%s250] sm:$0xff]
        %v342 = vld [vmem:[%s250 + $0x8] sm:$0xff]
        %v343 = vld [vmem:[%s250 + $0x10] sm:$0xff]
        %v344 = vld [vmem:[%s250 + $0x18] sm:$0xff]
        %v345 = vld [vmem:[%s250 + $0x20] sm:$0xff]
        %v346 = vld [vmem:[%s250 + $0x28] sm:$0xff]
        %v347 = vld [vmem:[%s250 + $0x30] sm:$0xff]
        %v348 = vld [vmem:[%s250 + $0x38] sm:$0xff]
        %v349 = vld [vmem:[%s250 + $0x40] sm:$0xff]
        %v350 = vld [vmem:[%s250 + $0x48] sm:$0xff]
        %v351 = vld [vmem:[%s250 + $0x50] sm:$0xff]
        %v352 = vld [vmem:[%s250 + $0x58] sm:$0xff]
        %v353 = vld [vmem:[%s250 + $0x60] sm:$0xff]
        %v354 = vld [vmem:[%s250 + $0x68] sm:$0xff]
        %v355 = vld [vmem:[%s250 + $0x70] sm:$0xff]
        %v356 = vld [vmem:[%s250 + $0x78] sm:$0xff]
        %v357 = vld [vmem:[%s301] sm:$0xff]
        %v358 = vld [vmem:[%s301 + $0x8] sm:$0xff]
        %v359 = vld [vmem:[%s301 + $0x10] sm:$0xff]
        %v360 = vld [vmem:[%s301 + $0x18] sm:$0xff]
        %v361 = vld [vmem:[%s301 + $0x20] sm:$0xff]
        %v362 = vld [vmem:[%s301 + $0x28] sm:$0xff]
        %v363 = vld [vmem:[%s301 + $0x30] sm:$0xff]
        %v364 = vld [vmem:[%s301 + $0x38] sm:$0xff]
        %v365 = vld [vmem:[%s301 + $0x40] sm:$0xff]
        %v366 = vld [vmem:[%s301 + $0x48] sm:$0xff]
        %v367 = vld [vmem:[%s301 + $0x50] sm:$0xff]
        %v368 = vld [vmem:[%s301 + $0x58] sm:$0xff]
        %v369 = vld [vmem:[%s301 + $0x60] sm:$0xff]
        %v370 = vld [vmem:[%s301 + $0x68] sm:$0xff]
        %v371 = vld [vmem:[%s301 + $0x70] sm:$0xff]
        %v372 = vld [vmem:[%s301 + $0x78] sm:$0xff]
        %v373 = vld [vmem:[%s301 + $0x80] sm:$0xff]
        %v374 = vld [vmem:[%s301 + $0x88] sm:$0xff]
        %v375 = vld [vmem:[%s301 + $0x90] sm:$0xff]
        %v376 = vld [vmem:[%s301 + $0x98] sm:$0xff]
        %v377 = vld [vmem:[%s301 + $0xa0] sm:$0xff]
        %v378 = vld [vmem:[%s301 + $0xa8] sm:$0xff]
        %v379 = vld [vmem:[%s301 + $0xb0] sm:$0xff]
        %v380 = vld [vmem:[%s301 + $0xb8] sm:$0xff]
        %v381 = vld [vmem:[%s301 + $0xc0] sm:$0xff]
        %v382 = vld [vmem:[%s301 + $0xc8] sm:$0xff]
        %v383 = vld [vmem:[%s301 + $0xd0] sm:$0xff]
        %v384 = vld [vmem:[%s301 + $0xd8] sm:$0xff]
        %v385 = vld [vmem:[%s301 + $0xe0] sm:$0xff]
        %v386 = vld [vmem:[%s301 + $0xe8] sm:$0xff]
        %v387 = vld [vmem:[%s301 + $0xf0] sm:$0xff]
        %v388 = vld [vmem:[%s301 + $0xf8] sm:$0xff]
        %v389 = vld [vmem:[%s301 + $0x100] sm:$0xff]
        %v390 = vld [vmem:[%s301 + $0x108] sm:$0xff]
        %v391 = vld [vmem:[%s301 + $0x110] sm:$0xff]
        %v392 = vld [vmem:[%s301 + $0x118] sm:$0xff]
        %v393 = vld [vmem:[%s301 + $0x120] sm:$0xff]
        %v394 = vld [vmem:[%s301 + $0x128] sm:$0xff]
        %v395 = vld [vmem:[%s301 + $0x130] sm:$0xff]
        %v396 = vld [vmem:[%s301 + $0x138] sm:$0xff]
        %v397 = vld [vmem:[%s301 + $0x140] sm:$0xff]
        %v398 = vld [vmem:[%s301 + $0x148] sm:$0xff]
        %v399 = vld [vmem:[%s301 + $0x150] sm:$0xff]
        %v400 = vld [vmem:[%s301 + $0x158] sm:$0xff]
        %v401 = vld [vmem:[%s301 + $0x160] sm:$0xff]
        %v402 = vld [vmem:[%s301 + $0x168] sm:$0xff]
        %v403 = vld [vmem:[%s301 + $0x170] sm:$0xff]
        %v404 = vld [vmem:[%s301 + $0x178] sm:$0xff]
        %v405 = vld [vmem:[%s301 + $0x180] sm:$0xff]
        %v406 = vld [vmem:[%s301 + $0x188] sm:$0xff]
        %v407 = vld [vmem:[%s301 + $0x190] sm:$0xff]
        %v408 = vld [vmem:[%s301 + $0x198] sm:$0xff]
        %v409 = vld [vmem:[%s301 + $0x1a0] sm:$0xff]
        %v410 = vld [vmem:[%s301 + $0x1a8] sm:$0xff]
        %v411 = vld [vmem:[%s301 + $0x1b0] sm:$0xff]
        %v412 = vld [vmem:[%s301 + $0x1b8] sm:$0xff]
        %v413 = vld [vmem:[%s301 + $0x1c0] sm:$0xff]
        %v414 = vld [vmem:[%s301 + $0x1c8] sm:$0xff]
        %v415 = vld [vmem:[%s301 + $0x1d0] sm:$0xff]
        %v416 = vld [vmem:[%s301 + $0x1d8] sm:$0xff]
        %v417 = vld [vmem:[%s301 + $0x1e0] sm:$0xff]
        %v418 = vld [vmem:[%s301 + $0x1e8] sm:$0xff]
        %v419 = vld [vmem:[%s301 + $0x1f0] sm:$0xff]
        %v420 = vld [vmem:[%s301 + $0x1f8] sm:$0xff]
        %v421 = vld [vmem:[%s301 + $0x200] sm:$0xff]
        %v422 = vld [vmem:[%s301 + $0x208] sm:$0xff]
        %v423 = vld [vmem:[%s301 + $0x210] sm:$0xff]
        %v424 = vld [vmem:[%s301 + $0x218] sm:$0xff]
        %v425 = vld [vmem:[%s301 + $0x220] sm:$0xff]
        %v426 = vld [vmem:[%s301 + $0x228] sm:$0xff]
        %v427 = vld [vmem:[%s301 + $0x230] sm:$0xff]
        %v428 = vld [vmem:[%s301 + $0x238] sm:$0xff]
        %v429 = vld [vmem:[%s301 + $0x240] sm:$0xff]
        %v430 = vld [vmem:[%s301 + $0x248] sm:$0xff]
        %v431 = vld [vmem:[%s301 + $0x250] sm:$0xff]
        %v432 = vld [vmem:[%s301 + $0x258] sm:$0xff]
        %v433 = vld [vmem:[%s301 + $0x260] sm:$0xff]
        %v434 = vld [vmem:[%s301 + $0x268] sm:$0xff]
        %v435 = vld [vmem:[%s301 + $0x270] sm:$0xff]
        %v436 = vld [vmem:[%s301 + $0x278] sm:$0xff]
        %v437 = vld [vmem:[%s301 + $0x280] sm:$0xff]
        %v438 = vld [vmem:[%s301 + $0x288] sm:$0xff]
        %v439 = vld [vmem:[%s301 + $0x290] sm:$0xff]
        %v440 = vld [vmem:[%s301 + $0x298] sm:$0xff]
        %v441 = vld [vmem:[%s301 + $0x2a0] sm:$0xff]
        %v442 = vld [vmem:[%s301 + $0x2a8] sm:$0xff]
        %v443 = vld [vmem:[%s301 + $0x2b0] sm:$0xff]
        %v444 = vld [vmem:[%s301 + $0x2b8] sm:$0xff]
        %v445 = vld [vmem:[%s301 + $0x2c0] sm:$0xff]
        %v446 = vld [vmem:[%s301 + $0x2c8] sm:$0xff]
        %v447 = vld [vmem:[%s301 + $0x2d0] sm:$0xff]
        %v448 = vld [vmem:[%s301 + $0x2d8] sm:$0xff]
        %v449 = vld [vmem:[%s301 + $0x2e0] sm:$0xff]
        %v450 = vld [vmem:[%s301 + $0x2e8] sm:$0xff]
        %v451 = vld [vmem:[%s301 + $0x2f0] sm:$0xff]
        %v452 = vld [vmem:[%s301 + $0x2f8] sm:$0xff]
        %v453 = vld [vmem:[%s301 + $0x300] sm:$0xff]
        %v454 = vld [vmem:[%s301 + $0x308] sm:$0xff]
        %v455 = vld [vmem:[%s301 + $0x310] sm:$0xff]
        %v456 = vld [vmem:[%s301 + $0x318] sm:$0xff]
        %v457 = vld [vmem:[%s301 + $0x320] sm:$0xff]
        %v458 = vld [vmem:[%s301 + $0x328] sm:$0xff]
        %v459 = vld [vmem:[%s301 + $0x330] sm:$0xff]
        %v460 = vld [vmem:[%s301 + $0x338] sm:$0xff]
        %v461 = vld [vmem:[%s301 + $0x340] sm:$0xff]
        %v462 = vld [vmem:[%s301 + $0x348] sm:$0xff]
        %v463 = vld [vmem:[%s301 + $0x350] sm:$0xff]
        %v464 = vld [vmem:[%s301 + $0x358] sm:$0xff]
        %v465 = vld [vmem:[%s301 + $0x360] sm:$0xff]
        %v466 = vld [vmem:[%s301 + $0x368] sm:$0xff]
        %v467 = vld [vmem:[%s301 + $0x370] sm:$0xff]
        %v468 = vld [vmem:[%s301 + $0x378] sm:$0xff]
        %v469 = vld [vmem:[%s301 + $0x380] sm:$0xff]
        %v470 = vld [vmem:[%s301 + $0x388] sm:$0xff]
        %v471 = vld [vmem:[%s301 + $0x390] sm:$0xff]
        %v472 = vld [vmem:[%s301 + $0x398] sm:$0xff]
        %v473 = vld [vmem:[%s301 + $0x3a0] sm:$0xff]
        %v474 = vld [vmem:[%s301 + $0x3a8] sm:$0xff]
        %v475 = vld [vmem:[%s301 + $0x3b0] sm:$0xff]
        %v476 = vld [vmem:[%s301 + $0x3b8] sm:$0xff]
        %v477 = vld [vmem:[%s301 + $0x3c0] sm:$0xff]
        %v478 = vld [vmem:[%s301 + $0x3c8] sm:$0xff]
        %v479 = vld [vmem:[%s301 + $0x3d0] sm:$0xff]
        %v480 = vld [vmem:[%s301 + $0x3d8] sm:$0xff]
        %v481 = vld [vmem:[%s301 + $0x3e0] sm:$0xff]
        %v482 = vld [vmem:[%s301 + $0x3e8] sm:$0xff]
        %v483 = vld [vmem:[%s301 + $0x3f0] sm:$0xff]
        %v484 = vld [vmem:[%s301 + $0x3f8] sm:$0xff]
        %485 = vmatprep.subr.mxu0 %v358
        %486 = vmatpush1.msra.mxu0 %v357
        %487 = vmatprep.subr.mxu0 %v360
        %488 = vmatpush1.msra.mxu0 %v359
        %489 = vmatprep.subr.mxu0 %v362
        %490 = vmatpush1.msra.mxu0 %v361
        %491 = vmatprep.subr.mxu0 %v364
        %492 = vmatpush1.msra.mxu0 %v363
        %493 = vmatprep.subr.mxu0 %v366
        %494 = vmatpush1.msra.mxu0 %v365
        %495 = vmatprep.subr.mxu0 %v368
        %496 = vmatpush1.msra.mxu0 %v367
        %497 = vmatprep.subr.mxu0 %v370
        %498 = vmatpush1.msra.mxu0 %v369
        %499 = vmatprep.subr.mxu0 %v372
        %500 = vmatpush1.msra.mxu0 %v371
        %501 = vmatprep.subr.mxu0 %v374
        %502 = vmatpush1.msra.mxu0 %v373
        %503 = vmatprep.subr.mxu0 %v376
        %504 = vmatpush1.msra.mxu0 %v375
        %505 = vmatprep.subr.mxu0 %v378
        %506 = vmatpush1.msra.mxu0 %v377
        %507 = vmatprep.subr.mxu0 %v380
        %508 = vmatpush1.msra.mxu0 %v379
        %509 = vmatprep.subr.mxu0 %v382
        %510 = vmatpush1.msra.mxu0 %v381
        %511 = vmatprep.subr.mxu0 %v384
        %512 = vmatpush1.msra.mxu0 %v383
        %513 = vmatprep.subr.mxu0 %v386
        %514 = vmatpush1.msra.mxu0 %v385
        %515 = vmatprep.subr.mxu0 %v388
        %516 = vmatpush1.msra.mxu0 %v387
        %517 = vmatprep.subr.mxu0 %v390
        %518 = vmatpush1.msra.mxu0 %v389
        %519 = vmatprep.subr.mxu0 %v392
        %520 = vmatpush1.msra.mxu0 %v391
        %521 = vmatprep.subr.mxu0 %v394
        %522 = vmatpush1.msra.mxu0 %v393
        %523 = vmatprep.subr.mxu0 %v396
        %524 = vmatpush1.msra.mxu0 %v395
        %525 = vmatprep.subr.mxu0 %v398
        %526 = vmatpush1.msra.mxu0 %v397
        %527 = vmatprep.subr.mxu0 %v400
        %528 = vmatpush1.msra.mxu0 %v399
        %529 = vmatprep.subr.mxu0 %v402
        %530 = vmatpush1.msra.mxu0 %v401
        %531 = vmatprep.subr.mxu0 %v404
        %532 = vmatpush1.msra.mxu0 %v403
        %533 = vmatprep.subr.mxu0 %v406
        %534 = vmatpush1.msra.mxu0 %v405
        %535 = vmatprep.subr.mxu0 %v408
        %536 = vmatpush1.msra.mxu0 %v407
        %537 = vmatprep.subr.mxu0 %v410
        %538 = vmatpush1.msra.mxu0 %v409
        %539 = vmatprep.subr.mxu0 %v412
        %540 = vmatpush1.msra.mxu0 %v411
        %541 = vmatprep.subr.mxu0 %v414
        %542 = vmatpush1.msra.mxu0 %v413
        %543 = vmatprep.subr.mxu0 %v416
        %544 = vmatpush1.msra.mxu0 %v415
        %545 = vmatprep.subr.mxu0 %v418
        %546 = vmatpush1.msra.mxu0 %v417
        %547 = vmatprep.subr.mxu0 %v420
        %548 = vmatpush1.msra.mxu0 %v419
        %549 = vmatprep.mubr.f32.mxu0 %v342
        %550 = vmatmul.mubr.f32.gmra.mrb[0].mxu0 %v341
        %v551 = vpop.f32.mrb[0].mxu0
        %v552 = vadd.f32 0.0, %v551
        %v553 = vpop.f32.mrb[0].mxu0
        %v554 = vadd.f32 0.0, %v553
        %555 = vmatprep.mubr.f32.mxu0 %v346
        %556 = vmatmul.mubr.f32.gmra.mrb[0].mxu0 %v345
        %v557 = vpop.f32.mrb[0].mxu0
        %v558 = vadd.f32 0.0, %v557
        %v559 = vpop.f32.mrb[0].mxu0
        %v560 = vadd.f32 0.0, %v559
        %561 = vmatprep.mubr.f32.mxu0 %v350
        %562 = vmatmul.mubr.f32.gmra.mrb[0].mxu0 %v349
        %v563 = vpop.f32.mrb[0].mxu0
        %v564 = vadd.f32 0.0, %v563
        %v565 = vpop.f32.mrb[0].mxu0
        %v566 = vadd.f32 0.0, %v565
        %567 = vmatprep.mubr.f32.mxu0 %v354
        %568 = vmatmul.mubr.f32.gmra.mrb[0].mxu0 %v353
        %v569 = vpop.f32.mrb[0].mxu0
        %v570 = vadd.f32 0.0, %v569
        %v571 = vpop.f32.mrb[0].mxu0
        %v572 = vadd.f32 0.0, %v571
        %573 = vdwg.mxu0
        %574 = vmatprep.subr.mxu0 %v422
        %575 = vmatpush1.msra.mxu0 %v421
        %576 = vmatprep.subr.mxu0 %v424
        %577 = vmatpush1.msra.mxu0 %v423
        %578 = vmatprep.subr.mxu0 %v426
        %579 = vmatpush1.msra.mxu0 %v425
        %580 = vmatprep.subr.mxu0 %v428
        %581 = vmatpush1.msra.mxu0 %v427
        %582 = vmatprep.subr.mxu0 %v430
        %583 = vmatpush1.msra.mxu0 %v429
        %584 = vmatprep.subr.mxu0 %v432
        %585 = vmatpush1.msra.mxu0 %v431
        %586 = vmatprep.subr.mxu0 %v434
        %587 = vmatpush1.msra.mxu0 %v433
        %588 = vmatprep.subr.mxu0 %v436
        %589 = vmatpush1.msra.mxu0 %v435
        %590 = vmatprep.subr.mxu0 %v438
        %591 = vmatpush1.msra.mxu0 %v437
        %592 = vmatprep.subr.mxu0 %v440
        %593 = vmatpush1.msra.mxu0 %v439
        %594 = vmatprep.subr.mxu0 %v442
        %595 = vmatpush1.msra.mxu0 %v441
        %596 = vmatprep.subr.mxu0 %v444
        %597 = vmatpush1.msra.mxu0 %v443
        %598 = vmatprep.subr.mxu0 %v446
        %599 = vmatpush1.msra.mxu0 %v445
        %600 = vmatprep.subr.mxu0 %v448
        %601 = vmatpush1.msra.mxu0 %v447
        %602 = vmatprep.subr.mxu0 %v450
        %603 = vmatpush1.msra.mxu0 %v449
        %604 = vmatprep.subr.mxu0 %v452
        %605 = vmatpush1.msra.mxu0 %v451
        %606 = vmatprep.subr.mxu0 %v454
        %607 = vmatpush1.msra.mxu0 %v453
        %608 = vmatprep.subr.mxu0 %v456
        %609 = vmatpush1.msra.mxu0 %v455
        %610 = vmatprep.subr.mxu0 %v458
        %611 = vmatpush1.msra.mxu0 %v457
        %612 = vmatprep.subr.mxu0 %v460
        %613 = vmatpush1.msra.mxu0 %v459
        %614 = vmatprep.subr.mxu0 %v462
        %615 = vmatpush1.msra.mxu0 %v461
        %616 = vmatprep.subr.mxu0 %v464
        %617 = vmatpush1.msra.mxu0 %v463
        %618 = vmatprep.subr.mxu0 %v466
        %619 = vmatpush1.msra.mxu0 %v465
        %620 = vmatprep.subr.mxu0 %v468
        %621 = vmatpush1.msra.mxu0 %v467
        %622 = vmatprep.subr.mxu0 %v470
        %623 = vmatpush1.msra.mxu0 %v469
        %624 = vmatprep.subr.mxu0 %v472
        %625 = vmatpush1.msra.mxu0 %v471
        %626 = vmatprep.subr.mxu0 %v474
        %627 = vmatpush1.msra.mxu0 %v473
        %628 = vmatprep.subr.mxu0 %v476
        %629 = vmatpush1.msra.mxu0 %v475
        %630 = vmatprep.subr.mxu0 %v478
        %631 = vmatpush1.msra.mxu0 %v477
        %632 = vmatprep.subr.mxu0 %v480
        %633 = vmatpush1.msra.mxu0 %v479
        %634 = vmatprep.subr.mxu0 %v482
        %635 = vmatpush1.msra.mxu0 %v481
        %636 = vmatprep.subr.mxu0 %v484
        %637 = vmatpush1.msra.mxu0 %v483
        %638 = vmatprep.mubr.f32.mxu0 %v344
        %639 = vmatmul.mubr.f32.gmra.mrb[0].mxu0 %v343
        %v640 = vpop.f32.mrb[0].mxu0
        %v641 = vadd.f32 %v552, %v640
        %v642 = vpop.f32.mrb[0].mxu0
        %v643 = vadd.f32 %v554, %v642
        %644 = vmatprep.mubr.f32.mxu0 %v348
        %645 = vmatmul.mubr.f32.gmra.mrb[0].mxu0 %v347
        %v646 = vpop.f32.mrb[0].mxu0
        %v647 = vadd.f32 %v558, %v646
        %v648 = vpop.f32.mrb[0].mxu0
        %v649 = vadd.f32 %v560, %v648
        %650 = vmatprep.mubr.f32.mxu0 %v352
        %651 = vmatmul.mubr.f32.gmra.mrb[0].mxu0 %v351
        %v652 = vpop.f32.mrb[0].mxu0
        %v653 = vadd.f32 %v564, %v652
        %v654 = vpop.f32.mrb[0].mxu0
        %v655 = vadd.f32 %v566, %v654
        %656 = vmatprep.mubr.f32.mxu0 %v356
        %657 = vmatmul.mubr.f32.gmra.mrb[0].mxu0 %v355
        %v658 = vpop.f32.mrb[0].mxu0
        %v659 = vadd.f32 %v570, %v658
        %v660 = vpop.f32.mrb[0].mxu0
        %v661 = vadd.f32 %v572, %v660
        %662 = vdwg.mxu0
        %v663 = vadd.f32 %v333, %v641
        %v664 = vadd.f32 %v334, %v643
        %v665 = vadd.f32 %v335, %v647
        %v666 = vadd.f32 %v336, %v649
        %v667 = vadd.f32 %v337, %v653
        %v668 = vadd.f32 %v338, %v655
        %v669 = vadd.f32 %v339, %v659
        %v670 = vadd.f32 %v340, %v661
        %671 = vst [vmem:[#allocation2] sm:$0xff] %v663
        %672 = vst [vmem:[#allocation2 + $0x8] sm:$0xff] %v664
        %673 = vst [vmem:[#allocation2 + $0x10] sm:$0xff] %v665
        %674 = vst [vmem:[#allocation2 + $0x18] sm:$0xff] %v666
        %675 = vst [vmem:[#allocation2 + $0x20] sm:$0xff] %v667
        %676 = vst [vmem:[#allocation2 + $0x28] sm:$0xff] %v668
        %677 = vst [vmem:[#allocation2 + $0x30] sm:$0xff] %v669
        %678 = vst [vmem:[#allocation2 + $0x38] sm:$0xff] %v670
        %p679 = scmp.eq.s32.totalorder %s21, 3
        // Predicated region
        $region60: #{patchgan_dis_forward.11} parent=50 // pred_check
          %p680 = pneg %p679
        $region61: #{patchgan_dis_forward.11} parent=50 // pred_check_branch
          %682 = sbr.rel (%p680) target = $region63
        $region62: #{patchgan_dis_forward.11} parent=50 // pred_region
          %v683 = vld [vmem:[#allocation2] sm:$0xff]
          %v684 = vld [vmem:[#allocation2 + $0x8] sm:$0xff]
          %v685 = vld [vmem:[#allocation2 + $0x10] sm:$0xff]
          %v686 = vld [vmem:[#allocation2 + $0x18] sm:$0xff]
          %v687 = vld [vmem:[#allocation2 + $0x20] sm:$0xff]
          %v688 = vld [vmem:[#allocation2 + $0x28] sm:$0xff]
          %v689 = vld [vmem:[#allocation2 + $0x30] sm:$0xff]
          %v690 = vld [vmem:[#allocation2 + $0x38] sm:$0xff]
          %v691 = vld [vmem:[%s307] sm:$0x3]
          %v693 = vlaneseq
          %v694 = vshrl.u32 %v693, 7
          %v695 = vsub.s32 0, %v694
          %v696 = vrot.slane %v691, %v695
          %v697 = vlaneseq
          %v698 = vshrl.u32 %v697, 7
          %v699 = vsub.s32 1, %v698
          %v700 = vrot.slane %v691, %v699
          %v703 = vadd.f32 %v683, %v696
          %v704 = vadd.f32 %v684, %v700
          %v705 = vadd.f32 %v685, %v696
          %v706 = vadd.f32 %v686, %v700
          %v707 = vadd.f32 %v687, %v696
          %v708 = vadd.f32 %v688, %v700
          %v709 = vadd.f32 %v689, %v696
          %v710 = vadd.f32 %v690, %v700
          %711 = vst [vmem:[%s318] sm:$0xff] %v703
          %712 = vst [vmem:[%s318 + $0x8] sm:$0xff] %v704
          %713 = vst [vmem:[%s318 + $0x10] sm:$0xff] %v705
          %714 = vst [vmem:[%s318 + $0x18] sm:$0xff] %v706
          %715 = vst [vmem:[%s318 + $0x20] sm:$0xff] %v707
          %716 = vst [vmem:[%s318 + $0x28] sm:$0xff] %v708
          %717 = vst [vmem:[%s318 + $0x30] sm:$0xff] %v709
          %718 = vst [vmem:[%s318 + $0x38] sm:$0xff] %v710
        $region63: #{patchgan_dis_forward.11} parent=50 // pred_fallthru
          _
        %s719 = smul.u32 4, %s19
        %s720 = smul.u32 2, %s20
        %p721 = scmp.lt.s32.totalorder %s719, 3
        %s722 = scalar_select %p721, %s719, 3
        %p723 = scmp.lt.s32.totalorder %s720, 1
        %s724 = scalar_select %p723, %s720, 1
        %s725 = smul.addr %s722, 2
        %s726 = sadd.s32 %s724, %s725
        %s727 = smul.addr %s726, 8
        %s728 = scalar_lea.vmem %s3, %s727
        // Predicated region
        $region64: #{patchgan_dis_forward.11} parent=50 // pred_check
          %p729 = pneg %p135
        $region65: #{patchgan_dis_forward.11} parent=50 // pred_check_branch
          %731 = sbr.rel (%p729) target = $region67
        $region66: #{patchgan_dis_forward.11} parent=50 // pred_region
          %s732 = smul.u32 4, %s19
          %s733 = smul.u32 2, %s20
        $region67: #{patchgan_dis_forward.11} parent=50 // pred_fallthru
          _
        // Predicated region
        $region68: #{patchgan_dis_forward.11} parent=50 // pred_check
          %p734 = pneg %p135
        $region69: #{patchgan_dis_forward.11} parent=50 // pred_check_branch
          %736 = sbr.rel (%p734) target = $region71
        $region70: #{patchgan_dis_forward.11} parent=50 // pred_region
          %s737 = smul.u32 4, %s19
          %s738 = smul.u32 2, %s20
          %p739 = scmp.lt.s32.totalorder %s737, 3
          %s740 = scalar_select %p739, %s737, 3
          %p741 = scmp.lt.s32.totalorder %s738, 1
          %s742 = scalar_select %p741, %s738, 1
          %s743 = smul.addr %s740, 2
          %s744 = sadd.s32 %s742, %s743
          %s745 = smul.addr %s744, 8
          %s746 = scalar_lea.vmem %s3, %s745
        $region71: #{patchgan_dis_forward.11} parent=50 // pred_fallthru
          _
      $region51: #{patchgan_dis_forward.11} parent=5 // pred_fallthru
        _
      %p747 = scmp.le.s32.totalorder 2, %s9
      // Predicated region
      $region72: #{patchgan_dis_forward.11} parent=5 // pred_check
        %p748 = pneg %p747
      $region73: #{patchgan_dis_forward.11} parent=5 // pred_check_branch
        %750 = sbr.rel (%p748) target = $region75
      $region74: #{patchgan_dis_forward.11} parent=5 // pred_region
        %s751 = ssub.s32 %s9, 2
      $region75: #{patchgan_dis_forward.11} parent=5 // pred_fallthru
        _
    $region6: #{patchgan_dis_forward.11} parent=1 // loop_footer
      %s13 = sadd.s32 1, %s9
    $region7: #{patchgan_dis_forward.11} parent=1 // loop_footer_branch
      %8 = sbr.rel target = $region3
    $region8: #{patchgan_dis_forward.11} parent=1 // loop_exit
      _

// kernel: patchgan_dis_forward.14
$region0: #{patchgan_dis_forward.14}
  #allocation0 [shape = 'u32[]', space=smem, size = 0x4, offset = 0x4, fixed_abs, tag = 'smem constant byte address 0x4 - core index']
  #allocation1 [shape = 'u32[144,128]{1,0:T(1,128)}', space=vmem, size = 0x12000, scoped, tag = 'internal scratch']
  %s0 = inlined_call_operand.vmem [shape: f32[2,4,512], index: 0, kind: input, shape index: {}]
  %s1 = inlined_call_operand.vmem [shape: f32[2,4,512], index: 1, kind: output, shape index: {}]
  %s2 = sld [smem:[#allocation0]]
  $region37: #{patchgan_dis_forward.14} parent=0
    _
  %s4 = ssub.s32 1, %s2
  %s5 = scalar_select 0, %s4, %s2
  loop: start=0, step=1, limit=6
  $region2: #{patchgan_dis_forward.14} parent=0 // loop_pre_header
    _
  $region3: #{patchgan_dis_forward.14} parent=0 // loop_header
    %s7 = sphi 0, %s11
    %p8 = scmp.ge.s32.totalorder %s7, 6
    %s14 = sphi 0, %s26
    %s15 = sphi 0, %s22
    %s16 = sphi 0, %s14
    %s17 = sphi 0, %s15
    %s18 = sphi 0, %s16
    %s19 = sphi 0, %s17
    %s31 = sphi 0, %s33
    %s34 = sphi 0, %s31
    %s35 = sphi 0, %s34
    %s51 = sphi 0, %s35
    %s59 = sphi 0, %s61
    %s62 = sphi 0, %s59
    %s63 = sphi 0, %s62
    %s79 = sphi 0, %s63
  $region4: #{patchgan_dis_forward.14} parent=0 // loop_header_branch
    %10 = sbr.rel (%p8) target = $region8
  $region5: #{patchgan_dis_forward.14} parent=0 // loop_body
    %s12 = ssub.s32 %s7, 1
    %s13 = ssub.s32 %s7, 2
    %s20 = sadd.s32 1, %s15
    %p21 = scmp.ge.s32.totalorder %s20, 2
    %s22 = scalar_select %p21, 0, %s20
    %s23 = sadd.s32 1, %s14
    %s24 = scalar_select %p21, %s23, %s14
    %p25 = scmp.ge.s32.totalorder %s24, 2
    %s26 = scalar_select %p25, 0, %s24
    %s27 = ssub.s32 %s14, %s26
    %s28 = ssub.s32 %s15, %s22
    %s29 = sor.u32 %s27, %s28
    %p30 = scmp.eq.s32.totalorder %s29, 0
    %s32 = sadd.s32 %s31, 1
    %s33 = scalar_select %p30, %s31, %s32
    %p36 = pneg %p30
    %p37 = scmp.eq.s32.totalorder %s7, 3
    %p38 = por %p36, %p37
    %p39 = scmp.ne.s32.totalorder %s31, %s34
    %p40 = scmp.eq.s32.totalorder %s7, 0
    %p41 = por %p39, %p40
    %p42 = scmp.ne.s32.totalorder %s31, %s34
    %p43 = scmp.eq.s32.totalorder %s12, 3
    %p44 = por %p42, %p43
    %p45 = scmp.ne.s32.totalorder %s34, %s35
    %p46 = scmp.eq.s32.totalorder %s12, 0
    %p47 = por %p45, %p46
    %p48 = scmp.ne.s32.totalorder %s34, %s35
    %p49 = scmp.eq.s32.totalorder %s13, 3
    %p50 = por %p48, %p49
    %p52 = scmp.ne.s32.totalorder %s35, %s51
    %p53 = scmp.eq.s32.totalorder %s13, 0
    %p54 = por %p52, %p53
    %s55 = ssub.s32 %s14, %s26
    %s56 = ssub.s32 %s15, %s22
    %s57 = sor.u32 %s55, %s56
    %p58 = scmp.eq.s32.totalorder %s57, 0
    %s60 = sadd.s32 %s59, 1
    %s61 = scalar_select %p58, %s59, %s60
    %p64 = pneg %p58
    %p65 = scmp.eq.s32.totalorder %s7, 3
    %p66 = por %p64, %p65
    %p67 = scmp.ne.s32.totalorder %s59, %s62
    %p68 = scmp.eq.s32.totalorder %s7, 0
    %p69 = por %p67, %p68
    %p70 = scmp.ne.s32.totalorder %s59, %s62
    %p71 = scmp.eq.s32.totalorder %s12, 3
    %p72 = por %p70, %p71
    %p73 = scmp.ne.s32.totalorder %s62, %s63
    %p74 = scmp.eq.s32.totalorder %s12, 0
    %p75 = por %p73, %p74
    %p76 = scmp.ne.s32.totalorder %s62, %s63
    %p77 = scmp.eq.s32.totalorder %s13, 3
    %p78 = por %p76, %p77
    %p80 = scmp.ne.s32.totalorder %s63, %s79
    %p81 = scmp.eq.s32.totalorder %s13, 0
    %p82 = por %p80, %p81
    %p83 = scmp.le.s32.totalorder 1, %s7
    %p84 = scmp.lt.s32.totalorder %s7, 5
    %p85 = pnand %p83, %p84
    %p86 = pneg %p85
    // Predicated region
    $region9: #{patchgan_dis_forward.14} parent=5 // pred_check
      _
    $region10: #{patchgan_dis_forward.14} parent=5 // pred_check_branch
      %88 = sbr.rel (%p85) target = $region12
    $region11: #{patchgan_dis_forward.14} parent=5 // pred_region
      %s89 = ssub.s32 %s7, 1
    $region12: #{patchgan_dis_forward.14} parent=5 // pred_fallthru
      _
    %p90 = scmp.lt.s32.totalorder %s7, 4
    // Predicated region
    $region13: #{patchgan_dis_forward.14} parent=5 // pred_check
      %p91 = pneg %p90
    $region14: #{patchgan_dis_forward.14} parent=5 // pred_check_branch
      %93 = sbr.rel (%p91) target = $region16
    $region15: #{patchgan_dis_forward.14} parent=5 // pred_region
      // Predicated region
      $region17: #{patchgan_dis_forward.14} parent=15 // pred_check
        %p94 = pneg %p41
      $region18: #{patchgan_dis_forward.14} parent=15 // pred_check_branch
        %96 = sbr.rel (%p94) target = $region20
      $region19: #{patchgan_dis_forward.14} parent=15 // pred_region
        %s97 = smul.u32 2, %s15
        %p98 = scmp.lt.s32.totalorder %s14, 1
        %s99 = scalar_select %p98, %s14, 1
        %p100 = scmp.lt.s32.totalorder %s97, 3
        %s101 = scalar_select %p100, %s97, 3
        %s102 = smul.addr %s99, 4
        %s103 = sadd.s32 %s101, %s102
        %s104 = smul.addr %s103, 4
        %s105 = scalar_lea.vmem %s0, %s104
        %s106 = smul.u32 2, %s15
      $region20: #{patchgan_dis_forward.14} parent=15 // pred_fallthru
        _
    $region16: #{patchgan_dis_forward.14} parent=5 // pred_fallthru
      _
    %p107 = scmp.le.s32.totalorder 1, %s7
    %p108 = scmp.lt.s32.totalorder %s7, 5
    %p109 = pnand %p107, %p108
    %p110 = pneg %p109
    // Predicated region
    $region21: #{patchgan_dis_forward.14} parent=5 // pred_check
      _
    $region22: #{patchgan_dis_forward.14} parent=5 // pred_check_branch
      %112 = sbr.rel (%p109) target = $region24
    $region23: #{patchgan_dis_forward.14} parent=5 // pred_region
      %s113 = ssub.s32 %s7, 1
      %s114 = smul.u32 2, %s17
      %p115 = scmp.lt.s32.totalorder %s16, 1
      %s116 = scalar_select %p115, %s16, 1
      %p117 = scmp.lt.s32.totalorder %s114, 3
      %s118 = scalar_select %p117, %s114, 3
      %s119 = smul.addr %s116, 4
      %s120 = sadd.s32 %s118, %s119
      %s121 = smul.addr %s120, 4
      %s122 = scalar_lea.vmem %s0, %s121
      %p123 = pneg %p47
      %p124 = pneg %p44
      %p125 = pneg %p75
      %p126 = pneg %p72
      %s127 = smul.u32 2, %s17
      %p128 = scmp.lt.s32.totalorder %s16, 1
      %s129 = scalar_select %p128, %s16, 1
      %p130 = scmp.lt.s32.totalorder %s127, 3
      %s131 = scalar_select %p130, %s127, 3
      %s132 = smul.addr %s129, 4
      %s133 = sadd.s32 %s131, %s132
      %s134 = smul.addr %s133, 4
      %s135 = scalar_lea.vmem %s1, %s134
      %s136 = smul.u32 2, %s17
      %p137 = scmp.lt.s32.totalorder %s16, 1
      %s138 = scalar_select %p137, %s16, 1
      %p139 = scmp.lt.s32.totalorder %s136, 3
      %s140 = scalar_select %p139, %s136, 3
      %s141 = smul.addr %s138, 4
      %s142 = sadd.s32 %s140, %s141
      %s143 = smul.addr %s142, 4
      %s144 = scalar_lea.vmem %s0, %s143
      %s145 = smul.u32 2, %s17
      %s146 = smul.u32 2, %s17
      %p147 = scmp.lt.s32.totalorder %s16, 1
      %s148 = scalar_select %p147, %s16, 1
      %p149 = scmp.lt.s32.totalorder %s146, 3
      %s150 = scalar_select %p149, %s146, 3
      %s151 = smul.addr %s148, 4
      %s152 = sadd.s32 %s150, %s151
      %s153 = smul.addr %s152, 4
      %s154 = scalar_lea.vmem %s1, %s153
      %s155 = smul.u32 2, %s17
      %v156 = vld [vmem:[%s144] sm:$0xff]
      %v158 = vcombine.high %v156, %v156
      %vm160 = vcmask 1043456
      %v161 = vsel %vm160, %v156, 0.0
      %v162 = vrot.slane %v161, 4
      %v163 = vadd.f32 %v161, %v162
      %v164 = vrot.slane %v163, 2
      %v165 = vadd.f32 %v163, %v164
      %v166 = vrot.slane %v165, 1
      %v167 = vadd.f32 %v165, %v166
      %v168 = vsel %vm160, %v158, 0.0
      %v169 = vrot.slane %v168, 4
      %v170 = vadd.f32 %v168, %v169
      %v171 = vrot.slane %v170, 2
      %v172 = vadd.f32 %v170, %v171
      %v173 = vrot.slane %v172, 1
      %v174 = vadd.f32 %v172, %v173
      %v175 = vrcp.pop 4.0
      %v176 = vmul.f32 %v167, %v175
      %v177 = vmul.f32 %v174, %v175
      %v180 = vcombine.low %v176, %v177
      %v182 = vsub.f32 %v156, %v180
      %v183 = vmul.f32 %v182, %v182
      %v185 = vcombine.high %v183, %v183
      %v187 = vsel %vm160, %v183, 0.0
      %v188 = vrot.slane %v187, 4
      %v189 = vadd.f32 %v187, %v188
      %v190 = vrot.slane %v189, 2
      %v191 = vadd.f32 %v189, %v190
      %v192 = vrot.slane %v191, 1
      %v193 = vadd.f32 %v191, %v192
      %v194 = vsel %vm160, %v185, 0.0
      %v195 = vrot.slane %v194, 4
      %v196 = vadd.f32 %v194, %v195
      %v197 = vrot.slane %v196, 2
      %v198 = vadd.f32 %v196, %v197
      %v199 = vrot.slane %v198, 1
      %v200 = vadd.f32 %v198, %v199
      %v201 = vmul.f32 %v193, %v175
      %v202 = vmul.f32 %v200, %v175
      %v203 = vadd.f32 %v201, 1e-05
      %v204 = vadd.f32 %v202, 1e-05
      %v205 = vrsqrt.pop %v203
      %v206 = vrsqrt.pop %v204
      %v209 = vcombine.low %v205, %v206
      %v211 = vmul.f32 %v182, %v209
      %vm212 = vcmp.ge.f32.partialorder %v211, 0.0
      %v213 = vmul.f32 %v211, 0.2
      %v214 = vsel %vm212, %v211, %v213
      %215 = vst [vmem:[%s154] sm:$0xff] %v214
      %s216 = smul.u32 2, %s17
      %p217 = scmp.lt.s32.totalorder %s16, 1
      %s218 = scalar_select %p217, %s16, 1
      %p219 = scmp.lt.s32.totalorder %s216, 3
      %s220 = scalar_select %p219, %s216, 3
      %s221 = smul.addr %s218, 4
      %s222 = sadd.s32 %s220, %s221
      %s223 = smul.addr %s222, 4
      %s224 = scalar_lea.vmem %s1, %s223
      // Predicated region
      $region25: #{patchgan_dis_forward.14} parent=23 // pred_check
        %p225 = pneg %p72
      $region26: #{patchgan_dis_forward.14} parent=23 // pred_check_branch
        %227 = sbr.rel (%p225) target = $region28
      $region27: #{patchgan_dis_forward.14} parent=23 // pred_region
        %s228 = smul.u32 2, %s17
      $region28: #{patchgan_dis_forward.14} parent=23 // pred_fallthru
        _
    $region24: #{patchgan_dis_forward.14} parent=5 // pred_fallthru
      _
    %p229 = scmp.le.s32.totalorder 2, %s7
    // Predicated region
    $region29: #{patchgan_dis_forward.14} parent=5 // pred_check
      %p230 = pneg %p229
    $region30: #{patchgan_dis_forward.14} parent=5 // pred_check_branch
      %232 = sbr.rel (%p230) target = $region32
    $region31: #{patchgan_dis_forward.14} parent=5 // pred_region
      %s233 = ssub.s32 %s7, 2
      // Predicated region
      $region33: #{patchgan_dis_forward.14} parent=31 // pred_check
        %p234 = pneg %p78
      $region34: #{patchgan_dis_forward.14} parent=31 // pred_check_branch
        %236 = sbr.rel (%p234) target = $region36
      $region35: #{patchgan_dis_forward.14} parent=31 // pred_region
        %s237 = smul.u32 2, %s19
        %p238 = scmp.lt.s32.totalorder %s18, 1
        %s239 = scalar_select %p238, %s18, 1
        %p240 = scmp.lt.s32.totalorder %s237, 3
        %s241 = scalar_select %p240, %s237, 3
        %s242 = smul.addr %s239, 4
        %s243 = sadd.s32 %s241, %s242
        %s244 = smul.addr %s243, 4
        %s245 = scalar_lea.vmem %s1, %s244
      $region36: #{patchgan_dis_forward.14} parent=31 // pred_fallthru
        _
    $region32: #{patchgan_dis_forward.14} parent=5 // pred_fallthru
      _
  $region6: #{patchgan_dis_forward.14} parent=0 // loop_footer
    %s11 = sadd.s32 1, %s7
  $region7: #{patchgan_dis_forward.14} parent=0 // loop_footer_branch
    %6 = sbr.rel target = $region3
  $region8: #{patchgan_dis_forward.14} parent=0 // loop_exit
    _

// kernel: patchgan_dis_forward.13
$region0: #{patchgan_dis_forward.13}
  #allocation0 [shape = 'u32[]', space=smem, size = 0x4, offset = 0x4, fixed_abs, tag = 'smem constant byte address 0x4 - core index']
  #allocation1 [shape = 'u32[144,128]{1,0:T(1,128)}', space=vmem, size = 0x12000, scoped, tag = 'internal scratch']
  #allocation2 [shape = 'f32[8,256]{1,0:T(8,128)}', space=vmem, size = 0x2000, scoped, tag = 'scratch operand']
  %s0 = inlined_call_operand.vmem [shape: f32[8,4096], index: 0, kind: input, shape index: {}]
  %s1 = inlined_call_operand.vmem [shape: f32[4096,512], index: 1, kind: input, shape index: {}]
  %s2 = inlined_call_operand.vmem [shape: f32[1,512], index: 2, kind: input, shape index: {}]
  %s3 = inlined_call_operand.vmem [shape: f32[8,512], index: 3, kind: output, shape index: {}]
  %s4 = sld [smem:[#allocation0]]
  $region76: #{patchgan_dis_forward.13} parent=0
    _
  %s6 = ssub.s32 1, %s4
  %s7 = scalar_select 0, %s6, %s4
  $region1: #{patchgan_dis_forward.13} parent=0
    #allocation3 [shape = 'u8[1048576]{0}', space=vmem, size = 0x100000, scoped, tag = 'input window, operand 1']
    loop: start=0, step=1, limit=18
    $region2: #{patchgan_dis_forward.13} parent=1 // loop_pre_header
      _
    $region3: #{patchgan_dis_forward.13} parent=1 // loop_header
      %s9 = sphi 0, %s13
      %p10 = scmp.ge.s32.totalorder %s9, 18
      %s16 = sphi 0, %s35
      %s17 = sphi 0, %s31
      %s18 = sphi 0, %s27
      %s19 = sphi 0, %s16
      %s20 = sphi 0, %s17
      %s21 = sphi 0, %s18
      %s22 = sphi 0, %s19
      %s23 = sphi 0, %s20
      %s24 = sphi 0, %s21
      %s40 = sphi 0, %s42
      %s43 = sphi 0, %s40
      %s44 = sphi 0, %s43
      %s60 = sphi 0, %s44
      %s68 = sphi 0, %s70
      %s71 = sphi 0, %s68
      %s72 = sphi 0, %s71
      %s88 = sphi 0, %s72
      %s94 = sphi 0, %s96
      %s97 = sphi 0, %s94
      %s98 = sphi 0, %s97
      %s114 = sphi 0, %s98
      %s122 = sphi 0, %s124
      %s125 = sphi 0, %s122
      %s126 = sphi 0, %s125
      %s142 = sphi 0, %s126
    $region4: #{patchgan_dis_forward.13} parent=1 // loop_header_branch
      %12 = sbr.rel (%p10) target = $region8
    $region5: #{patchgan_dis_forward.13} parent=1 // loop_body
      %s14 = ssub.s32 %s9, 1
      %s15 = ssub.s32 %s9, 2
      %s25 = sadd.s32 1, %s18
      %p26 = scmp.ge.s32.totalorder %s25, 8
      %s27 = scalar_select %p26, 0, %s25
      %s28 = sadd.s32 1, %s17
      %s29 = scalar_select %p26, %s28, %s17
      %p30 = scmp.ge.s32.totalorder %s29, 2
      %s31 = scalar_select %p30, 0, %s29
      %s32 = sadd.s32 1, %s16
      %s33 = scalar_select %p30, %s32, %s16
      %p34 = scmp.ge.s32.totalorder %s33, 1
      %s35 = scalar_select %p34, 0, %s33
      %s36 = ssub.s32 %s16, %s35
      %s37 = ssub.s32 %s18, %s27
      %s38 = sor.u32 %s36, %s37
      %p39 = scmp.eq.s32.totalorder %s38, 0
      %s41 = sadd.s32 %s40, 1
      %s42 = scalar_select %p39, %s40, %s41
      %p45 = pneg %p39
      %p46 = scmp.eq.s32.totalorder %s9, 15
      %p47 = por %p45, %p46
      %p48 = scmp.ne.s32.totalorder %s40, %s43
      %p49 = scmp.eq.s32.totalorder %s9, 0
      %p50 = por %p48, %p49
      %p51 = scmp.ne.s32.totalorder %s40, %s43
      %p52 = scmp.eq.s32.totalorder %s14, 15
      %p53 = por %p51, %p52
      %p54 = scmp.ne.s32.totalorder %s43, %s44
      %p55 = scmp.eq.s32.totalorder %s14, 0
      %p56 = por %p54, %p55
      %p57 = scmp.ne.s32.totalorder %s43, %s44
      %p58 = scmp.eq.s32.totalorder %s15, 15
      %p59 = por %p57, %p58
      %p61 = scmp.ne.s32.totalorder %s44, %s60
      %p62 = scmp.eq.s32.totalorder %s15, 0
      %p63 = por %p61, %p62
      %s64 = ssub.s32 %s18, %s27
      %s65 = ssub.s32 %s17, %s31
      %s66 = sor.u32 %s64, %s65
      %p67 = scmp.eq.s32.totalorder %s66, 0
      %s69 = sadd.s32 %s68, 1
      %s70 = scalar_select %p67, %s68, %s69
      %p73 = pneg %p67
      %p74 = scmp.eq.s32.totalorder %s9, 15
      %p75 = por %p73, %p74
      %p76 = scmp.ne.s32.totalorder %s68, %s71
      %p77 = scmp.eq.s32.totalorder %s9, 0
      %p78 = por %p76, %p77
      %p79 = scmp.ne.s32.totalorder %s68, %s71
      %p80 = scmp.eq.s32.totalorder %s14, 15
      %p81 = por %p79, %p80
      %p82 = scmp.ne.s32.totalorder %s71, %s72
      %p83 = scmp.eq.s32.totalorder %s14, 0
      %p84 = por %p82, %p83
      %p85 = scmp.ne.s32.totalorder %s71, %s72
      %p86 = scmp.eq.s32.totalorder %s15, 15
      %p87 = por %p85, %p86
      %p89 = scmp.ne.s32.totalorder %s72, %s88
      %p90 = scmp.eq.s32.totalorder %s15, 0
      %p91 = por %p89, %p90
      %s92 = ssub.s32 %s17, %s31
      %p93 = scmp.eq.s32.totalorder %s92, 0
      %s95 = sadd.s32 %s94, 1
      %s96 = scalar_select %p93, %s94, %s95
      %p99 = pneg %p93
      %p100 = scmp.eq.s32.totalorder %s9, 15
      %p101 = por %p99, %p100
      %p102 = scmp.ne.s32.totalorder %s94, %s97
      %p103 = scmp.eq.s32.totalorder %s9, 0
      %p104 = por %p102, %p103
      %p105 = scmp.ne.s32.totalorder %s94, %s97
      %p106 = scmp.eq.s32.totalorder %s14, 15
      %p107 = por %p105, %p106
      %p108 = scmp.ne.s32.totalorder %s97, %s98
      %p109 = scmp.eq.s32.totalorder %s14, 0
      %p110 = por %p108, %p109
      %p111 = scmp.ne.s32.totalorder %s97, %s98
      %p112 = scmp.eq.s32.totalorder %s15, 15
      %p113 = por %p111, %p112
      %p115 = scmp.ne.s32.totalorder %s98, %s114
      %p116 = scmp.eq.s32.totalorder %s15, 0
      %p117 = por %p115, %p116
      %s118 = ssub.s32 %s16, %s35
      %s119 = ssub.s32 %s17, %s31
      %s120 = sor.u32 %s118, %s119
      %p121 = scmp.eq.s32.totalorder %s120, 0
      %s123 = sadd.s32 %s122, 1
      %s124 = scalar_select %p121, %s122, %s123
      %p127 = pneg %p121
      %p128 = scmp.eq.s32.totalorder %s9, 15
      %p129 = por %p127, %p128
      %p130 = scmp.ne.s32.totalorder %s122, %s125
      %p131 = scmp.eq.s32.totalorder %s9, 0
      %p132 = por %p130, %p131
      %p133 = scmp.ne.s32.totalorder %s122, %s125
      %p134 = scmp.eq.s32.totalorder %s14, 15
      %p135 = por %p133, %p134
      %p136 = scmp.ne.s32.totalorder %s125, %s126
      %p137 = scmp.eq.s32.totalorder %s14, 0
      %p138 = por %p136, %p137
      %p139 = scmp.ne.s32.totalorder %s125, %s126
      %p140 = scmp.eq.s32.totalorder %s15, 15
      %p141 = por %p139, %p140
      %p143 = scmp.ne.s32.totalorder %s126, %s142
      %p144 = scmp.eq.s32.totalorder %s15, 0
      %p145 = por %p143, %p144
      %p146 = scmp.le.s32.totalorder 1, %s9
      %p147 = scmp.lt.s32.totalorder %s9, 17
      %p148 = pnand %p146, %p147
      %p149 = pneg %p148
      // Predicated region
      $region9: #{patchgan_dis_forward.13} parent=5 // pred_check
        _
      $region10: #{patchgan_dis_forward.13} parent=5 // pred_check_branch
        %151 = sbr.rel (%p148) target = $region12
      $region11: #{patchgan_dis_forward.13} parent=5 // pred_region
        %s152 = ssub.s32 %s9, 1
      $region12: #{patchgan_dis_forward.13} parent=5 // pred_fallthru
        _
      %p153 = scmp.lt.s32.totalorder %s9, 16
      // Predicated region
      $region13: #{patchgan_dis_forward.13} parent=5 // pred_check
        %p154 = pneg %p153
      $region14: #{patchgan_dis_forward.13} parent=5 // pred_check_branch
        %156 = sbr.rel (%p154) target = $region16
      $region15: #{patchgan_dis_forward.13} parent=5 // pred_region
        // Predicated region
        $region17: #{patchgan_dis_forward.13} parent=15 // pred_check
          %p157 = pneg %p50
        $region18: #{patchgan_dis_forward.13} parent=15 // pred_check_branch
          %159 = sbr.rel (%p157) target = $region20
        $region19: #{patchgan_dis_forward.13} parent=15 // pred_region
          %s160 = smul.u32 4, %s18
          %p161 = scmp.lt.s32.totalorder %s16, 0
          %s162 = scalar_select %p161, %s16, 0
          %p163 = scmp.lt.s32.totalorder %s160, 31
          %s164 = scalar_select %p163, %s160, 31
          %s165 = smul.addr %s162, 32
          %s166 = sadd.s32 %s164, %s165
          %s167 = smul.addr %s166, 8
          %s168 = scalar_lea.vmem %s0, %s167
          %s169 = smul.u32 4, %s18
        $region20: #{patchgan_dis_forward.13} parent=15 // pred_fallthru
          _
        // Predicated region
        $region21: #{patchgan_dis_forward.13} parent=15 // pred_check
          %p170 = pneg %p78
        $region22: #{patchgan_dis_forward.13} parent=15 // pred_check_branch
          %172 = sbr.rel (%p170) target = $region24
        $region23: #{patchgan_dis_forward.13} parent=15 // pred_region
          %s173 = sand.u32 %s68, 1
          %s174 = sand.u32 %s68, 1
          %s175 = smul.addr %s174, 1024
          %s176 = scalar_lea.vmem [#allocation3], %s175
          %s177 = smul.u32 64, %s18
          %s178 = smul.u32 2, %s17
          %s179 = smul.addr %s177, 4
          %s180 = sadd.s32 %s178, %s179
          %s181 = smul.addr %s180, 8
          %s182 = scalar_lea.vmem %s1, %s181
          // Predicated region
          $region25: #{patchgan_dis_forward.13} parent=23 // pred_check
            _
          $region26: #{patchgan_dis_forward.13} parent=23 // pred_check_branch
            %184 = sbr.rel (0) target = $region28
          $region27: #{patchgan_dis_forward.13} parent=23 // pred_region
            // Predicated region
            $region29: #{patchgan_dis_forward.13} parent=27 // pred_check
              _
            $region30: #{patchgan_dis_forward.13} parent=27 // pred_check_branch
              %186 = sbr.rel (0) target = $region32
            $region31: #{patchgan_dis_forward.13} parent=27 // pred_region
              loop: start=0, step=1, limit=1
              $region33: #{patchgan_dis_forward.13} parent=31 // loop_pre_header
                _
              $region34: #{patchgan_dis_forward.13} parent=31 // loop_header
                %s188 = sphi 0, %s192
                %p189 = scmp.ge.s32.totalorder %s188, 1
                %s193 = sphi %s182, %s182
                %s194 = sphi %s176, %s176
              $region35: #{patchgan_dis_forward.13} parent=31 // loop_header_branch
                %191 = sbr.rel (%p189) target = $region39
              $region36: #{patchgan_dis_forward.13} parent=31 // loop_body
                %v195 = vld [vmem:[%s193] sm:$0xff]
                %196 = vst [vmem:[%s194] sm:$0xff] %v195
                %v197 = vld [vmem:[%s193 + $0x8] sm:$0xff]
                %198 = vst [vmem:[%s194 + $0x8] sm:$0xff] %v197
                %v199 = vld [vmem:[%s193 + $0x20] sm:$0xff]
                %200 = vst [vmem:[%s194 + $0x10] sm:$0xff] %v199
                %v201 = vld [vmem:[%s193 + $0x28] sm:$0xff]
                %202 = vst [vmem:[%s194 + $0x18] sm:$0xff] %v201
                %v203 = vld [vmem:[%s193 + $0x40] sm:$0xff]
                %204 = vst [vmem:[%s194 + $0x20] sm:$0xff] %v203
                %v205 = vld [vmem:[%s193 + $0x48] sm:$0xff]
                %206 = vst [vmem:[%s194 + $0x28] sm:$0xff] %v205
                %v207 = vld [vmem:[%s193 + $0x60] sm:$0xff]
                %208 = vst [vmem:[%s194 + $0x30] sm:$0xff] %v207
                %v209 = vld [vmem:[%s193 + $0x68] sm:$0xff]
                %210 = vst [vmem:[%s194 + $0x38] sm:$0xff] %v209
                %v211 = vld [vmem:[%s193 + $0x80] sm:$0xff]
                %212 = vst [vmem:[%s194 + $0x40] sm:$0xff] %v211
                %v213 = vld [vmem:[%s193 + $0x88] sm:$0xff]
                %214 = vst [vmem:[%s194 + $0x48] sm:$0xff] %v213
                %v215 = vld [vmem:[%s193 + $0xa0] sm:$0xff]
                %216 = vst [vmem:[%s194 + $0x50] sm:$0xff] %v215
                %v217 = vld [vmem:[%s193 + $0xa8] sm:$0xff]
                %218 = vst [vmem:[%s194 + $0x58] sm:$0xff] %v217
                %v219 = vld [vmem:[%s193 + $0xc0] sm:$0xff]
                %220 = vst [vmem:[%s194 + $0x60] sm:$0xff] %v219
                %v221 = vld [vmem:[%s193 + $0xc8] sm:$0xff]
                %222 = vst [vmem:[%s194 + $0x68] sm:$0xff] %v221
                %v223 = vld [vmem:[%s193 + $0xe0] sm:$0xff]
                %224 = vst [vmem:[%s194 + $0x70] sm:$0xff] %v223
                %v225 = vld [vmem:[%s193 + $0xe8] sm:$0xff]
                %226 = vst [vmem:[%s194 + $0x78] sm:$0xff] %v225
                %v227 = vld [vmem:[%s193 + $0x100] sm:$0xff]
                %228 = vst [vmem:[%s194 + $0x80] sm:$0xff] %v227
                %v229 = vld [vmem:[%s193 + $0x108] sm:$0xff]
                %230 = vst [vmem:[%s194 + $0x88] sm:$0xff] %v229
                %v231 = vld [vmem:[%s193 + $0x120] sm:$0xff]
                %232 = vst [vmem:[%s194 + $0x90] sm:$0xff] %v231
                %v233 = vld [vmem:[%s193 + $0x128] sm:$0xff]
                %234 = vst [vmem:[%s194 + $0x98] sm:$0xff] %v233
                %v235 = vld [vmem:[%s193 + $0x140] sm:$0xff]
                %236 = vst [vmem:[%s194 + $0xa0] sm:$0xff] %v235
                %v237 = vld [vmem:[%s193 + $0x148] sm:$0xff]
                %238 = vst [vmem:[%s194 + $0xa8] sm:$0xff] %v237
                %v239 = vld [vmem:[%s193 + $0x160] sm:$0xff]
                %240 = vst [vmem:[%s194 + $0xb0] sm:$0xff] %v239
                %v241 = vld [vmem:[%s193 + $0x168] sm:$0xff]
                %242 = vst [vmem:[%s194 + $0xb8] sm:$0xff] %v241
                %v243 = vld [vmem:[%s193 + $0x180] sm:$0xff]
                %244 = vst [vmem:[%s194 + $0xc0] sm:$0xff] %v243
                %v245 = vld [vmem:[%s193 + $0x188] sm:$0xff]
                %246 = vst [vmem:[%s194 + $0xc8] sm:$0xff] %v245
                %v247 = vld [vmem:[%s193 + $0x1a0] sm:$0xff]
                %248 = vst [vmem:[%s194 + $0xd0] sm:$0xff] %v247
                %v249 = vld [vmem:[%s193 + $0x1a8] sm:$0xff]
                %250 = vst [vmem:[%s194 + $0xd8] sm:$0xff] %v249
                %v251 = vld [vmem:[%s193 + $0x1c0] sm:$0xff]
                %252 = vst [vmem:[%s194 + $0xe0] sm:$0xff] %v251
                %v253 = vld [vmem:[%s193 + $0x1c8] sm:$0xff]
                %254 = vst [vmem:[%s194 + $0xe8] sm:$0xff] %v253
                %v255 = vld [vmem:[%s193 + $0x1e0] sm:$0xff]
                %256 = vst [vmem:[%s194 + $0xf0] sm:$0xff] %v255
                %v257 = vld [vmem:[%s193 + $0x1e8] sm:$0xff]
                %258 = vst [vmem:[%s194 + $0xf8] sm:$0xff] %v257
                %v259 = vld [vmem:[%s193 + $0x200] sm:$0xff]
                %260 = vst [vmem:[%s194 + $0x100] sm:$0xff] %v259
                %v261 = vld [vmem:[%s193 + $0x208] sm:$0xff]
                %262 = vst [vmem:[%s194 + $0x108] sm:$0xff] %v261
                %v263 = vld [vmem:[%s193 + $0x220] sm:$0xff]
                %264 = vst [vmem:[%s194 + $0x110] sm:$0xff] %v263
                %v265 = vld [vmem:[%s193 + $0x228] sm:$0xff]
                %266 = vst [vmem:[%s194 + $0x118] sm:$0xff] %v265
                %v267 = vld [vmem:[%s193 + $0x240] sm:$0xff]
                %268 = vst [vmem:[%s194 + $0x120] sm:$0xff] %v267
                %v269 = vld [vmem:[%s193 + $0x248] sm:$0xff]
                %270 = vst [vmem:[%s194 + $0x128] sm:$0xff] %v269
                %v271 = vld [vmem:[%s193 + $0x260] sm:$0xff]
                %272 = vst [vmem:[%s194 + $0x130] sm:$0xff] %v271
                %v273 = vld [vmem:[%s193 + $0x268] sm:$0xff]
                %274 = vst [vmem:[%s194 + $0x138] sm:$0xff] %v273
                %v275 = vld [vmem:[%s193 + $0x280] sm:$0xff]
                %276 = vst [vmem:[%s194 + $0x140] sm:$0xff] %v275
                %v277 = vld [vmem:[%s193 + $0x288] sm:$0xff]
                %278 = vst [vmem:[%s194 + $0x148] sm:$0xff] %v277
                %v279 = vld [vmem:[%s193 + $0x2a0] sm:$0xff]
                %280 = vst [vmem:[%s194 + $0x150] sm:$0xff] %v279
                %v281 = vld [vmem:[%s193 + $0x2a8] sm:$0xff]
                %282 = vst [vmem:[%s194 + $0x158] sm:$0xff] %v281
                %v283 = vld [vmem:[%s193 + $0x2c0] sm:$0xff]
                %284 = vst [vmem:[%s194 + $0x160] sm:$0xff] %v283
                %v285 = vld [vmem:[%s193 + $0x2c8] sm:$0xff]
                %286 = vst [vmem:[%s194 + $0x168] sm:$0xff] %v285
                %v287 = vld [vmem:[%s193 + $0x2e0] sm:$0xff]
                %288 = vst [vmem:[%s194 + $0x170] sm:$0xff] %v287
                %v289 = vld [vmem:[%s193 + $0x2e8] sm:$0xff]
                %290 = vst [vmem:[%s194 + $0x178] sm:$0xff] %v289
                %v291 = vld [vmem:[%s193 + $0x300] sm:$0xff]
                %292 = vst [vmem:[%s194 + $0x180] sm:$0xff] %v291
                %v293 = vld [vmem:[%s193 + $0x308] sm:$0xff]
                %294 = vst [vmem:[%s194 + $0x188] sm:$0xff] %v293
                %v295 = vld [vmem:[%s193 + $0x320] sm:$0xff]
                %296 = vst [vmem:[%s194 + $0x190] sm:$0xff] %v295
                %v297 = vld [vmem:[%s193 + $0x328] sm:$0xff]
                %298 = vst [vmem:[%s194 + $0x198] sm:$0xff] %v297
                %v299 = vld [vmem:[%s193 + $0x340] sm:$0xff]
                %300 = vst [vmem:[%s194 + $0x1a0] sm:$0xff] %v299
                %v301 = vld [vmem:[%s193 + $0x348] sm:$0xff]
                %302 = vst [vmem:[%s194 + $0x1a8] sm:$0xff] %v301
                %v303 = vld [vmem:[%s193 + $0x360] sm:$0xff]
                %304 = vst [vmem:[%s194 + $0x1b0] sm:$0xff] %v303
                %v305 = vld [vmem:[%s193 + $0x368] sm:$0xff]
                %306 = vst [vmem:[%s194 + $0x1b8] sm:$0xff] %v305
                %v307 = vld [vmem:[%s193 + $0x380] sm:$0xff]
                %308 = vst [vmem:[%s194 + $0x1c0] sm:$0xff] %v307
                %v309 = vld [vmem:[%s193 + $0x388] sm:$0xff]
                %310 = vst [vmem:[%s194 + $0x1c8] sm:$0xff] %v309
                %v311 = vld [vmem:[%s193 + $0x3a0] sm:$0xff]
                %312 = vst [vmem:[%s194 + $0x1d0] sm:$0xff] %v311
                %v313 = vld [vmem:[%s193 + $0x3a8] sm:$0xff]
                %314 = vst [vmem:[%s194 + $0x1d8] sm:$0xff] %v313
                %v315 = vld [vmem:[%s193 + $0x3c0] sm:$0xff]
                %316 = vst [vmem:[%s194 + $0x1e0] sm:$0xff] %v315
                %v317 = vld [vmem:[%s193 + $0x3c8] sm:$0xff]
                %318 = vst [vmem:[%s194 + $0x1e8] sm:$0xff] %v317
                %v319 = vld [vmem:[%s193 + $0x3e0] sm:$0xff]
                %320 = vst [vmem:[%s194 + $0x1f0] sm:$0xff] %v319
                %v321 = vld [vmem:[%s193 + $0x3e8] sm:$0xff]
                %322 = vst [vmem:[%s194 + $0x1f8] sm:$0xff] %v321
                %v323 = vld [vmem:[%s193 + $0x400] sm:$0xff]
                %324 = vst [vmem:[%s194 + $0x200] sm:$0xff] %v323
                %v325 = vld [vmem:[%s193 + $0x408] sm:$0xff]
                %326 = vst [vmem:[%s194 + $0x208] sm:$0xff] %v325
                %v327 = vld [vmem:[%s193 + $0x420] sm:$0xff]
                %328 = vst [vmem:[%s194 + $0x210] sm:$0xff] %v327
                %v329 = vld [vmem:[%s193 + $0x428] sm:$0xff]
                %330 = vst [vmem:[%s194 + $0x218] sm:$0xff] %v329
                %v331 = vld [vmem:[%s193 + $0x440] sm:$0xff]
                %332 = vst [vmem:[%s194 + $0x220] sm:$0xff] %v331
                %v333 = vld [vmem:[%s193 + $0x448] sm:$0xff]
                %334 = vst [vmem:[%s194 + $0x228] sm:$0xff] %v333
                %v335 = vld [vmem:[%s193 + $0x460] sm:$0xff]
                %336 = vst [vmem:[%s194 + $0x230] sm:$0xff] %v335
                %v337 = vld [vmem:[%s193 + $0x468] sm:$0xff]
                %338 = vst [vmem:[%s194 + $0x238] sm:$0xff] %v337
                %v339 = vld [vmem:[%s193 + $0x480] sm:$0xff]
                %340 = vst [vmem:[%s194 + $0x240] sm:$0xff] %v339
                %v341 = vld [vmem:[%s193 + $0x488] sm:$0xff]
                %342 = vst [vmem:[%s194 + $0x248] sm:$0xff] %v341
                %v343 = vld [vmem:[%s193 + $0x4a0] sm:$0xff]
                %344 = vst [vmem:[%s194 + $0x250] sm:$0xff] %v343
                %v345 = vld [vmem:[%s193 + $0x4a8] sm:$0xff]
                %346 = vst [vmem:[%s194 + $0x258] sm:$0xff] %v345
                %v347 = vld [vmem:[%s193 + $0x4c0] sm:$0xff]
                %348 = vst [vmem:[%s194 + $0x260] sm:$0xff] %v347
                %v349 = vld [vmem:[%s193 + $0x4c8] sm:$0xff]
                %350 = vst [vmem:[%s194 + $0x268] sm:$0xff] %v349
                %v351 = vld [vmem:[%s193 + $0x4e0] sm:$0xff]
                %352 = vst [vmem:[%s194 + $0x270] sm:$0xff] %v351
                %v353 = vld [vmem:[%s193 + $0x4e8] sm:$0xff]
                %354 = vst [vmem:[%s194 + $0x278] sm:$0xff] %v353
                %v355 = vld [vmem:[%s193 + $0x500] sm:$0xff]
                %356 = vst [vmem:[%s194 + $0x280] sm:$0xff] %v355
                %v357 = vld [vmem:[%s193 + $0x508] sm:$0xff]
                %358 = vst [vmem:[%s194 + $0x288] sm:$0xff] %v357
                %v359 = vld [vmem:[%s193 + $0x520] sm:$0xff]
                %360 = vst [vmem:[%s194 + $0x290] sm:$0xff] %v359
                %v361 = vld [vmem:[%s193 + $0x528] sm:$0xff]
                %362 = vst [vmem:[%s194 + $0x298] sm:$0xff] %v361
                %v363 = vld [vmem:[%s193 + $0x540] sm:$0xff]
                %364 = vst [vmem:[%s194 + $0x2a0] sm:$0xff] %v363
                %v365 = vld [vmem:[%s193 + $0x548] sm:$0xff]
                %366 = vst [vmem:[%s194 + $0x2a8] sm:$0xff] %v365
                %v367 = vld [vmem:[%s193 + $0x560] sm:$0xff]
                %368 = vst [vmem:[%s194 + $0x2b0] sm:$0xff] %v367
                %v369 = vld [vmem:[%s193 + $0x568] sm:$0xff]
                %370 = vst [vmem:[%s194 + $0x2b8] sm:$0xff] %v369
                %v371 = vld [vmem:[%s193 + $0x580] sm:$0xff]
                %372 = vst [vmem:[%s194 + $0x2c0] sm:$0xff] %v371
                %v373 = vld [vmem:[%s193 + $0x588] sm:$0xff]
                %374 = vst [vmem:[%s194 + $0x2c8] sm:$0xff] %v373
                %v375 = vld [vmem:[%s193 + $0x5a0] sm:$0xff]
                %376 = vst [vmem:[%s194 + $0x2d0] sm:$0xff] %v375
                %v377 = vld [vmem:[%s193 + $0x5a8] sm:$0xff]
                %378 = vst [vmem:[%s194 + $0x2d8] sm:$0xff] %v377
                %v379 = vld [vmem:[%s193 + $0x5c0] sm:$0xff]
                %380 = vst [vmem:[%s194 + $0x2e0] sm:$0xff] %v379
                %v381 = vld [vmem:[%s193 + $0x5c8] sm:$0xff]
                %382 = vst [vmem:[%s194 + $0x2e8] sm:$0xff] %v381
                %v383 = vld [vmem:[%s193 + $0x5e0] sm:$0xff]
                %384 = vst [vmem:[%s194 + $0x2f0] sm:$0xff] %v383
                %v385 = vld [vmem:[%s193 + $0x5e8] sm:$0xff]
                %386 = vst [vmem:[%s194 + $0x2f8] sm:$0xff] %v385
                %v387 = vld [vmem:[%s193 + $0x600] sm:$0xff]
                %388 = vst [vmem:[%s194 + $0x300] sm:$0xff] %v387
                %v389 = vld [vmem:[%s193 + $0x608] sm:$0xff]
                %390 = vst [vmem:[%s194 + $0x308] sm:$0xff] %v389
                %v391 = vld [vmem:[%s193 + $0x620] sm:$0xff]
                %392 = vst [vmem:[%s194 + $0x310] sm:$0xff] %v391
                %v393 = vld [vmem:[%s193 + $0x628] sm:$0xff]
                %394 = vst [vmem:[%s194 + $0x318] sm:$0xff] %v393
                %v395 = vld [vmem:[%s193 + $0x640] sm:$0xff]
                %396 = vst [vmem:[%s194 + $0x320] sm:$0xff] %v395
                %v397 = vld [vmem:[%s193 + $0x648] sm:$0xff]
                %398 = vst [vmem:[%s194 + $0x328] sm:$0xff] %v397
                %v399 = vld [vmem:[%s193 + $0x660] sm:$0xff]
                %400 = vst [vmem:[%s194 + $0x330] sm:$0xff] %v399
                %v401 = vld [vmem:[%s193 + $0x668] sm:$0xff]
                %402 = vst [vmem:[%s194 + $0x338] sm:$0xff] %v401
                %v403 = vld [vmem:[%s193 + $0x680] sm:$0xff]
                %404 = vst [vmem:[%s194 + $0x340] sm:$0xff] %v403
                %v405 = vld [vmem:[%s193 + $0x688] sm:$0xff]
                %406 = vst [vmem:[%s194 + $0x348] sm:$0xff] %v405
                %v407 = vld [vmem:[%s193 + $0x6a0] sm:$0xff]
                %408 = vst [vmem:[%s194 + $0x350] sm:$0xff] %v407
                %v409 = vld [vmem:[%s193 + $0x6a8] sm:$0xff]
                %410 = vst [vmem:[%s194 + $0x358] sm:$0xff] %v409
                %v411 = vld [vmem:[%s193 + $0x6c0] sm:$0xff]
                %412 = vst [vmem:[%s194 + $0x360] sm:$0xff] %v411
                %v413 = vld [vmem:[%s193 + $0x6c8] sm:$0xff]
                %414 = vst [vmem:[%s194 + $0x368] sm:$0xff] %v413
                %v415 = vld [vmem:[%s193 + $0x6e0] sm:$0xff]
                %416 = vst [vmem:[%s194 + $0x370] sm:$0xff] %v415
                %v417 = vld [vmem:[%s193 + $0x6e8] sm:$0xff]
                %418 = vst [vmem:[%s194 + $0x378] sm:$0xff] %v417
                %v419 = vld [vmem:[%s193 + $0x700] sm:$0xff]
                %420 = vst [vmem:[%s194 + $0x380] sm:$0xff] %v419
                %v421 = vld [vmem:[%s193 + $0x708] sm:$0xff]
                %422 = vst [vmem:[%s194 + $0x388] sm:$0xff] %v421
                %v423 = vld [vmem:[%s193 + $0x720] sm:$0xff]
                %424 = vst [vmem:[%s194 + $0x390] sm:$0xff] %v423
                %v425 = vld [vmem:[%s193 + $0x728] sm:$0xff]
                %426 = vst [vmem:[%s194 + $0x398] sm:$0xff] %v425
                %v427 = vld [vmem:[%s193 + $0x740] sm:$0xff]
                %428 = vst [vmem:[%s194 + $0x3a0] sm:$0xff] %v427
                %v429 = vld [vmem:[%s193 + $0x748] sm:$0xff]
                %430 = vst [vmem:[%s194 + $0x3a8] sm:$0xff] %v429
                %v431 = vld [vmem:[%s193 + $0x760] sm:$0xff]
                %432 = vst [vmem:[%s194 + $0x3b0] sm:$0xff] %v431
                %v433 = vld [vmem:[%s193 + $0x768] sm:$0xff]
                %434 = vst [vmem:[%s194 + $0x3b8] sm:$0xff] %v433
                %v435 = vld [vmem:[%s193 + $0x780] sm:$0xff]
                %436 = vst [vmem:[%s194 + $0x3c0] sm:$0xff] %v435
                %v437 = vld [vmem:[%s193 + $0x788] sm:$0xff]
                %438 = vst [vmem:[%s194 + $0x3c8] sm:$0xff] %v437
                %v439 = vld [vmem:[%s193 + $0x7a0] sm:$0xff]
                %440 = vst [vmem:[%s194 + $0x3d0] sm:$0xff] %v439
                %v441 = vld [vmem:[%s193 + $0x7a8] sm:$0xff]
                %442 = vst [vmem:[%s194 + $0x3d8] sm:$0xff] %v441
                %v443 = vld [vmem:[%s193 + $0x7c0] sm:$0xff]
                %444 = vst [vmem:[%s194 + $0x3e0] sm:$0xff] %v443
                %v445 = vld [vmem:[%s193 + $0x7c8] sm:$0xff]
                %446 = vst [vmem:[%s194 + $0x3e8] sm:$0xff] %v445
                %v447 = vld [vmem:[%s193 + $0x7e0] sm:$0xff]
                %448 = vst [vmem:[%s194 + $0x3f0] sm:$0xff] %v447
                %v449 = vld [vmem:[%s193 + $0x7e8] sm:$0xff]
                %450 = vst [vmem:[%s194 + $0x3f8] sm:$0xff] %v449
              $region37: #{patchgan_dis_forward.13} parent=31 // loop_footer
                %s192 = sadd.s32 1, %s188
              $region38: #{patchgan_dis_forward.13} parent=31 // loop_footer_branch
                %187 = sbr.rel target = $region34
              $region39: #{patchgan_dis_forward.13} parent=31 // loop_exit
                _
            $region32: #{patchgan_dis_forward.13} parent=27 // pred_fallthru
              _
            // Predicated region
            $region40: #{patchgan_dis_forward.13} parent=27 // pred_check
              _
            $region41: #{patchgan_dis_forward.13} parent=27 // pred_check_branch
              %452 = sbr.rel target = $region43
            $region42: #{patchgan_dis_forward.13} parent=27 // pred_region
              _
            $region43: #{patchgan_dis_forward.13} parent=27 // pred_fallthru
              _
          $region28: #{patchgan_dis_forward.13} parent=23 // pred_fallthru
            _
          %453 = vnop
        $region24: #{patchgan_dis_forward.13} parent=15 // pred_fallthru
          _
        // Predicated region
        $region44: #{patchgan_dis_forward.13} parent=15 // pred_check
          %p454 = pneg %p104
        $region45: #{patchgan_dis_forward.13} parent=15 // pred_check_branch
          %456 = sbr.rel (%p454) target = $region47
        $region46: #{patchgan_dis_forward.13} parent=15 // pred_region
          %s457 = smul.u32 2, %s17
          %p458 = scmp.lt.s32.totalorder %s457, 3
          %s459 = scalar_select %p458, %s457, 3
          %s460 = scalar_lea.vmem %s2, %s459
          %s461 = smul.u32 2, %s17
        $region47: #{patchgan_dis_forward.13} parent=15 // pred_fallthru
          _
      $region16: #{patchgan_dis_forward.13} parent=5 // pred_fallthru
        _
      %p462 = scmp.le.s32.totalorder 1, %s9
      %p463 = scmp.lt.s32.totalorder %s9, 17
      %p464 = pnand %p462, %p463
      %p465 = pneg %p464
      // Predicated region
      $region48: #{patchgan_dis_forward.13} parent=5 // pred_check
        _
      $region49: #{patchgan_dis_forward.13} parent=5 // pred_check_branch
        %467 = sbr.rel (%p464) target = $region51
      $region50: #{patchgan_dis_forward.13} parent=5 // pred_region
        %s468 = ssub.s32 %s9, 1
        %s469 = sand.u32 %s71, 1
        %s470 = sand.u32 %s71, 1
        %s471 = smul.addr %s470, 1024
        %s472 = scalar_lea.vmem [#allocation3], %s471
        // Predicated region
        $region52: #{patchgan_dis_forward.13} parent=50 // pred_check
          %p473 = pneg %p84
        $region53: #{patchgan_dis_forward.13} parent=50 // pred_check_branch
          %475 = sbr.rel (%p473) target = $region55
        $region54: #{patchgan_dis_forward.13} parent=50 // pred_region
          _
        $region55: #{patchgan_dis_forward.13} parent=50 // pred_fallthru
          _
        %s476 = smul.u32 4, %s21
        %p477 = scmp.lt.s32.totalorder %s19, 0
        %s478 = scalar_select %p477, %s19, 0
        %p479 = scmp.lt.s32.totalorder %s476, 31
        %s480 = scalar_select %p479, %s476, 31
        %s481 = smul.addr %s478, 32
        %s482 = sadd.s32 %s480, %s481
        %s483 = smul.addr %s482, 8
        %s484 = scalar_lea.vmem %s0, %s483
        %p485 = pneg %p56
        %p486 = pneg %p53
        %s487 = sand.u32 %s71, 1
        %s488 = sand.u32 %s71, 1
        %s489 = smul.addr %s488, 1024
        %s490 = scalar_lea.vmem [#allocation3], %s489
        %p491 = pneg %p84
        %p492 = pneg %p81
        %s493 = smul.u32 2, %s20
        %p494 = scmp.lt.s32.totalorder %s493, 3
        %s495 = scalar_select %p494, %s493, 3
        %s496 = scalar_lea.vmem %s2, %s495
        %p497 = pneg %p110
        %p498 = pneg %p107
        %p499 = pneg %p138
        %p500 = pneg %p135
        %s501 = smul.u32 2, %s20
        %p502 = scmp.lt.s32.totalorder %s19, 0
        %s503 = scalar_select %p502, %s19, 0
        %p504 = scmp.lt.s32.totalorder %s501, 3
        %s505 = scalar_select %p504, %s501, 3
        %s506 = smul.addr %s503, 4
        %s507 = sadd.s32 %s505, %s506
        %s508 = smul.addr %s507, 8
        %s509 = scalar_lea.vmem %s3, %s508
        %s510 = smul.u32 4, %s21
        %p511 = scmp.lt.s32.totalorder %s19, 0
        %s512 = scalar_select %p511, %s19, 0
        %p513 = scmp.lt.s32.totalorder %s510, 31
        %s514 = scalar_select %p513, %s510, 31
        %s515 = smul.addr %s512, 32
        %s516 = sadd.s32 %s514, %s515
        %s517 = smul.addr %s516, 8
        %s518 = scalar_lea.vmem %s0, %s517
        %s519 = smul.u32 4, %s21
        %s520 = smul.u32 64, %s21
        %s521 = smul.u32 2, %s20
        %s522 = smul.u32 2, %s20
        %p523 = scmp.lt.s32.totalorder %s522, 3
        %s524 = scalar_select %p523, %s522, 3
        %s525 = scalar_lea.vmem %s2, %s524
        %s526 = smul.u32 2, %s20
        %s527 = smul.u32 2, %s20
        %p528 = scmp.lt.s32.totalorder %s19, 0
        %s529 = scalar_select %p528, %s19, 0
        %p530 = scmp.lt.s32.totalorder %s527, 3
        %s531 = scalar_select %p530, %s527, 3
        %s532 = smul.addr %s529, 4
        %s533 = sadd.s32 %s531, %s532
        %s534 = smul.addr %s533, 8
        %s535 = scalar_lea.vmem %s3, %s534
        %s536 = smul.u32 2, %s20
        %p537 = scmp.eq.s32.totalorder %s21, 0
        // Predicated region
        $region56: #{patchgan_dis_forward.13} parent=50 // pred_check
          %p538 = pneg %p537
        $region57: #{patchgan_dis_forward.13} parent=50 // pred_check_branch
          %540 = sbr.rel (%p538) target = $region59
        $region58: #{patchgan_dis_forward.13} parent=50 // pred_region
          %541 = vst [vmem:[#allocation2] sm:$0xff] 0.0
          %542 = vst [vmem:[#allocation2 + $0x8] sm:$0xff] 0.0
        $region59: #{patchgan_dis_forward.13} parent=50 // pred_fallthru
          _
        %v543 = vld [vmem:[#allocation2] sm:$0xff]
        %v544 = vld [vmem:[#allocation2 + $0x8] sm:$0xff]
        %v545 = vld [vmem:[%s518] sm:$0xff]
        %v546 = vld [vmem:[%s518 + $0x8] sm:$0xff]
        %v547 = vld [vmem:[%s518 + $0x10] sm:$0xff]
        %v548 = vld [vmem:[%s518 + $0x18] sm:$0xff]
        %v549 = vld [vmem:[%s472] sm:$0xff]
        %v550 = vld [vmem:[%s472 + $0x8] sm:$0xff]
        %v551 = vld [vmem:[%s472 + $0x10] sm:$0xff]
        %v552 = vld [vmem:[%s472 + $0x18] sm:$0xff]
        %v553 = vld [vmem:[%s472 + $0x20] sm:$0xff]
        %v554 = vld [vmem:[%s472 + $0x28] sm:$0xff]
        %v555 = vld [vmem:[%s472 + $0x30] sm:$0xff]
        %v556 = vld [vmem:[%s472 + $0x38] sm:$0xff]
        %v557 = vld [vmem:[%s472 + $0x40] sm:$0xff]
        %v558 = vld [vmem:[%s472 + $0x48] sm:$0xff]
        %v559 = vld [vmem:[%s472 + $0x50] sm:$0xff]
        %v560 = vld [vmem:[%s472 + $0x58] sm:$0xff]
        %v561 = vld [vmem:[%s472 + $0x60] sm:$0xff]
        %v562 = vld [vmem:[%s472 + $0x68] sm:$0xff]
        %v563 = vld [vmem:[%s472 + $0x70] sm:$0xff]
        %v564 = vld [vmem:[%s472 + $0x78] sm:$0xff]
        %v565 = vld [vmem:[%s472 + $0x80] sm:$0xff]
        %v566 = vld [vmem:[%s472 + $0x88] sm:$0xff]
        %v567 = vld [vmem:[%s472 + $0x90] sm:$0xff]
        %v568 = vld [vmem:[%s472 + $0x98] sm:$0xff]
        %v569 = vld [vmem:[%s472 + $0xa0] sm:$0xff]
        %v570 = vld [vmem:[%s472 + $0xa8] sm:$0xff]
        %v571 = vld [vmem:[%s472 + $0xb0] sm:$0xff]
        %v572 = vld [vmem:[%s472 + $0xb8] sm:$0xff]
        %v573 = vld [vmem:[%s472 + $0xc0] sm:$0xff]
        %v574 = vld [vmem:[%s472 + $0xc8] sm:$0xff]
        %v575 = vld [vmem:[%s472 + $0xd0] sm:$0xff]
        %v576 = vld [vmem:[%s472 + $0xd8] sm:$0xff]
        %v577 = vld [vmem:[%s472 + $0xe0] sm:$0xff]
        %v578 = vld [vmem:[%s472 + $0xe8] sm:$0xff]
        %v579 = vld [vmem:[%s472 + $0xf0] sm:$0xff]
        %v580 = vld [vmem:[%s472 + $0xf8] sm:$0xff]
        %v581 = vld [vmem:[%s472 + $0x100] sm:$0xff]
        %v582 = vld [vmem:[%s472 + $0x108] sm:$0xff]
        %v583 = vld [vmem:[%s472 + $0x110] sm:$0xff]
        %v584 = vld [vmem:[%s472 + $0x118] sm:$0xff]
        %v585 = vld [vmem:[%s472 + $0x120] sm:$0xff]
        %v586 = vld [vmem:[%s472 + $0x128] sm:$0xff]
        %v587 = vld [vmem:[%s472 + $0x130] sm:$0xff]
        %v588 = vld [vmem:[%s472 + $0x138] sm:$0xff]
        %v589 = vld [vmem:[%s472 + $0x140] sm:$0xff]
        %v590 = vld [vmem:[%s472 + $0x148] sm:$0xff]
        %v591 = vld [vmem:[%s472 + $0x150] sm:$0xff]
        %v592 = vld [vmem:[%s472 + $0x158] sm:$0xff]
        %v593 = vld [vmem:[%s472 + $0x160] sm:$0xff]
        %v594 = vld [vmem:[%s472 + $0x168] sm:$0xff]
        %v595 = vld [vmem:[%s472 + $0x170] sm:$0xff]
        %v596 = vld [vmem:[%s472 + $0x178] sm:$0xff]
        %v597 = vld [vmem:[%s472 + $0x180] sm:$0xff]
        %v598 = vld [vmem:[%s472 + $0x188] sm:$0xff]
        %v599 = vld [vmem:[%s472 + $0x190] sm:$0xff]
        %v600 = vld [vmem:[%s472 + $0x198] sm:$0xff]
        %v601 = vld [vmem:[%s472 + $0x1a0] sm:$0xff]
        %v602 = vld [vmem:[%s472 + $0x1a8] sm:$0xff]
        %v603 = vld [vmem:[%s472 + $0x1b0] sm:$0xff]
        %v604 = vld [vmem:[%s472 + $0x1b8] sm:$0xff]
        %v605 = vld [vmem:[%s472 + $0x1c0] sm:$0xff]
        %v606 = vld [vmem:[%s472 + $0x1c8] sm:$0xff]
        %v607 = vld [vmem:[%s472 + $0x1d0] sm:$0xff]
        %v608 = vld [vmem:[%s472 + $0x1d8] sm:$0xff]
        %v609 = vld [vmem:[%s472 + $0x1e0] sm:$0xff]
        %v610 = vld [vmem:[%s472 + $0x1e8] sm:$0xff]
        %v611 = vld [vmem:[%s472 + $0x1f0] sm:$0xff]
        %v612 = vld [vmem:[%s472 + $0x1f8] sm:$0xff]
        %v613 = vld [vmem:[%s472 + $0x200] sm:$0xff]
        %v614 = vld [vmem:[%s472 + $0x208] sm:$0xff]
        %v615 = vld [vmem:[%s472 + $0x210] sm:$0xff]
        %v616 = vld [vmem:[%s472 + $0x218] sm:$0xff]
        %v617 = vld [vmem:[%s472 + $0x220] sm:$0xff]
        %v618 = vld [vmem:[%s472 + $0x228] sm:$0xff]
        %v619 = vld [vmem:[%s472 + $0x230] sm:$0xff]
        %v620 = vld [vmem:[%s472 + $0x238] sm:$0xff]
        %v621 = vld [vmem:[%s472 + $0x240] sm:$0xff]
        %v622 = vld [vmem:[%s472 + $0x248] sm:$0xff]
        %v623 = vld [vmem:[%s472 + $0x250] sm:$0xff]
        %v624 = vld [vmem:[%s472 + $0x258] sm:$0xff]
        %v625 = vld [vmem:[%s472 + $0x260] sm:$0xff]
        %v626 = vld [vmem:[%s472 + $0x268] sm:$0xff]
        %v627 = vld [vmem:[%s472 + $0x270] sm:$0xff]
        %v628 = vld [vmem:[%s472 + $0x278] sm:$0xff]
        %v629 = vld [vmem:[%s472 + $0x280] sm:$0xff]
        %v630 = vld [vmem:[%s472 + $0x288] sm:$0xff]
        %v631 = vld [vmem:[%s472 + $0x290] sm:$0xff]
        %v632 = vld [vmem:[%s472 + $0x298] sm:$0xff]
        %v633 = vld [vmem:[%s472 + $0x2a0] sm:$0xff]
        %v634 = vld [vmem:[%s472 + $0x2a8] sm:$0xff]
        %v635 = vld [vmem:[%s472 + $0x2b0] sm:$0xff]
        %v636 = vld [vmem:[%s472 + $0x2b8] sm:$0xff]
        %v637 = vld [vmem:[%s472 + $0x2c0] sm:$0xff]
        %v638 = vld [vmem:[%s472 + $0x2c8] sm:$0xff]
        %v639 = vld [vmem:[%s472 + $0x2d0] sm:$0xff]
        %v640 = vld [vmem:[%s472 + $0x2d8] sm:$0xff]
        %v641 = vld [vmem:[%s472 + $0x2e0] sm:$0xff]
        %v642 = vld [vmem:[%s472 + $0x2e8] sm:$0xff]
        %v643 = vld [vmem:[%s472 + $0x2f0] sm:$0xff]
        %v644 = vld [vmem:[%s472 + $0x2f8] sm:$0xff]
        %v645 = vld [vmem:[%s472 + $0x300] sm:$0xff]
        %v646 = vld [vmem:[%s472 + $0x308] sm:$0xff]
        %v647 = vld [vmem:[%s472 + $0x310] sm:$0xff]
        %v648 = vld [vmem:[%s472 + $0x318] sm:$0xff]
        %v649 = vld [vmem:[%s472 + $0x320] sm:$0xff]
        %v650 = vld [vmem:[%s472 + $0x328] sm:$0xff]
        %v651 = vld [vmem:[%s472 + $0x330] sm:$0xff]
        %v652 = vld [vmem:[%s472 + $0x338] sm:$0xff]
        %v653 = vld [vmem:[%s472 + $0x340] sm:$0xff]
        %v654 = vld [vmem:[%s472 + $0x348] sm:$0xff]
        %v655 = vld [vmem:[%s472 + $0x350] sm:$0xff]
        %v656 = vld [vmem:[%s472 + $0x358] sm:$0xff]
        %v657 = vld [vmem:[%s472 + $0x360] sm:$0xff]
        %v658 = vld [vmem:[%s472 + $0x368] sm:$0xff]
        %v659 = vld [vmem:[%s472 + $0x370] sm:$0xff]
        %v660 = vld [vmem:[%s472 + $0x378] sm:$0xff]
        %v661 = vld [vmem:[%s472 + $0x380] sm:$0xff]
        %v662 = vld [vmem:[%s472 + $0x388] sm:$0xff]
        %v663 = vld [vmem:[%s472 + $0x390] sm:$0xff]
        %v664 = vld [vmem:[%s472 + $0x398] sm:$0xff]
        %v665 = vld [vmem:[%s472 + $0x3a0] sm:$0xff]
        %v666 = vld [vmem:[%s472 + $0x3a8] sm:$0xff]
        %v667 = vld [vmem:[%s472 + $0x3b0] sm:$0xff]
        %v668 = vld [vmem:[%s472 + $0x3b8] sm:$0xff]
        %v669 = vld [vmem:[%s472 + $0x3c0] sm:$0xff]
        %v670 = vld [vmem:[%s472 + $0x3c8] sm:$0xff]
        %v671 = vld [vmem:[%s472 + $0x3d0] sm:$0xff]
        %v672 = vld [vmem:[%s472 + $0x3d8] sm:$0xff]
        %v673 = vld [vmem:[%s472 + $0x3e0] sm:$0xff]
        %v674 = vld [vmem:[%s472 + $0x3e8] sm:$0xff]
        %v675 = vld [vmem:[%s472 + $0x3f0] sm:$0xff]
        %v676 = vld [vmem:[%s472 + $0x3f8] sm:$0xff]
        %677 = vmatprep.subr.mxu0 %v550
        %678 = vmatpush1.msra.mxu0 %v549
        %679 = vmatprep.subr.mxu0 %v552
        %680 = vmatpush1.msra.mxu0 %v551
        %681 = vmatprep.subr.mxu0 %v554
        %682 = vmatpush1.msra.mxu0 %v553
        %683 = vmatprep.subr.mxu0 %v556
        %684 = vmatpush1.msra.mxu0 %v555
        %685 = vmatprep.subr.mxu0 %v558
        %686 = vmatpush1.msra.mxu0 %v557
        %687 = vmatprep.subr.mxu0 %v560
        %688 = vmatpush1.msra.mxu0 %v559
        %689 = vmatprep.subr.mxu0 %v562
        %690 = vmatpush1.msra.mxu0 %v561
        %691 = vmatprep.subr.mxu0 %v564
        %692 = vmatpush1.msra.mxu0 %v563
        %693 = vmatprep.subr.mxu0 %v566
        %694 = vmatpush1.msra.mxu0 %v565
        %695 = vmatprep.subr.mxu0 %v568
        %696 = vmatpush1.msra.mxu0 %v567
        %697 = vmatprep.subr.mxu0 %v570
        %698 = vmatpush1.msra.mxu0 %v569
        %699 = vmatprep.subr.mxu0 %v572
        %700 = vmatpush1.msra.mxu0 %v571
        %701 = vmatprep.subr.mxu0 %v574
        %702 = vmatpush1.msra.mxu0 %v573
        %703 = vmatprep.subr.mxu0 %v576
        %704 = vmatpush1.msra.mxu0 %v575
        %705 = vmatprep.subr.mxu0 %v578
        %706 = vmatpush1.msra.mxu0 %v577
        %707 = vmatprep.subr.mxu0 %v580
        %708 = vmatpush1.msra.mxu0 %v579
        %709 = vmatprep.subr.mxu0 %v582
        %710 = vmatpush1.msra.mxu0 %v581
        %711 = vmatprep.subr.mxu0 %v584
        %712 = vmatpush1.msra.mxu0 %v583
        %713 = vmatprep.subr.mxu0 %v586
        %714 = vmatpush1.msra.mxu0 %v585
        %715 = vmatprep.subr.mxu0 %v588
        %716 = vmatpush1.msra.mxu0 %v587
        %717 = vmatprep.subr.mxu0 %v590
        %718 = vmatpush1.msra.mxu0 %v589
        %719 = vmatprep.subr.mxu0 %v592
        %720 = vmatpush1.msra.mxu0 %v591
        %721 = vmatprep.subr.mxu0 %v594
        %722 = vmatpush1.msra.mxu0 %v593
        %723 = vmatprep.subr.mxu0 %v596
        %724 = vmatpush1.msra.mxu0 %v595
        %725 = vmatprep.subr.mxu0 %v598
        %726 = vmatpush1.msra.mxu0 %v597
        %727 = vmatprep.subr.mxu0 %v600
        %728 = vmatpush1.msra.mxu0 %v599
        %729 = vmatprep.subr.mxu0 %v602
        %730 = vmatpush1.msra.mxu0 %v601
        %731 = vmatprep.subr.mxu0 %v604
        %732 = vmatpush1.msra.mxu0 %v603
        %733 = vmatprep.subr.mxu0 %v606
        %734 = vmatpush1.msra.mxu0 %v605
        %735 = vmatprep.subr.mxu0 %v608
        %736 = vmatpush1.msra.mxu0 %v607
        %737 = vmatprep.subr.mxu0 %v610
        %738 = vmatpush1.msra.mxu0 %v609
        %739 = vmatprep.subr.mxu0 %v612
        %740 = vmatpush1.msra.mxu0 %v611
        %741 = vmatprep.mubr.f32.mxu0 %v546
        %742 = vmatmul.mubr.f32.gmra.mrb[0].mxu0 %v545
        %v743 = vpop.f32.mrb[0].mxu0
        %v744 = vadd.f32 0.0, %v743
        %v745 = vpop.f32.mrb[0].mxu0
        %v746 = vadd.f32 0.0, %v745
        %747 = vdwg.mxu0
        %748 = vmatprep.subr.mxu0 %v614
        %749 = vmatpush1.msra.mxu0 %v613
        %750 = vmatprep.subr.mxu0 %v616
        %751 = vmatpush1.msra.mxu0 %v615
        %752 = vmatprep.subr.mxu0 %v618
        %753 = vmatpush1.msra.mxu0 %v617
        %754 = vmatprep.subr.mxu0 %v620
        %755 = vmatpush1.msra.mxu0 %v619
        %756 = vmatprep.subr.mxu0 %v622
        %757 = vmatpush1.msra.mxu0 %v621
        %758 = vmatprep.subr.mxu0 %v624
        %759 = vmatpush1.msra.mxu0 %v623
        %760 = vmatprep.subr.mxu0 %v626
        %761 = vmatpush1.msra.mxu0 %v625
        %762 = vmatprep.subr.mxu0 %v628
        %763 = vmatpush1.msra.mxu0 %v627
        %764 = vmatprep.subr.mxu0 %v630
        %765 = vmatpush1.msra.mxu0 %v629
        %766 = vmatprep.subr.mxu0 %v632
        %767 = vmatpush1.msra.mxu0 %v631
        %768 = vmatprep.subr.mxu0 %v634
        %769 = vmatpush1.msra.mxu0 %v633
        %770 = vmatprep.subr.mxu0 %v636
        %771 = vmatpush1.msra.mxu0 %v635
        %772 = vmatprep.subr.mxu0 %v638
        %773 = vmatpush1.msra.mxu0 %v637
        %774 = vmatprep.subr.mxu0 %v640
        %775 = vmatpush1.msra.mxu0 %v639
        %776 = vmatprep.subr.mxu0 %v642
        %777 = vmatpush1.msra.mxu0 %v641
        %778 = vmatprep.subr.mxu0 %v644
        %779 = vmatpush1.msra.mxu0 %v643
        %780 = vmatprep.subr.mxu0 %v646
        %781 = vmatpush1.msra.mxu0 %v645
        %782 = vmatprep.subr.mxu0 %v648
        %783 = vmatpush1.msra.mxu0 %v647
        %784 = vmatprep.subr.mxu0 %v650
        %785 = vmatpush1.msra.mxu0 %v649
        %786 = vmatprep.subr.mxu0 %v652
        %787 = vmatpush1.msra.mxu0 %v651
        %788 = vmatprep.subr.mxu0 %v654
        %789 = vmatpush1.msra.mxu0 %v653
        %790 = vmatprep.subr.mxu0 %v656
        %791 = vmatpush1.msra.mxu0 %v655
        %792 = vmatprep.subr.mxu0 %v658
        %793 = vmatpush1.msra.mxu0 %v657
        %794 = vmatprep.subr.mxu0 %v660
        %795 = vmatpush1.msra.mxu0 %v659
        %796 = vmatprep.subr.mxu0 %v662
        %797 = vmatpush1.msra.mxu0 %v661
        %798 = vmatprep.subr.mxu0 %v664
        %799 = vmatpush1.msra.mxu0 %v663
        %800 = vmatprep.subr.mxu0 %v666
        %801 = vmatpush1.msra.mxu0 %v665
        %802 = vmatprep.subr.mxu0 %v668
        %803 = vmatpush1.msra.mxu0 %v667
        %804 = vmatprep.subr.mxu0 %v670
        %805 = vmatpush1.msra.mxu0 %v669
        %806 = vmatprep.subr.mxu0 %v672
        %807 = vmatpush1.msra.mxu0 %v671
        %808 = vmatprep.subr.mxu0 %v674
        %809 = vmatpush1.msra.mxu0 %v673
        %810 = vmatprep.subr.mxu0 %v676
        %811 = vmatpush1.msra.mxu0 %v675
        %812 = vmatprep.mubr.f32.mxu0 %v548
        %813 = vmatmul.mubr.f32.gmra.mrb[0].mxu0 %v547
        %v814 = vpop.f32.mrb[0].mxu0
        %v815 = vadd.f32 %v744, %v814
        %v816 = vpop.f32.mrb[0].mxu0
        %v817 = vadd.f32 %v746, %v816
        %818 = vdwg.mxu0
        %v819 = vadd.f32 %v543, %v815
        %v820 = vadd.f32 %v544, %v817
        %821 = vst [vmem:[#allocation2] sm:$0xff] %v819
        %822 = vst [vmem:[#allocation2 + $0x8] sm:$0xff] %v820
        %p823 = scmp.eq.s32.totalorder %s21, 7
        // Predicated region
        $region60: #{patchgan_dis_forward.13} parent=50 // pred_check
          %p824 = pneg %p823
        $region61: #{patchgan_dis_forward.13} parent=50 // pred_check_branch
          %826 = sbr.rel (%p824) target = $region63
        $region62: #{patchgan_dis_forward.13} parent=50 // pred_region
          %v827 = vld [vmem:[#allocation2] sm:$0xff]
          %v828 = vld [vmem:[#allocation2 + $0x8] sm:$0xff]
          %v829 = vld [vmem:[%s525] sm:$0x3]
          %v831 = vlaneseq
          %v832 = vshrl.u32 %v831, 7
          %v833 = vsub.s32 0, %v832
          %v834 = vrot.slane %v829, %v833
          %v835 = vlaneseq
          %v836 = vshrl.u32 %v835, 7
          %v837 = vsub.s32 1, %v836
          %v838 = vrot.slane %v829, %v837
          %v841 = vadd.f32 %v827, %v834
          %v842 = vadd.f32 %v828, %v838
          %843 = vst [vmem:[%s535] sm:$0xff] %v841
          %844 = vst [vmem:[%s535 + $0x8] sm:$0xff] %v842
        $region63: #{patchgan_dis_forward.13} parent=50 // pred_fallthru
          _
        %s845 = smul.u32 2, %s20
        %p846 = scmp.lt.s32.totalorder %s19, 0
        %s847 = scalar_select %p846, %s19, 0
        %p848 = scmp.lt.s32.totalorder %s845, 3
        %s849 = scalar_select %p848, %s845, 3
        %s850 = smul.addr %s847, 4
        %s851 = sadd.s32 %s849, %s850
        %s852 = smul.addr %s851, 8
        %s853 = scalar_lea.vmem %s3, %s852
        // Predicated region
        $region64: #{patchgan_dis_forward.13} parent=50 // pred_check
          %p854 = pneg %p135
        $region65: #{patchgan_dis_forward.13} parent=50 // pred_check_branch
          %856 = sbr.rel (%p854) target = $region67
        $region66: #{patchgan_dis_forward.13} parent=50 // pred_region
          %s857 = smul.u32 2, %s20
        $region67: #{patchgan_dis_forward.13} parent=50 // pred_fallthru
          _
      $region51: #{patchgan_dis_forward.13} parent=5 // pred_fallthru
        _
      %p858 = scmp.le.s32.totalorder 2, %s9
      // Predicated region
      $region68: #{patchgan_dis_forward.13} parent=5 // pred_check
        %p859 = pneg %p858
      $region69: #{patchgan_dis_forward.13} parent=5 // pred_check_branch
        %861 = sbr.rel (%p859) target = $region71
      $region70: #{patchgan_dis_forward.13} parent=5 // pred_region
        %s862 = ssub.s32 %s9, 2
        // Predicated region
        $region72: #{patchgan_dis_forward.13} parent=70 // pred_check
          %p863 = pneg %p141
        $region73: #{patchgan_dis_forward.13} parent=70 // pred_check_branch
          %865 = sbr.rel (%p863) target = $region75
        $region74: #{patchgan_dis_forward.13} parent=70 // pred_region
          %s866 = smul.u32 2, %s23
          %p867 = scmp.lt.s32.totalorder %s22, 0
          %s868 = scalar_select %p867, %s22, 0
          %p869 = scmp.lt.s32.totalorder %s866, 3
          %s870 = scalar_select %p869, %s866, 3
          %s871 = smul.addr %s868, 4
          %s872 = sadd.s32 %s870, %s871
          %s873 = smul.addr %s872, 8
          %s874 = scalar_lea.vmem %s3, %s873
        $region75: #{patchgan_dis_forward.13} parent=70 // pred_fallthru
          _
      $region71: #{patchgan_dis_forward.13} parent=5 // pred_fallthru
        _
    $region6: #{patchgan_dis_forward.13} parent=1 // loop_footer
      %s13 = sadd.s32 1, %s9
    $region7: #{patchgan_dis_forward.13} parent=1 // loop_footer_branch
      %8 = sbr.rel target = $region3
    $region8: #{patchgan_dis_forward.13} parent=1 // loop_exit
      _

// kernel: patchgan_dis_forward.15
$region0: #{patchgan_dis_forward.15}
  #allocation0 [shape = 'u32[]', space=smem, size = 0x4, offset = 0x4, fixed_abs, tag = 'smem constant byte address 0x4 - core index']
  #allocation1 [shape = 'u32[144,128]{1,0:T(1,128)}', space=vmem, size = 0x12000, scoped, tag = 'internal scratch']
  #allocation2 [shape = 'f32[8,128]{1,0:T(8,128)}', space=vmem, size = 0x1000, scoped, tag = 'scratch operand']
  %s0 = inlined_call_operand.vmem [shape: f32[8,8192], index: 0, kind: input, shape index: {}]
  %s1 = inlined_call_operand.vmem [shape: f32[8192,128], index: 1, kind: input, shape index: {}]
  %s2 = inlined_call_operand.vmem [shape: f32[1,128], index: 2, kind: input, shape index: {}]
  %s3 = inlined_call_operand.vmem [shape: f32[8,128], index: 3, kind: output, shape index: {}]
  %s4 = sld [smem:[#allocation0]]
  $region53: #{patchgan_dis_forward.15} parent=0
    _
  %s6 = ssub.s32 1, %s4
  %s7 = scalar_select 0, %s6, %s4
  loop: start=0, step=1, limit=18
  $region2: #{patchgan_dis_forward.15} parent=0 // loop_pre_header
    _
  $region3: #{patchgan_dis_forward.15} parent=0 // loop_header
    %s9 = sphi 0, %s13
    %p10 = scmp.ge.s32.totalorder %s9, 18
    %s16 = sphi 0, %s35
    %s17 = sphi 0, %s31
    %s18 = sphi 0, %s27
    %s19 = sphi 0, %s16
    %s20 = sphi 0, %s17
    %s21 = sphi 0, %s18
    %s22 = sphi 0, %s19
    %s23 = sphi 0, %s20
    %s24 = sphi 0, %s21
    %s40 = sphi 0, %s42
    %s43 = sphi 0, %s40
    %s44 = sphi 0, %s43
    %s60 = sphi 0, %s44
    %s68 = sphi 0, %s70
    %s71 = sphi 0, %s68
    %s72 = sphi 0, %s71
    %s88 = sphi 0, %s72
    %s94 = sphi 0, %s96
    %s97 = sphi 0, %s94
    %s98 = sphi 0, %s97
    %s114 = sphi 0, %s98
    %s122 = sphi 0, %s124
    %s125 = sphi 0, %s122
    %s126 = sphi 0, %s125
    %s142 = sphi 0, %s126
  $region4: #{patchgan_dis_forward.15} parent=0 // loop_header_branch
    %12 = sbr.rel (%p10) target = $region8
  $region5: #{patchgan_dis_forward.15} parent=0 // loop_body
    %s14 = ssub.s32 %s9, 1
    %s15 = ssub.s32 %s9, 2
    %s25 = sadd.s32 1, %s18
    %p26 = scmp.ge.s32.totalorder %s25, 16
    %s27 = scalar_select %p26, 0, %s25
    %s28 = sadd.s32 1, %s17
    %s29 = scalar_select %p26, %s28, %s17
    %p30 = scmp.ge.s32.totalorder %s29, 1
    %s31 = scalar_select %p30, 0, %s29
    %s32 = sadd.s32 1, %s16
    %s33 = scalar_select %p30, %s32, %s16
    %p34 = scmp.ge.s32.totalorder %s33, 1
    %s35 = scalar_select %p34, 0, %s33
    %s36 = ssub.s32 %s16, %s35
    %s37 = ssub.s32 %s18, %s27
    %s38 = sor.u32 %s36, %s37
    %p39 = scmp.eq.s32.totalorder %s38, 0
    %s41 = sadd.s32 %s40, 1
    %s42 = scalar_select %p39, %s40, %s41
    %p45 = pneg %p39
    %p46 = scmp.eq.s32.totalorder %s9, 15
    %p47 = por %p45, %p46
    %p48 = scmp.ne.s32.totalorder %s40, %s43
    %p49 = scmp.eq.s32.totalorder %s9, 0
    %p50 = por %p48, %p49
    %p51 = scmp.ne.s32.totalorder %s40, %s43
    %p52 = scmp.eq.s32.totalorder %s14, 15
    %p53 = por %p51, %p52
    %p54 = scmp.ne.s32.totalorder %s43, %s44
    %p55 = scmp.eq.s32.totalorder %s14, 0
    %p56 = por %p54, %p55
    %p57 = scmp.ne.s32.totalorder %s43, %s44
    %p58 = scmp.eq.s32.totalorder %s15, 15
    %p59 = por %p57, %p58
    %p61 = scmp.ne.s32.totalorder %s44, %s60
    %p62 = scmp.eq.s32.totalorder %s15, 0
    %p63 = por %p61, %p62
    %s64 = ssub.s32 %s18, %s27
    %s65 = ssub.s32 %s17, %s31
    %s66 = sor.u32 %s64, %s65
    %p67 = scmp.eq.s32.totalorder %s66, 0
    %s69 = sadd.s32 %s68, 1
    %s70 = scalar_select %p67, %s68, %s69
    %p73 = pneg %p67
    %p74 = scmp.eq.s32.totalorder %s9, 15
    %p75 = por %p73, %p74
    %p76 = scmp.ne.s32.totalorder %s68, %s71
    %p77 = scmp.eq.s32.totalorder %s9, 0
    %p78 = por %p76, %p77
    %p79 = scmp.ne.s32.totalorder %s68, %s71
    %p80 = scmp.eq.s32.totalorder %s14, 15
    %p81 = por %p79, %p80
    %p82 = scmp.ne.s32.totalorder %s71, %s72
    %p83 = scmp.eq.s32.totalorder %s14, 0
    %p84 = por %p82, %p83
    %p85 = scmp.ne.s32.totalorder %s71, %s72
    %p86 = scmp.eq.s32.totalorder %s15, 15
    %p87 = por %p85, %p86
    %p89 = scmp.ne.s32.totalorder %s72, %s88
    %p90 = scmp.eq.s32.totalorder %s15, 0
    %p91 = por %p89, %p90
    %s92 = ssub.s32 %s17, %s31
    %p93 = scmp.eq.s32.totalorder %s92, 0
    %s95 = sadd.s32 %s94, 1
    %s96 = scalar_select %p93, %s94, %s95
    %p99 = pneg %p93
    %p100 = scmp.eq.s32.totalorder %s9, 15
    %p101 = por %p99, %p100
    %p102 = scmp.ne.s32.totalorder %s94, %s97
    %p103 = scmp.eq.s32.totalorder %s9, 0
    %p104 = por %p102, %p103
    %p105 = scmp.ne.s32.totalorder %s94, %s97
    %p106 = scmp.eq.s32.totalorder %s14, 15
    %p107 = por %p105, %p106
    %p108 = scmp.ne.s32.totalorder %s97, %s98
    %p109 = scmp.eq.s32.totalorder %s14, 0
    %p110 = por %p108, %p109
    %p111 = scmp.ne.s32.totalorder %s97, %s98
    %p112 = scmp.eq.s32.totalorder %s15, 15
    %p113 = por %p111, %p112
    %p115 = scmp.ne.s32.totalorder %s98, %s114
    %p116 = scmp.eq.s32.totalorder %s15, 0
    %p117 = por %p115, %p116
    %s118 = ssub.s32 %s16, %s35
    %s119 = ssub.s32 %s17, %s31
    %s120 = sor.u32 %s118, %s119
    %p121 = scmp.eq.s32.totalorder %s120, 0
    %s123 = sadd.s32 %s122, 1
    %s124 = scalar_select %p121, %s122, %s123
    %p127 = pneg %p121
    %p128 = scmp.eq.s32.totalorder %s9, 15
    %p129 = por %p127, %p128
    %p130 = scmp.ne.s32.totalorder %s122, %s125
    %p131 = scmp.eq.s32.totalorder %s9, 0
    %p132 = por %p130, %p131
    %p133 = scmp.ne.s32.totalorder %s122, %s125
    %p134 = scmp.eq.s32.totalorder %s14, 15
    %p135 = por %p133, %p134
    %p136 = scmp.ne.s32.totalorder %s125, %s126
    %p137 = scmp.eq.s32.totalorder %s14, 0
    %p138 = por %p136, %p137
    %p139 = scmp.ne.s32.totalorder %s125, %s126
    %p140 = scmp.eq.s32.totalorder %s15, 15
    %p141 = por %p139, %p140
    %p143 = scmp.ne.s32.totalorder %s126, %s142
    %p144 = scmp.eq.s32.totalorder %s15, 0
    %p145 = por %p143, %p144
    %p146 = scmp.le.s32.totalorder 1, %s9
    %p147 = scmp.lt.s32.totalorder %s9, 17
    %p148 = pnand %p146, %p147
    %p149 = pneg %p148
    // Predicated region
    $region9: #{patchgan_dis_forward.15} parent=5 // pred_check
      _
    $region10: #{patchgan_dis_forward.15} parent=5 // pred_check_branch
      %151 = sbr.rel (%p148) target = $region12
    $region11: #{patchgan_dis_forward.15} parent=5 // pred_region
      %s152 = ssub.s32 %s9, 1
      // Predicated region
      $region13: #{patchgan_dis_forward.15} parent=11 // pred_check
        %p153 = pneg %p110
      $region14: #{patchgan_dis_forward.15} parent=11 // pred_check_branch
        %155 = sbr.rel (%p153) target = $region16
      $region15: #{patchgan_dis_forward.15} parent=11 // pred_region
        %p156 = scmp.lt.s32.totalorder %s20, 0
        %s157 = scalar_select %p156, %s20, 0
        %s158 = scalar_lea.vmem %s2, %s157
      $region16: #{patchgan_dis_forward.15} parent=11 // pred_fallthru
        _
    $region12: #{patchgan_dis_forward.15} parent=5 // pred_fallthru
      _
    %p159 = scmp.lt.s32.totalorder %s9, 16
    // Predicated region
    $region17: #{patchgan_dis_forward.15} parent=5 // pred_check
      %p160 = pneg %p159
    $region18: #{patchgan_dis_forward.15} parent=5 // pred_check_branch
      %162 = sbr.rel (%p160) target = $region20
    $region19: #{patchgan_dis_forward.15} parent=5 // pred_region
      // Predicated region
      $region21: #{patchgan_dis_forward.15} parent=19 // pred_check
        %p163 = pneg %p50
      $region22: #{patchgan_dis_forward.15} parent=19 // pred_check_branch
        %165 = sbr.rel (%p163) target = $region24
      $region23: #{patchgan_dis_forward.15} parent=19 // pred_region
        %s166 = smul.u32 4, %s18
        %p167 = scmp.lt.s32.totalorder %s16, 0
        %s168 = scalar_select %p167, %s16, 0
        %p169 = scmp.lt.s32.totalorder %s166, 63
        %s170 = scalar_select %p169, %s166, 63
        %s171 = smul.addr %s168, 64
        %s172 = sadd.s32 %s170, %s171
        %s173 = smul.addr %s172, 8
        %s174 = scalar_lea.vmem %s0, %s173
        %s175 = smul.u32 4, %s18
      $region24: #{patchgan_dis_forward.15} parent=19 // pred_fallthru
        _
      // Predicated region
      $region25: #{patchgan_dis_forward.15} parent=19 // pred_check
        %p176 = pneg %p78
      $region26: #{patchgan_dis_forward.15} parent=19 // pred_check_branch
        %178 = sbr.rel (%p176) target = $region28
      $region27: #{patchgan_dis_forward.15} parent=19 // pred_region
        %s179 = smul.u32 64, %s18
        %p180 = scmp.lt.s32.totalorder %s179, 1023
        %s181 = scalar_select %p180, %s179, 1023
        %p182 = scmp.lt.s32.totalorder %s17, 0
        %s183 = scalar_select %p182, %s17, 0
        %s184 = sadd.s32 %s183, %s181
        %s185 = smul.addr %s184, 8
        %s186 = scalar_lea.vmem %s1, %s185
        %s187 = smul.u32 64, %s18
      $region28: #{patchgan_dis_forward.15} parent=19 // pred_fallthru
        _
    $region20: #{patchgan_dis_forward.15} parent=5 // pred_fallthru
      _
    %p188 = scmp.le.s32.totalorder 1, %s9
    %p189 = scmp.lt.s32.totalorder %s9, 17
    %p190 = pnand %p188, %p189
    %p191 = pneg %p190
    // Predicated region
    $region29: #{patchgan_dis_forward.15} parent=5 // pred_check
      _
    $region30: #{patchgan_dis_forward.15} parent=5 // pred_check_branch
      %193 = sbr.rel (%p190) target = $region32
    $region31: #{patchgan_dis_forward.15} parent=5 // pred_region
      %s194 = ssub.s32 %s9, 1
      %s195 = smul.u32 4, %s21
      %p196 = scmp.lt.s32.totalorder %s19, 0
      %s197 = scalar_select %p196, %s19, 0
      %p198 = scmp.lt.s32.totalorder %s195, 63
      %s199 = scalar_select %p198, %s195, 63
      %s200 = smul.addr %s197, 64
      %s201 = sadd.s32 %s199, %s200
      %s202 = smul.addr %s201, 8
      %s203 = scalar_lea.vmem %s0, %s202
      %p204 = pneg %p56
      %p205 = pneg %p53
      %s206 = smul.u32 64, %s21
      %p207 = scmp.lt.s32.totalorder %s206, 1023
      %s208 = scalar_select %p207, %s206, 1023
      %p209 = scmp.lt.s32.totalorder %s20, 0
      %s210 = scalar_select %p209, %s20, 0
      %s211 = sadd.s32 %s210, %s208
      %s212 = smul.addr %s211, 8
      %s213 = scalar_lea.vmem %s1, %s212
      %p214 = pneg %p84
      %p215 = pneg %p81
      %p216 = scmp.lt.s32.totalorder %s20, 0
      %s217 = scalar_select %p216, %s20, 0
      %s218 = scalar_lea.vmem %s2, %s217
      %p219 = pneg %p110
      %p220 = pneg %p107
      %p221 = pneg %p138
      %p222 = pneg %p135
      %p223 = scmp.lt.s32.totalorder %s19, 0
      %s224 = scalar_select %p223, %s19, 0
      %p225 = scmp.lt.s32.totalorder %s20, 0
      %s226 = scalar_select %p225, %s20, 0
      %s227 = sadd.s32 %s226, %s224
      %s228 = smul.addr %s227, 8
      %s229 = scalar_lea.vmem %s3, %s228
      %s230 = smul.u32 4, %s21
      %p231 = scmp.lt.s32.totalorder %s19, 0
      %s232 = scalar_select %p231, %s19, 0
      %p233 = scmp.lt.s32.totalorder %s230, 63
      %s234 = scalar_select %p233, %s230, 63
      %s235 = smul.addr %s232, 64
      %s236 = sadd.s32 %s234, %s235
      %s237 = smul.addr %s236, 8
      %s238 = scalar_lea.vmem %s0, %s237
      %s239 = smul.u32 4, %s21
      %s240 = smul.u32 64, %s21
      %p241 = scmp.lt.s32.totalorder %s240, 1023
      %s242 = scalar_select %p241, %s240, 1023
      %p243 = scmp.lt.s32.totalorder %s20, 0
      %s244 = scalar_select %p243, %s20, 0
      %s245 = sadd.s32 %s244, %s242
      %s246 = smul.addr %s245, 8
      %s247 = scalar_lea.vmem %s1, %s246
      %s248 = smul.u32 64, %s21
      %p249 = scmp.lt.s32.totalorder %s20, 0
      %s250 = scalar_select %p249, %s20, 0
      %s251 = scalar_lea.vmem %s2, %s250
      %p252 = scmp.lt.s32.totalorder %s19, 0
      %s253 = scalar_select %p252, %s19, 0
      %p254 = scmp.lt.s32.totalorder %s20, 0
      %s255 = scalar_select %p254, %s20, 0
      %s256 = sadd.s32 %s255, %s253
      %s257 = smul.addr %s256, 8
      %s258 = scalar_lea.vmem %s3, %s257
      %p259 = scmp.eq.s32.totalorder %s21, 0
      // Predicated region
      $region33: #{patchgan_dis_forward.15} parent=31 // pred_check
        %p260 = pneg %p259
      $region34: #{patchgan_dis_forward.15} parent=31 // pred_check_branch
        %262 = sbr.rel (%p260) target = $region36
      $region35: #{patchgan_dis_forward.15} parent=31 // pred_region
        %263 = vst [vmem:[#allocation2] sm:$0xff] 0.0
      $region36: #{patchgan_dis_forward.15} parent=31 // pred_fallthru
        _
      %v264 = vld [vmem:[#allocation2] sm:$0xff]
      %v265 = vld [vmem:[%s238] sm:$0xff]
      %v266 = vld [vmem:[%s238 + $0x8] sm:$0xff]
      %v267 = vld [vmem:[%s238 + $0x10] sm:$0xff]
      %v268 = vld [vmem:[%s238 + $0x18] sm:$0xff]
      %v269 = vld [vmem:[%s247] sm:$0xff]
      %v270 = vld [vmem:[%s247 + $0x8] sm:$0xff]
      %v271 = vld [vmem:[%s247 + $0x10] sm:$0xff]
      %v272 = vld [vmem:[%s247 + $0x18] sm:$0xff]
      %v273 = vld [vmem:[%s247 + $0x20] sm:$0xff]
      %v274 = vld [vmem:[%s247 + $0x28] sm:$0xff]
      %v275 = vld [vmem:[%s247 + $0x30] sm:$0xff]
      %v276 = vld [vmem:[%s247 + $0x38] sm:$0xff]
      %v277 = vld [vmem:[%s247 + $0x40] sm:$0xff]
      %v278 = vld [vmem:[%s247 + $0x48] sm:$0xff]
      %v279 = vld [vmem:[%s247 + $0x50] sm:$0xff]
      %v280 = vld [vmem:[%s247 + $0x58] sm:$0xff]
      %v281 = vld [vmem:[%s247 + $0x60] sm:$0xff]
      %v282 = vld [vmem:[%s247 + $0x68] sm:$0xff]
      %v283 = vld [vmem:[%s247 + $0x70] sm:$0xff]
      %v284 = vld [vmem:[%s247 + $0x78] sm:$0xff]
      %v285 = vld [vmem:[%s247 + $0x80] sm:$0xff]
      %v286 = vld [vmem:[%s247 + $0x88] sm:$0xff]
      %v287 = vld [vmem:[%s247 + $0x90] sm:$0xff]
      %v288 = vld [vmem:[%s247 + $0x98] sm:$0xff]
      %v289 = vld [vmem:[%s247 + $0xa0] sm:$0xff]
      %v290 = vld [vmem:[%s247 + $0xa8] sm:$0xff]
      %v291 = vld [vmem:[%s247 + $0xb0] sm:$0xff]
      %v292 = vld [vmem:[%s247 + $0xb8] sm:$0xff]
      %v293 = vld [vmem:[%s247 + $0xc0] sm:$0xff]
      %v294 = vld [vmem:[%s247 + $0xc8] sm:$0xff]
      %v295 = vld [vmem:[%s247 + $0xd0] sm:$0xff]
      %v296 = vld [vmem:[%s247 + $0xd8] sm:$0xff]
      %v297 = vld [vmem:[%s247 + $0xe0] sm:$0xff]
      %v298 = vld [vmem:[%s247 + $0xe8] sm:$0xff]
      %v299 = vld [vmem:[%s247 + $0xf0] sm:$0xff]
      %v300 = vld [vmem:[%s247 + $0xf8] sm:$0xff]
      %v301 = vld [vmem:[%s247 + $0x100] sm:$0xff]
      %v302 = vld [vmem:[%s247 + $0x108] sm:$0xff]
      %v303 = vld [vmem:[%s247 + $0x110] sm:$0xff]
      %v304 = vld [vmem:[%s247 + $0x118] sm:$0xff]
      %v305 = vld [vmem:[%s247 + $0x120] sm:$0xff]
      %v306 = vld [vmem:[%s247 + $0x128] sm:$0xff]
      %v307 = vld [vmem:[%s247 + $0x130] sm:$0xff]
      %v308 = vld [vmem:[%s247 + $0x138] sm:$0xff]
      %v309 = vld [vmem:[%s247 + $0x140] sm:$0xff]
      %v310 = vld [vmem:[%s247 + $0x148] sm:$0xff]
      %v311 = vld [vmem:[%s247 + $0x150] sm:$0xff]
      %v312 = vld [vmem:[%s247 + $0x158] sm:$0xff]
      %v313 = vld [vmem:[%s247 + $0x160] sm:$0xff]
      %v314 = vld [vmem:[%s247 + $0x168] sm:$0xff]
      %v315 = vld [vmem:[%s247 + $0x170] sm:$0xff]
      %v316 = vld [vmem:[%s247 + $0x178] sm:$0xff]
      %v317 = vld [vmem:[%s247 + $0x180] sm:$0xff]
      %v318 = vld [vmem:[%s247 + $0x188] sm:$0xff]
      %v319 = vld [vmem:[%s247 + $0x190] sm:$0xff]
      %v320 = vld [vmem:[%s247 + $0x198] sm:$0xff]
      %v321 = vld [vmem:[%s247 + $0x1a0] sm:$0xff]
      %v322 = vld [vmem:[%s247 + $0x1a8] sm:$0xff]
      %v323 = vld [vmem:[%s247 + $0x1b0] sm:$0xff]
      %v324 = vld [vmem:[%s247 + $0x1b8] sm:$0xff]
      %v325 = vld [vmem:[%s247 + $0x1c0] sm:$0xff]
      %v326 = vld [vmem:[%s247 + $0x1c8] sm:$0xff]
      %v327 = vld [vmem:[%s247 + $0x1d0] sm:$0xff]
      %v328 = vld [vmem:[%s247 + $0x1d8] sm:$0xff]
      %v329 = vld [vmem:[%s247 + $0x1e0] sm:$0xff]
      %v330 = vld [vmem:[%s247 + $0x1e8] sm:$0xff]
      %v331 = vld [vmem:[%s247 + $0x1f0] sm:$0xff]
      %v332 = vld [vmem:[%s247 + $0x1f8] sm:$0xff]
      %333 = vmatprep.subr.mxu0 0.0
      %334 = vmatpush1.msra.mxu0 %v269
      %335 = vmatprep.subr.mxu0 0.0
      %336 = vmatpush1.msra.mxu0 %v270
      %337 = vmatprep.subr.mxu0 0.0
      %338 = vmatpush1.msra.mxu0 %v271
      %339 = vmatprep.subr.mxu0 0.0
      %340 = vmatpush1.msra.mxu0 %v272
      %341 = vmatprep.subr.mxu0 0.0
      %342 = vmatpush1.msra.mxu0 %v273
      %343 = vmatprep.subr.mxu0 0.0
      %344 = vmatpush1.msra.mxu0 %v274
      %345 = vmatprep.subr.mxu0 0.0
      %346 = vmatpush1.msra.mxu0 %v275
      %347 = vmatprep.subr.mxu0 0.0
      %348 = vmatpush1.msra.mxu0 %v276
      %349 = vmatprep.subr.mxu0 0.0
      %350 = vmatpush1.msra.mxu0 %v277
      %351 = vmatprep.subr.mxu0 0.0
      %352 = vmatpush1.msra.mxu0 %v278
      %353 = vmatprep.subr.mxu0 0.0
      %354 = vmatpush1.msra.mxu0 %v279
      %355 = vmatprep.subr.mxu0 0.0
      %356 = vmatpush1.msra.mxu0 %v280
      %357 = vmatprep.subr.mxu0 0.0
      %358 = vmatpush1.msra.mxu0 %v281
      %359 = vmatprep.subr.mxu0 0.0
      %360 = vmatpush1.msra.mxu0 %v282
      %361 = vmatprep.subr.mxu0 0.0
      %362 = vmatpush1.msra.mxu0 %v283
      %363 = vmatprep.subr.mxu0 0.0
      %364 = vmatpush1.msra.mxu0 %v284
      %365 = vmatprep.subr.mxu0 0.0
      %366 = vmatpush1.msra.mxu0 %v285
      %367 = vmatprep.subr.mxu0 0.0
      %368 = vmatpush1.msra.mxu0 %v286
      %369 = vmatprep.subr.mxu0 0.0
      %370 = vmatpush1.msra.mxu0 %v287
      %371 = vmatprep.subr.mxu0 0.0
      %372 = vmatpush1.msra.mxu0 %v288
      %373 = vmatprep.subr.mxu0 0.0
      %374 = vmatpush1.msra.mxu0 %v289
      %375 = vmatprep.subr.mxu0 0.0
      %376 = vmatpush1.msra.mxu0 %v290
      %377 = vmatprep.subr.mxu0 0.0
      %378 = vmatpush1.msra.mxu0 %v291
      %379 = vmatprep.subr.mxu0 0.0
      %380 = vmatpush1.msra.mxu0 %v292
      %381 = vmatprep.subr.mxu0 0.0
      %382 = vmatpush1.msra.mxu0 %v293
      %383 = vmatprep.subr.mxu0 0.0
      %384 = vmatpush1.msra.mxu0 %v294
      %385 = vmatprep.subr.mxu0 0.0
      %386 = vmatpush1.msra.mxu0 %v295
      %387 = vmatprep.subr.mxu0 0.0
      %388 = vmatpush1.msra.mxu0 %v296
      %389 = vmatprep.subr.mxu0 0.0
      %390 = vmatpush1.msra.mxu0 %v297
      %391 = vmatprep.subr.mxu0 0.0
      %392 = vmatpush1.msra.mxu0 %v298
      %393 = vmatprep.subr.mxu0 0.0
      %394 = vmatpush1.msra.mxu0 %v299
      %395 = vmatprep.subr.mxu0 0.0
      %396 = vmatpush1.msra.mxu0 %v300
      %397 = vmatprep.mubr.f32.mxu0 %v266
      %398 = vmatmul.mubr.f32.gmra.mrb[0].mxu0 %v265
      %v399 = vpop.f32.mrb[0].mxu0
      %v400 = vadd.f32 0.0, %v399
      %v401 = vpop.f32.mrb[0].mxu0
      %402 = vdwg.mxu0
      %403 = vmatprep.subr.mxu0 0.0
      %404 = vmatpush1.msra.mxu0 %v301
      %405 = vmatprep.subr.mxu0 0.0
      %406 = vmatpush1.msra.mxu0 %v302
      %407 = vmatprep.subr.mxu0 0.0
      %408 = vmatpush1.msra.mxu0 %v303
      %409 = vmatprep.subr.mxu0 0.0
      %410 = vmatpush1.msra.mxu0 %v304
      %411 = vmatprep.subr.mxu0 0.0
      %412 = vmatpush1.msra.mxu0 %v305
      %413 = vmatprep.subr.mxu0 0.0
      %414 = vmatpush1.msra.mxu0 %v306
      %415 = vmatprep.subr.mxu0 0.0
      %416 = vmatpush1.msra.mxu0 %v307
      %417 = vmatprep.subr.mxu0 0.0
      %418 = vmatpush1.msra.mxu0 %v308
      %419 = vmatprep.subr.mxu0 0.0
      %420 = vmatpush1.msra.mxu0 %v309
      %421 = vmatprep.subr.mxu0 0.0
      %422 = vmatpush1.msra.mxu0 %v310
      %423 = vmatprep.subr.mxu0 0.0
      %424 = vmatpush1.msra.mxu0 %v311
      %425 = vmatprep.subr.mxu0 0.0
      %426 = vmatpush1.msra.mxu0 %v312
      %427 = vmatprep.subr.mxu0 0.0
      %428 = vmatpush1.msra.mxu0 %v313
      %429 = vmatprep.subr.mxu0 0.0
      %430 = vmatpush1.msra.mxu0 %v314
      %431 = vmatprep.subr.mxu0 0.0
      %432 = vmatpush1.msra.mxu0 %v315
      %433 = vmatprep.subr.mxu0 0.0
      %434 = vmatpush1.msra.mxu0 %v316
      %435 = vmatprep.subr.mxu0 0.0
      %436 = vmatpush1.msra.mxu0 %v317
      %437 = vmatprep.subr.mxu0 0.0
      %438 = vmatpush1.msra.mxu0 %v318
      %439 = vmatprep.subr.mxu0 0.0
      %440 = vmatpush1.msra.mxu0 %v319
      %441 = vmatprep.subr.mxu0 0.0
      %442 = vmatpush1.msra.mxu0 %v320
      %443 = vmatprep.subr.mxu0 0.0
      %444 = vmatpush1.msra.mxu0 %v321
      %445 = vmatprep.subr.mxu0 0.0
      %446 = vmatpush1.msra.mxu0 %v322
      %447 = vmatprep.subr.mxu0 0.0
      %448 = vmatpush1.msra.mxu0 %v323
      %449 = vmatprep.subr.mxu0 0.0
      %450 = vmatpush1.msra.mxu0 %v324
      %451 = vmatprep.subr.mxu0 0.0
      %452 = vmatpush1.msra.mxu0 %v325
      %453 = vmatprep.subr.mxu0 0.0
      %454 = vmatpush1.msra.mxu0 %v326
      %455 = vmatprep.subr.mxu0 0.0
      %456 = vmatpush1.msra.mxu0 %v327
      %457 = vmatprep.subr.mxu0 0.0
      %458 = vmatpush1.msra.mxu0 %v328
      %459 = vmatprep.subr.mxu0 0.0
      %460 = vmatpush1.msra.mxu0 %v329
      %461 = vmatprep.subr.mxu0 0.0
      %462 = vmatpush1.msra.mxu0 %v330
      %463 = vmatprep.subr.mxu0 0.0
      %464 = vmatpush1.msra.mxu0 %v331
      %465 = vmatprep.subr.mxu0 0.0
      %466 = vmatpush1.msra.mxu0 %v332
      %467 = vmatprep.mubr.f32.mxu0 %v268
      %468 = vmatmul.mubr.f32.gmra.mrb[0].mxu0 %v267
      %v469 = vpop.f32.mrb[0].mxu0
      %v470 = vadd.f32 %v400, %v469
      %v471 = vpop.f32.mrb[0].mxu0
      %472 = vdwg.mxu0
      %v473 = vadd.f32 %v264, %v470
      %474 = vst [vmem:[#allocation2] sm:$0xff] %v473
      %p475 = scmp.eq.s32.totalorder %s21, 15
      // Predicated region
      $region37: #{patchgan_dis_forward.15} parent=31 // pred_check
        %p476 = pneg %p475
      $region38: #{patchgan_dis_forward.15} parent=31 // pred_check_branch
        %478 = sbr.rel (%p476) target = $region40
      $region39: #{patchgan_dis_forward.15} parent=31 // pred_region
        %v479 = vld [vmem:[#allocation2] sm:$0xff]
        %v480 = vld [vmem:[%s251] sm:$0x1]
        %v482 = vlaneseq
        %v483 = vshrl.u32 %v482, 7
        %v484 = vsub.s32 0, %v483
        %v485 = vrot.slane %v480, %v484
        %v487 = vadd.f32 %v479, %v485
        %488 = vst [vmem:[%s258] sm:$0xff] %v487
      $region40: #{patchgan_dis_forward.15} parent=31 // pred_fallthru
        _
      %p489 = scmp.lt.s32.totalorder %s19, 0
      %s490 = scalar_select %p489, %s19, 0
      %p491 = scmp.lt.s32.totalorder %s20, 0
      %s492 = scalar_select %p491, %s20, 0
      %s493 = sadd.s32 %s492, %s490
      %s494 = smul.addr %s493, 8
      %s495 = scalar_lea.vmem %s3, %s494
      // Predicated region
      $region41: #{patchgan_dis_forward.15} parent=31 // pred_check
        %p496 = pneg %p135
      $region42: #{patchgan_dis_forward.15} parent=31 // pred_check_branch
        %498 = sbr.rel (%p496) target = $region44
      $region43: #{patchgan_dis_forward.15} parent=31 // pred_region
        _
      $region44: #{patchgan_dis_forward.15} parent=31 // pred_fallthru
        _
      // Predicated region
      $region45: #{patchgan_dis_forward.15} parent=31 // pred_check
        %p499 = pneg %p135
      $region46: #{patchgan_dis_forward.15} parent=31 // pred_check_branch
        %501 = sbr.rel (%p499) target = $region48
      $region47: #{patchgan_dis_forward.15} parent=31 // pred_region
        %p502 = scmp.lt.s32.totalorder %s19, 0
        %s503 = scalar_select %p502, %s19, 0
        %p504 = scmp.lt.s32.totalorder %s20, 0
        %s505 = scalar_select %p504, %s20, 0
        %s506 = sadd.s32 %s505, %s503
        %s507 = smul.addr %s506, 8
        %s508 = scalar_lea.vmem %s3, %s507
      $region48: #{patchgan_dis_forward.15} parent=31 // pred_fallthru
        _
    $region32: #{patchgan_dis_forward.15} parent=5 // pred_fallthru
      _
    %p509 = scmp.le.s32.totalorder 2, %s9
    // Predicated region
    $region49: #{patchgan_dis_forward.15} parent=5 // pred_check
      %p510 = pneg %p509
    $region50: #{patchgan_dis_forward.15} parent=5 // pred_check_branch
      %512 = sbr.rel (%p510) target = $region52
    $region51: #{patchgan_dis_forward.15} parent=5 // pred_region
      %s513 = ssub.s32 %s9, 2
    $region52: #{patchgan_dis_forward.15} parent=5 // pred_fallthru
      _
  $region6: #{patchgan_dis_forward.15} parent=0 // loop_footer
    %s13 = sadd.s32 1, %s9
  $region7: #{patchgan_dis_forward.15} parent=0 // loop_footer_branch
    %8 = sbr.rel target = $region3
  $region8: #{patchgan_dis_forward.15} parent=0 // loop_exit
    _

</llo_original>
